<compile_context>
chip_gen: v6e
topology: v6e:2x2x1
jax: 0.10.0
libtpu: 0.0.40
codegen_flags: <defaults>
</compile_context>

<pallas_src>
import functools

import numpy as np
import jax
import jax.numpy as jnp
from jax.experimental import pallas as pl
from jax.experimental.pallas import tpu as pltpu


def _round_up(x, m):
    return ((x + m - 1) // m) * m


# ---------------------------------------------------------------------------
# Pallas kernel: partial sums of all loss terms for one (row tile, freq tile).
# ---------------------------------------------------------------------------
def _stft_partial_sums_kernel(fx_ref, fy_ref, wc_ref, ws_ref, hw_ref,
                              s_log_ref, s_sq_ref, s_phase_ref, s_hf_ref,
                              s_yden_ref, *, epsilon):
    """fx_ref / fy_ref : (TR, N)  frames of x / y
       wc_ref          : (N, TF)  window * cos(2*pi*n*k/N)  (zero-padded cols)
       ws_ref          : (N, TF)  window * -sin(2*pi*n*k/N) (zero-padded cols)
       hw_ref          : (1, TF)  high-frequency weights    (zero in padding)
       s_*_ref         : (1, 8, 128) per-row-tile accumulators, resident
                         across the freq grid axis (broadcast-scalar blocks).
    """
    @pl.when(pl.program_id(1) == 0)
    def _init():
        s_log_ref[...] = jnp.zeros_like(s_log_ref)
        s_sq_ref[...] = jnp.zeros_like(s_sq_ref)
        s_phase_ref[...] = jnp.zeros_like(s_phase_ref)
        s_hf_ref[...] = jnp.zeros_like(s_hf_ref)
        s_yden_ref[...] = jnp.zeros_like(s_yden_ref)

    fx = fx_ref[...]
    fy = fy_ref[...]
    wc = wc_ref[...]
    ws = ws_ref[...]
    hw = hw_ref[...]

    # Windowed real DFT for x and y.  f32 x f32 dots lower to full-precision
    # multi-pass MXU matmuls, matching the f32 torch reference (no silent
    # bf16 truncation inside Mosaic).
    re_x = jnp.dot(fx, wc, preferred_element_type=jnp.float32)
    im_x = jnp.dot(fx, ws, preferred_element_type=jnp.float32)
    re_y = jnp.dot(fy, wc, preferred_element_type=jnp.float32)
    im_y = jnp.dot(fy, ws, preferred_element_type=jnp.float32)

    mag_x = jnp.sqrt(re_x * re_x + im_x * im_x)
    mag_y = jnp.sqrt(re_y * re_y + im_y * im_y)
    mag_diff = mag_x - mag_y
    abs_diff = jnp.abs(mag_diff)

    # One log per element instead of two (kernel is EUP-bound at small n_fft):
    # |log(mx + eps) - log(my + eps)| == |log((mx + eps) / (my + eps))|.
    log_term = jnp.abs(jnp.log((mag_x + epsilon) / (mag_y + epsilon)))
    phase_term = jnp.abs(re_x - re_y) + jnp.abs(im_x - im_y)

    s_log_ref[...] += jnp.sum(log_term)
    s_sq_ref[...] += jnp.sum(mag_diff * mag_diff)
    s_phase_ref[...] += jnp.sum(phase_term)
    s_hf_ref[...] += jnp.sum(abs_diff * hw)
    s_yden_ref[...] += jnp.sum(mag_y * mag_y)


# ---------------------------------------------------------------------------
# Host-side helpers (static tables, tiling, framing).
# ---------------------------------------------------------------------------
@functools.lru_cache(maxsize=None)
def _dft_tables(n_fft, win_length, f_pad):
    # Hann window (periodic, matching torch.hann_window default), centred
    # zero-pad to n_fft exactly like torch.stft.  Built once in numpy so no
    # transcendental-heavy XLA prologue runs per call.
    n = np.arange(win_length, dtype=np.float64)
    win = 0.5 * (1.0 - np.cos(2.0 * np.pi * n / win_length))
    w = np.zeros(n_fft, dtype=np.float64)
    left = (n_fft - win_length) // 2
    w[left:left + win_length] = win

    n_freq = n_fft // 2 + 1
    nn = np.arange(n_fft, dtype=np.float64)[:, None]
    kk = np.arange(n_freq, dtype=np.float64)[None, :]
    ang = 2.0 * np.pi * nn * kk / n_fft

    wc = np.zeros((n_fft, f_pad), dtype=np.float32)
    ws = np.zeros((n_fft, f_pad), dtype=np.float32)
    wc[:, :n_freq] = (w[:, None] * np.cos(ang)).astype(np.float32)
    ws[:, :n_freq] = (-w[:, None] * np.sin(ang)).astype(np.float32)
    hw = np.zeros((1, f_pad), dtype=np.float32)
    hw[0, :n_freq] = np.linspace(1.0, 3.0, n_freq, dtype=np.float32)
    return jnp.asarray(wc), jnp.asarray(ws), jnp.asarray(hw)


def _choose_tiles(n_fft, n_freq, n_rows):
    # Basis tile (n_fft, TF) f32 <= ~3 MiB, frame tiles (TR, n_fft) f32
    # <= ~2 MiB each for x and y.  Worst case incl. double buffering is
    # ~20 MiB of VMEM -> fits v5e/v6e/v7x.
    f128 = _round_up(n_freq, 128)
    max_tf = max(128, ((3 * 1024 * 1024) // (n_fft * 4)) // 128 * 128)
    tf = min(f128, 1024, max_tf)
    f_pad = _round_up(n_freq, tf)
    tr = max(8, min(256, ((4 * 1024 * 1024) // (8 * n_fft)) // 8 * 8))
    tr = min(tr, _round_up(n_rows, 8))
    return tr, tf, f_pad


def _frame_audio(audio, n_fft, hop_length):
    # torch.stft(center=True) reflect-pads by n_fft // 2 on both sides.
    pad = n_fft // 2
    padded = jnp.pad(audio, ((0, 0), (pad, pad)), mode="reflect")
    t_padded = padded.shape[1]
    n_frames = 1 + (t_padded - n_fft) // hop_length

    if n_fft % hop_length == 0:
        # Fast path (default hop_ratio=0.25 with win_length == n_fft): build
        # frames from q contiguous chunk slices + concat instead of a 2-D
        # gather (gather is slow on TPU and the slices are plain copies).
        q = n_fft // hop_length
        n_chunks = -(-t_padded // hop_length)
        tail = n_chunks * hop_length - t_padded
        if tail:
            padded = jnp.pad(padded, ((0, 0), (0, tail)))
        chunks = padded.reshape(audio.shape[0], n_chunks, hop_length)
        frames = jnp.concatenate(
            [chunks[:, j:j + n_frames, :] for j in range(q)], axis=-1)
    else:
        # TODO(synk): generic-hop framing is still a JAX gather that
        # materialises overlapped frames in HBM; an in-kernel version would
        # pass padded audio with memory_space=pl.ANY and build rows from
        # pl.ds strip reads.
        idx = (jnp.arange(n_frames)[:, None] * hop_length
               + jnp.arange(n_fft)[None, :])
        frames = padded[:, idx]                     # (B, n_frames, n_fft)

    return frames.reshape(-1, n_fft), n_frames      # (B * n_frames, n_fft)


# ---------------------------------------------------------------------------
# Per-scale loss and multi-scale wrapper.
# ---------------------------------------------------------------------------
def _scale_loss(aud_x, aud_y, n_fft, win_length, hop_length, epsilon):
    batch = aud_x.shape[0]
    n_freq = n_fft // 2 + 1

    fx, n_frames = _frame_audio(aud_x, n_fft, hop_length)
    fy, _ = _frame_audio(aud_y, n_fft, hop_length)
    n_rows = batch * n_frames

    tr, tf, f_pad = _choose_tiles(n_fft, n_freq, n_rows)
    rows_pad = _round_up(n_rows, tr)
    r_tiles = rows_pad // tr
    f_tiles = f_pad // tf

    if rows_pad > n_rows:
        pad_rows = rows_pad - n_rows
        fx = jnp.pad(fx, ((0, pad_rows), (0, 0)))
        fy = jnp.pad(fy, ((0, pad_rows), (0, 0)))

    wc, ws, hw = _dft_tables(n_fft, win_length, f_pad)

    kernel = functools.partial(_stft_partial_sums_kernel, epsilon=epsilon)
    # Per-row-tile accumulators (lane-dense (8,128) blocks holding a broadcast
    # scalar) so the row grid axis can be "parallel" (megacore on v7x).
    acc_shape = jax.ShapeDtypeStruct((r_tiles, 8, 128), jnp.float32)
    acc_spec = pl.BlockSpec((1, 8, 128), lambda r, f: (r, 0, 0))

    sums = pl.pallas_call(
        kernel,
        grid=(r_tiles, f_tiles),
        in_specs=[
            pl.BlockSpec((tr, n_fft), lambda r, f: (r, 0)),   # x frames
            pl.BlockSpec((tr, n_fft), lambda r, f: (r, 0)),   # y frames
            pl.BlockSpec((n_fft, tf), lambda r, f: (0, f)),   # cos basis
            pl.BlockSpec((n_fft, tf), lambda r, f: (0, f)),   # sin basis
            pl.BlockSpec((1, tf), lambda r, f: (0, f)),       # hf weights
        ],
        out_specs=[acc_spec] * 5,
        out_shape=[acc_shape] * 5,
        compiler_params=pltpu.CompilerParams(
            dimension_semantics=("parallel", "arbitrary"),
            vmem_limit_bytes=48 * 1024 * 1024,
        ),
    )(fx, fy, wc, ws, hw)

    s_log, s_sq, s_phase, s_hf, s_yden = [jnp.sum(s[:, 0, 0]) for s in sums]

    inv_n = jnp.float32(1.0 / (n_rows * n_freq))   # unpadded element count
    log_mag_loss = s_log * inv_n
    linear_mag_loss = s_sq * inv_n
    phase_loss = s_phase * inv_n
    hf_loss = s_hf * inv_n
    # (mag_y - mag_x)^2 sum == (mag_x - mag_y)^2 sum -> reuse s_sq.
    spectral_convergence = jnp.sqrt(s_sq) / (jnp.sqrt(s_yden) + 1e-8)

    return (log_mag_loss
            + 0.5 * linear_mag_loss
            + 0.3 * phase_loss
            + 0.2 * hf_loss
            + 0.1 * spectral_convergence)


def enhanced_multi_scale_stft_loss(aud_x, aud_y,
                                   n_ffts=(512, 1024, 2048, 4096),
                                   win_lengths=(512, 1024, 2048, 4096),
                                   hop_ratio=0.25,
                                   epsilon=1e-5):
    aud_x = jnp.squeeze(aud_x, axis=1).astype(jnp.float32)
    aud_y = jnp.squeeze(aud_y, axis=1).astype(jnp.float32)

    total = jnp.float32(0.0)
    for n_fft, win_length in zip(n_ffts, win_lengths):
        hop_length = int(win_length * hop_ratio)
        total = total + _scale_loss(aud_x, aud_y, n_fft, win_length,
                                    hop_length, epsilon)
    return total / len(n_ffts)


# ---------------------------------------------------------------------------
# Pure-JAX reference (FFT-based) for correctness checking in __main__.
# ---------------------------------------------------------------------------
def _reference_loss(aud_x, aud_y, n_ffts, win_lengths, hop_ratio, epsilon):
    ax = jnp.squeeze(aud_x, axis=1).astype(jnp.float32)
    ay = jnp.squeeze(aud_y, axis=1).astype(jnp.float32)
    total = 0.0
    for n_fft, win_length in zip(n_ffts, win_lengths):
        hop = int(win_length * hop_ratio)

        def stft(a):
            pad = n_fft // 2
            p = jnp.pad(a, ((0, 0), (pad, pad)), mode="reflect")
            nf = 1 + (p.shape[1] - n_fft) // hop
            idx = jnp.arange(nf)[:, None] * hop + jnp.arange(n_fft)[None, :]
            fr = p[:, idx]
            n = np.arange(win_length, dtype=np.float64)
            w = 0.5 * (1.0 - np.cos(2.0 * np.pi * n / win_length))
            wf = np.zeros(n_fft, dtype=np.float64)
            left = (n_fft - win_length) // 2
            wf[left:left + win_length] = w
            return jnp.fft.rfft(fr * jnp.asarray(wf, jnp.float32), axis=-1)

        sx, sy = stft(ax), stft(ay)
        mx, my = jnp.abs(sx), jnp.abs(sy)
        log_mag = jnp.mean(jnp.abs(jnp.log(mx + epsilon) - jnp.log(my + epsilon)))
        lin = jnp.mean((mx - my) ** 2)
        phase = (jnp.mean(jnp.abs(sx.real - sy.real))
                 + jnp.mean(jnp.abs(sx.imag - sy.imag)))
        freq_bins = mx.shape[-1]
        hfw = jnp.linspace(1.0, 3.0, freq_bins)
        hf = jnp.mean(jnp.abs(mx - my) * hfw[None, None, :])
        sc = jnp.linalg.norm(my - mx) / (jnp.linalg.norm(my) + 1e-8)
        total = total + (log_mag + 0.5 * lin + 0.3 * phase + 0.2 * hf + 0.1 * sc)
    return total / len(n_ffts)


if __name__ == "__main__":
    key = jax.random.PRNGKey(0)
    kx, ky = jax.random.split(key)
    B, T = 2, 256
    aud_x = jax.random.normal(kx, (B, 1, T), dtype=jnp.float32)
    aud_y = jax.random.normal(ky, (B, 1, T), dtype=jnp.float32)

    # Small scales consistent with the module's constructor (n_ffts /
    # win_lengths configurable; hop_ratio=0.25, epsilon=1e-5 as in defaults).
    n_ffts = (64, 128, 256)
    loss_fn = jax.jit(functools.partial(
        enhanced_multi_scale_stft_loss,
        n_ffts=n_ffts, win_lengths=n_ffts, hop_ratio=0.25, epsilon=1e-5))

    loss = loss_fn(aud_x, aud_y)
    jax.block_until_ready(loss)
    loss_v = float(np.asarray(loss))
    assert np.isfinite(loss_v), "loss is not finite"

    ref = _reference_loss(aud_x, aud_y, n_ffts, n_ffts, 0.25, 1e-5)
    ref_v = float(np.asarray(jax.block_until_ready(ref)))
    rel_err = abs(loss_v - ref_v) / max(abs(ref_v), 1e-6)
    assert rel_err < 1e-2, f"mismatch: kernel={loss_v} ref={ref_v} rel={rel_err}"

    print("KERNEL_OK")
</pallas_src>

<mosaic_0001>
module attributes {stable_mosaic.version = 11 : i64} {
  func.func @_stft_partial_sums_kernel(%arg0: i32, %arg1: i32, %arg2: memref<16x256xf32, #tpu.memory_space<vmem>>, %arg3: memref<16x256xf32, #tpu.memory_space<vmem>>, %arg4: memref<256x256xf32, #tpu.memory_space<vmem>>, %arg5: memref<256x256xf32, #tpu.memory_space<vmem>>, %arg6: memref<1x256xf32, #tpu.memory_space<vmem>>, %arg7: memref<1x8x128xf32, #tpu.memory_space<vmem>>, %arg8: memref<1x8x128xf32, #tpu.memory_space<vmem>>, %arg9: memref<1x8x128xf32, #tpu.memory_space<vmem>>, %arg10: memref<1x8x128xf32, #tpu.memory_space<vmem>>, %arg11: memref<1x8x128xf32, #tpu.memory_space<vmem>>) attributes {dimension_semantics = [#tpu.dimension_semantics<parallel>, #tpu.dimension_semantics<arbitrary>], iteration_bounds = array<i64: 1, 1>, scalar_prefetch = 0 : i64, scratch_operands = 0 : i64, tpu.core_type = #tpu.core_type<tc>, window_params = [{transform_indices = @transform_0, window_bounds = array<i64: 16, 256>}, {transform_indices = @transform_1, window_bounds = array<i64: 16, 256>}, {transform_indices = @transform_2, window_bounds = array<i64: 256, 256>}, {transform_indices = @transform_3, window_bounds = array<i64: 256, 256>}, {transform_indices = @transform_4, window_bounds = array<i64: 1, 256>}, {transform_indices = @transform_5, window_bounds = array<i64: 1, 8, 128>}, {transform_indices = @transform_6, window_bounds = array<i64: 1, 8, 128>}, {transform_indices = @transform_7, window_bounds = array<i64: 1, 8, 128>}, {transform_indices = @transform_8, window_bounds = array<i64: 1, 8, 128>}, {transform_indices = @transform_9, window_bounds = array<i64: 1, 8, 128>}]} {
    %c0_i32 = arith.constant 0 : i32
    %0 = arith.cmpi eq, %arg1, %c0_i32 : i32
    %1 = arith.extui %0 : i1 to i32
    %c0_i32_0 = arith.constant 0 : i32
    %2 = arith.cmpi ne, %1, %c0_i32_0 : i32
    scf.if %2 {
      %cst_50 = arith.constant 0.000000e+00 : f32
      %78 = vector.broadcast %cst_50 : f32 to vector<1x8x128xf32>
      %c0_51 = arith.constant 0 : index
      %c0_52 = arith.constant 0 : index
      %c0_53 = arith.constant 0 : index
      %79 = vector.load %arg7[%c0_51, %c0_52, %c0_53] : memref<1x8x128xf32, #tpu.memory_space<vmem>>, vector<1x8x128xf32>
      tpu.vector_store %arg7[%c0_51, %c0_52, %c0_53], %78 {strides = array<i32>} : memref<1x8x128xf32, #tpu.memory_space<vmem>>, vector<1x8x128xf32>,
      %cst_54 = arith.constant 0.000000e+00 : f32
      %80 = vector.broadcast %cst_54 : f32 to vector<1x8x128xf32>
      %c0_55 = arith.constant 0 : index
      %c0_56 = arith.constant 0 : index
      %c0_57 = arith.constant 0 : index
      %81 = vector.load %arg8[%c0_55, %c0_56, %c0_57] : memref<1x8x128xf32, #tpu.memory_space<vmem>>, vector<1x8x128xf32>
      tpu.vector_store %arg8[%c0_55, %c0_56, %c0_57], %80 {strides = array<i32>} : memref<1x8x128xf32, #tpu.memory_space<vmem>>, vector<1x8x128xf32>,
      %cst_58 = arith.constant 0.000000e+00 : f32
      %82 = vector.broadcast %cst_58 : f32 to vector<1x8x128xf32>
      %c0_59 = arith.constant 0 : index
      %c0_60 = arith.constant 0 : index
      %c0_61 = arith.constant 0 : index
      %83 = vector.load %arg9[%c0_59, %c0_60, %c0_61] : memref<1x8x128xf32, #tpu.memory_space<vmem>>, vector<1x8x128xf32>
      tpu.vector_store %arg9[%c0_59, %c0_60, %c0_61], %82 {strides = array<i32>} : memref<1x8x128xf32, #tpu.memory_space<vmem>>, vector<1x8x128xf32>,
      %cst_62 = arith.constant 0.000000e+00 : f32
      %84 = vector.broadcast %cst_62 : f32 to vector<1x8x128xf32>
      %c0_63 = arith.constant 0 : index
      %c0_64 = arith.constant 0 : index
      %c0_65 = arith.constant 0 : index
      %85 = vector.load %arg10[%c0_63, %c0_64, %c0_65] : memref<1x8x128xf32, #tpu.memory_space<vmem>>, vector<1x8x128xf32>
      tpu.vector_store %arg10[%c0_63, %c0_64, %c0_65], %84 {strides = array<i32>} : memref<1x8x128xf32, #tpu.memory_space<vmem>>, vector<1x8x128xf32>,
      %cst_66 = arith.constant 0.000000e+00 : f32
      %86 = vector.broadcast %cst_66 : f32 to vector<1x8x128xf32>
      %c0_67 = arith.constant 0 : index
      %c0_68 = arith.constant 0 : index
      %c0_69 = arith.constant 0 : index
      %87 = vector.load %arg11[%c0_67, %c0_68, %c0_69] : memref<1x8x128xf32, #tpu.memory_space<vmem>>, vector<1x8x128xf32>
      tpu.vector_store %arg11[%c0_67, %c0_68, %c0_69], %86 {strides = array<i32>} : memref<1x8x128xf32, #tpu.memory_space<vmem>>, vector<1x8x128xf32>,
    } else {
    }
    %c0 = arith.constant 0 : index
    %c0_1 = arith.constant 0 : index
    %3 = vector.load %arg2[%c0, %c0_1] : memref<16x256xf32, #tpu.memory_space<vmem>>, vector<16x256xf32>
    %c0_2 = arith.constant 0 : index
    %c0_3 = arith.constant 0 : index
    %4 = vector.load %arg3[%c0_2, %c0_3] : memref<16x256xf32, #tpu.memory_space<vmem>>, vector<16x256xf32>
    %c0_4 = arith.constant 0 : index
    %c0_5 = arith.constant 0 : index
    %5 = vector.load %arg4[%c0_4, %c0_5] : memref<256x256xf32, #tpu.memory_space<vmem>>, vector<256x256xf32>
    %c0_6 = arith.constant 0 : index
    %c0_7 = arith.constant 0 : index
    %6 = vector.load %arg5[%c0_6, %c0_7] : memref<256x256xf32, #tpu.memory_space<vmem>>, vector<256x256xf32>
    %c0_8 = arith.constant 0 : index
    %c0_9 = arith.constant 0 : index
    %7 = vector.load %arg6[%c0_8, %c0_9] : memref<1x256xf32, #tpu.memory_space<vmem>>, vector<1x256xf32>
    %cst = arith.constant dense<0.000000e+00> : vector<16x256xf32>
    %8 = tpu.matmul %3, %5, %cst {dimension_numbers = #tpu.dot_dimension_numbers<[1], [0], [0], [1], [0, 0, 1, 1], [], []>} : vector<16x256xf32>, vector<256x256xf32>, vector<16x256xf32> -> vector<16x256xf32>
    %cst_10 = arith.constant dense<0.000000e+00> : vector<16x256xf32>
    %9 = tpu.matmul %3, %6, %cst_10 {dimension_numbers = #tpu.dot_dimension_numbers<[1], [0], [0], [1], [0, 0, 1, 1], [], []>} : vector<16x256xf32>, vector<256x256xf32>, vector<16x256xf32> -> vector<16x256xf32>
    %cst_11 = arith.constant dense<0.000000e+00> : vector<16x256xf32>
    %10 = tpu.matmul %4, %5, %cst_11 {dimension_numbers = #tpu.dot_dimension_numbers<[1], [0], [0], [1], [0, 0, 1, 1], [], []>} : vector<16x256xf32>, vector<256x256xf32>, vector<16x256xf32> -> vector<16x256xf32>
    %cst_12 = arith.constant dense<0.000000e+00> : vector<16x256xf32>
    %11 = tpu.matmul %4, %6, %cst_12 {dimension_numbers = #tpu.dot_dimension_numbers<[1], [0], [0], [1], [0, 0, 1, 1], [], []>} : vector<16x256xf32>, vector<256x256xf32>, vector<16x256xf32> -> vector<16x256xf32>
    %12 = arith.mulf %8, %8 : vector<16x256xf32>
    %13 = arith.mulf %9, %9 : vector<16x256xf32>
    %14 = arith.addf %12, %13 : vector<16x256xf32>
    %15 = math.sqrt %14 : vector<16x256xf32>
    %16 = arith.mulf %10, %10 : vector<16x256xf32>
    %17 = arith.mulf %11, %11 : vector<16x256xf32>
    %18 = arith.addf %16, %17 : vector<16x256xf32>
    %19 = math.sqrt %18 : vector<16x256xf32>
    %20 = arith.subf %15, %19 : vector<16x256xf32>
    %21 = math.absf %20 : vector<16x256xf32>
    %cst_13 = arith.constant 9.99999974E-6 : f32
    %22 = vector.broadcast %cst_13 : f32 to vector<16x256xf32>
    %23 = arith.addf %15, %22 : vector<16x256xf32>
    %cst_14 = arith.constant 9.99999974E-6 : f32
    %24 = vector.broadcast %cst_14 : f32 to vector<16x256xf32>
    %25 = arith.addf %19, %24 : vector<16x256xf32>
    %26 = arith.divf %23, %25 : vector<16x256xf32>
    %27 = math.log %26 : vector<16x256xf32>
    %28 = math.absf %27 : vector<16x256xf32>
    %29 = arith.subf %8, %10 : vector<16x256xf32>
    %30 = math.absf %29 : vector<16x256xf32>
    %31 = arith.subf %9, %11 : vector<16x256xf32>
    %32 = math.absf %31 : vector<16x256xf32>
    %33 = arith.addf %30, %32 : vector<16x256xf32>
    %c0_15 = arith.constant 0 : index
    %c0_16 = arith.constant 0 : index
    %c0_17 = arith.constant 0 : index
    %34 = vector.load %arg7[%c0_15, %c0_16, %c0_17] : memref<1x8x128xf32, #tpu.memory_space<vmem>>, vector<1x8x128xf32>
    %35 = vector.shape_cast %28 : vector<16x256xf32> to vector<1x16x256xf32>
    %cst_18 = arith.constant dense<0.000000e+00> : vector<1xf32>
    %36 = vector.multi_reduction <add>, %35, %cst_18 [1, 2] : vector<1x16x256xf32> to vector<1xf32>
    %37 = vector.shape_cast %36 : vector<1xf32> to vector<1x1x1xf32>
    %38 = vector.extract %37[0, 0, 0] : f32 from vector<1x1x1xf32>
    %39 = vector.broadcast %38 : f32 to vector<1x8x128xf32>
    %40 = arith.addf %34, %39 : vector<1x8x128xf32>
    %c0_19 = arith.constant 0 : index
    %c0_20 = arith.constant 0 : index
    %c0_21 = arith.constant 0 : index
    %41 = vector.load %arg7[%c0_19, %c0_20, %c0_21] : memref<1x8x128xf32, #tpu.memory_space<vmem>>, vector<1x8x128xf32>
    tpu.vector_store %arg7[%c0_19, %c0_20, %c0_21], %40 {strides = array<i32>} : memref<1x8x128xf32, #tpu.memory_space<vmem>>, vector<1x8x128xf32>,
    %c0_22 = arith.constant 0 : index
    %c0_23 = arith.constant 0 : index
    %c0_24 = arith.constant 0 : index
    %42 = vector.load %arg8[%c0_22, %c0_23, %c0_24] : memref<1x8x128xf32, #tpu.memory_space<vmem>>, vector<1x8x128xf32>
    %43 = arith.mulf %20, %20 : vector<16x256xf32>
    %44 = vector.shape_cast %43 : vector<16x256xf32> to vector<1x16x256xf32>
    %cst_25 = arith.constant dense<0.000000e+00> : vector<1xf32>
    %45 = vector.multi_reduction <add>, %44, %cst_25 [1, 2] : vector<1x16x256xf32> to vector<1xf32>
    %46 = vector.shape_cast %45 : vector<1xf32> to vector<1x1x1xf32>
    %47 = vector.extract %46[0, 0, 0] : f32 from vector<1x1x1xf32>
    %48 = vector.broadcast %47 : f32 to vector<1x8x128xf32>
    %49 = arith.addf %42, %48 : vector<1x8x128xf32>
    %c0_26 = arith.constant 0 : index
    %c0_27 = arith.constant 0 : index
    %c0_28 = arith.constant 0 : index
    %50 = vector.load %arg8[%c0_26, %c0_27, %c0_28] : memref<1x8x128xf32, #tpu.memory_space<vmem>>, vector<1x8x128xf32>
    tpu.vector_store %arg8[%c0_26, %c0_27, %c0_28], %49 {strides = array<i32>} : memref<1x8x128xf32, #tpu.memory_space<vmem>>, vector<1x8x128xf32>,
    %c0_29 = arith.constant 0 : index
    %c0_30 = arith.constant 0 : index
    %c0_31 = arith.constant 0 : index
    %51 = vector.load %arg9[%c0_29, %c0_30, %c0_31] : memref<1x8x128xf32, #tpu.memory_space<vmem>>, vector<1x8x128xf32>
    %52 = vector.shape_cast %33 : vector<16x256xf32> to vector<1x16x256xf32>
    %cst_32 = arith.constant dense<0.000000e+00> : vector<1xf32>
    %53 = vector.multi_reduction <add>, %52, %cst_32 [1, 2] : vector<1x16x256xf32> to vector<1xf32>
    %54 = vector.shape_cast %53 : vector<1xf32> to vector<1x1x1xf32>
    %55 = vector.extract %54[0, 0, 0] : f32 from vector<1x1x1xf32>
    %56 = vector.broadcast %55 : f32 to vector<1x8x128xf32>
    %57 = arith.addf %51, %56 : vector<1x8x128xf32>
    %c0_33 = arith.constant 0 : index
    %c0_34 = arith.constant 0 : index
    %c0_35 = arith.constant 0 : index
    %58 = vector.load %arg9[%c0_33, %c0_34, %c0_35] : memref<1x8x128xf32, #tpu.memory_space<vmem>>, vector<1x8x128xf32>
    tpu.vector_store %arg9[%c0_33, %c0_34, %c0_35], %57 {strides = array<i32>} : memref<1x8x128xf32, #tpu.memory_space<vmem>>, vector<1x8x128xf32>,
    %c0_36 = arith.constant 0 : index
    %c0_37 = arith.constant 0 : index
    %c0_38 = arith.constant 0 : index
    %59 = vector.load %arg10[%c0_36, %c0_37, %c0_38] : memref<1x8x128xf32, #tpu.memory_space<vmem>>, vector<1x8x128xf32>
    %60 = vector.broadcast %7 : vector<1x256xf32> to vector<16x256xf32>
    %61 = arith.mulf %21, %60 : vector<16x256xf32>
    %62 = vector.shape_cast %61 : vector<16x256xf32> to vector<1x16x256xf32>
    %cst_39 = arith.constant dense<0.000000e+00> : vector<1xf32>
    %63 = vector.multi_reduction <add>, %62, %cst_39 [1, 2] : vector<1x16x256xf32> to vector<1xf32>
    %64 = vector.shape_cast %63 : vector<1xf32> to vector<1x1x1xf32>
    %65 = vector.extract %64[0, 0, 0] : f32 from vector<1x1x1xf32>
    %66 = vector.broadcast %65 : f32 to vector<1x8x128xf32>
    %67 = arith.addf %59, %66 : vector<1x8x128xf32>
    %c0_40 = arith.constant 0 : index
    %c0_41 = arith.constant 0 : index
    %c0_42 = arith.constant 0 : index
    %68 = vector.load %arg10[%c0_40, %c0_41, %c0_42] : memref<1x8x128xf32, #tpu.memory_space<vmem>>, vector<1x8x128xf32>
    tpu.vector_store %arg10[%c0_40, %c0_41, %c0_42], %67 {strides = array<i32>} : memref<1x8x128xf32, #tpu.memory_space<vmem>>, vector<1x8x128xf32>,
    %c0_43 = arith.constant 0 : index
    %c0_44 = arith.constant 0 : index
    %c0_45 = arith.constant 0 : index
    %69 = vector.load %arg11[%c0_43, %c0_44, %c0_45] : memref<1x8x128xf32, #tpu.memory_space<vmem>>, vector<1x8x128xf32>
    %70 = arith.mulf %19, %19 : vector<16x256xf32>
    %71 = vector.shape_cast %70 : vector<16x256xf32> to vector<1x16x256xf32>
    %cst_46 = arith.constant dense<0.000000e+00> : vector<1xf32>
    %72 = vector.multi_reduction <add>, %71, %cst_46 [1, 2] : vector<1x16x256xf32> to vector<1xf32>
    %73 = vector.shape_cast %72 : vector<1xf32> to vector<1x1x1xf32>
    %74 = vector.extract %73[0, 0, 0] : f32 from vector<1x1x1xf32>
    %75 = vector.broadcast %74 : f32 to vector<1x8x128xf32>
    %76 = arith.addf %69, %75 : vector<1x8x128xf32>
    %c0_47 = arith.constant 0 : index
    %c0_48 = arith.constant 0 : index
    %c0_49 = arith.constant 0 : index
    %77 = vector.load %arg11[%c0_47, %c0_48, %c0_49] : memref<1x8x128xf32, #tpu.memory_space<vmem>>, vector<1x8x128xf32>
    tpu.vector_store %arg11[%c0_47, %c0_48, %c0_49], %76 {strides = array<i32>} : memref<1x8x128xf32, #tpu.memory_space<vmem>>, vector<1x8x128xf32>,
    return
  }
  func.func @transform_0(%arg0: i32, %arg1: i32) -> (i32, i32) {
    %c0_i32 = arith.constant 0 : i32
    %c0_i32_0 = arith.constant 0 : i32
    return %arg0, %c0_i32 : i32, i32
  }
  func.func @transform_1(%arg0: i32, %arg1: i32) -> (i32, i32) {
    %c0_i32 = arith.constant 0 : i32
    %c0_i32_0 = arith.constant 0 : i32
    return %arg0, %c0_i32 : i32, i32
  }
  func.func @transform_2(%arg0: i32, %arg1: i32) -> (i32, i32) {
    %c0_i32 = arith.constant 0 : i32
    %c0_i32_0 = arith.constant 0 : i32
    return %c0_i32, %arg1 : i32, i32
  }
  func.func @transform_3(%arg0: i32, %arg1: i32) -> (i32, i32) {
    %c0_i32 = arith.constant 0 : i32
    %c0_i32_0 = arith.constant 0 : i32
    return %c0_i32, %arg1 : i32, i32
  }
  func.func @transform_4(%arg0: i32, %arg1: i32) -> (i32, i32) {
    %c0_i32 = arith.constant 0 : i32
    %c0_i32_0 = arith.constant 0 : i32
    return %c0_i32, %arg1 : i32, i32
  }
  func.func @transform_5(%arg0: i32, %arg1: i32) -> (i32, i32, i32) {
    %c0_i32 = arith.constant 0 : i32
    %c0_i32_0 = arith.constant 0 : i32
    %c0_i32_1 = arith.constant 0 : i32
    return %arg0, %c0_i32, %c0_i32_0 : i32, i32, i32
  }
  func.func @transform_6(%arg0: i32, %arg1: i32) -> (i32, i32, i32) {
    %c0_i32 = arith.constant 0 : i32
    %c0_i32_0 = arith.constant 0 : i32
    %c0_i32_1 = arith.constant 0 : i32
    return %arg0, %c0_i32, %c0_i32_0 : i32, i32, i32
  }
  func.func @transform_7(%arg0: i32, %arg1: i32) -> (i32, i32, i32) {
    %c0_i32 = arith.constant 0 : i32
    %c0_i32_0 = arith.constant 0 : i32
    %c0_i32_1 = arith.constant 0 : i32
    return %arg0, %c0_i32, %c0_i32_0 : i32, i32, i32
  }
  func.func @transform_8(%arg0: i32, %arg1: i32) -> (i32, i32, i32) {
    %c0_i32 = arith.constant 0 : i32
    %c0_i32_0 = arith.constant 0 : i32
    %c0_i32_1 = arith.constant 0 : i32
    return %arg0, %c0_i32, %c0_i32_0 : i32, i32, i32
  }
  func.func @transform_9(%arg0: i32, %arg1: i32) -> (i32, i32, i32) {
    %c0_i32 = arith.constant 0 : i32
    %c0_i32_0 = arith.constant 0 : i32
    %c0_i32_1 = arith.constant 0 : i32
    return %arg0, %c0_i32, %c0_i32_0 : i32, i32, i32
  }
}

module attributes {stable_mosaic.version = 11 : i64} {
  func.func @_stft_partial_sums_kernel(%arg0: i32, %arg1: i32, %arg2: memref<24x128xf32, #tpu.memory_space<vmem>>, %arg3: memref<24x128xf32, #tpu.memory_space<vmem>>, %arg4: memref<128x128xf32, #tpu.memory_space<vmem>>, %arg5: memref<128x128xf32, #tpu.memory_space<vmem>>, %arg6: memref<1x128xf32, #tpu.memory_space<vmem>>, %arg7: memref<1x8x128xf32, #tpu.memory_space<vmem>>, %arg8: memref<1x8x128xf32, #tpu.memory_space<vmem>>, %arg9: memref<1x8x128xf32, #tpu.memory_space<vmem>>, %arg10: memref<1x8x128xf32, #tpu.memory_space<vmem>>, %arg11: memref<1x8x128xf32, #tpu.memory_space<vmem>>) attributes {dimension_semantics = [#tpu.dimension_semantics<parallel>, #tpu.dimension_semantics<arbitrary>], iteration_bounds = array<i64: 1, 1>, scalar_prefetch = 0 : i64, scratch_operands = 0 : i64, tpu.core_type = #tpu.core_type<tc>, window_params = [{transform_indices = @transform_0, window_bounds = array<i64: 24, 128>}, {transform_indices = @transform_1, window_bounds = array<i64: 24, 128>}, {transform_indices = @transform_2, window_bounds = array<i64: 128, 128>}, {transform_indices = @transform_3, window_bounds = array<i64: 128, 128>}, {transform_indices = @transform_4, window_bounds = array<i64: 1, 128>}, {transform_indices = @transform_5, window_bounds = array<i64: 1, 8, 128>}, {transform_indices = @transform_6, window_bounds = array<i64: 1, 8, 128>}, {transform_indices = @transform_7, window_bounds = array<i64: 1, 8, 128>}, {transform_indices = @transform_8, window_bounds = array<i64: 1, 8, 128>}, {transform_indices = @transform_9, window_bounds = array<i64: 1, 8, 128>}]} {
    %c0_i32 = arith.constant 0 : i32
    %0 = arith.cmpi eq, %arg1, %c0_i32 : i32
    %1 = arith.extui %0 : i1 to i32
    %c0_i32_0 = arith.constant 0 : i32
    %2 = arith.cmpi ne, %1, %c0_i32_0 : i32
    scf.if %2 {
      %cst_50 = arith.constant 0.000000e+00 : f32
      %78 = vector.broadcast %cst_50 : f32 to vector<1x8x128xf32>
      %c0_51 = arith.constant 0 : index
      %c0_52 = arith.constant 0 : index
      %c0_53 = arith.constant 0 : index
      %79 = vector.load %arg7[%c0_51, %c0_52, %c0_53] : memref<1x8x128xf32, #tpu.memory_space<vmem>>, vector<1x8x128xf32>
      tpu.vector_store %arg7[%c0_51, %c0_52, %c0_53], %78 {strides = array<i32>} : memref<1x8x128xf32, #tpu.memory_space<vmem>>, vector<1x8x128xf32>,
      %cst_54 = arith.constant 0.000000e+00 : f32
      %80 = vector.broadcast %cst_54 : f32 to vector<1x8x128xf32>
      %c0_55 = arith.constant 0 : index
      %c0_56 = arith.constant 0 : index
      %c0_57 = arith.constant 0 : index
      %81 = vector.load %arg8[%c0_55, %c0_56, %c0_57] : memref<1x8x128xf32, #tpu.memory_space<vmem>>, vector<1x8x128xf32>
      tpu.vector_store %arg8[%c0_55, %c0_56, %c0_57], %80 {strides = array<i32>} : memref<1x8x128xf32, #tpu.memory_space<vmem>>, vector<1x8x128xf32>,
      %cst_58 = arith.constant 0.000000e+00 : f32
      %82 = vector.broadcast %cst_58 : f32 to vector<1x8x128xf32>
      %c0_59 = arith.constant 0 : index
      %c0_60 = arith.constant 0 : index
      %c0_61 = arith.constant 0 : index
      %83 = vector.load %arg9[%c0_59, %c0_60, %c0_61] : memref<1x8x128xf32, #tpu.memory_space<vmem>>, vector<1x8x128xf32>
      tpu.vector_store %arg9[%c0_59, %c0_60, %c0_61], %82 {strides = array<i32>} : memref<1x8x128xf32, #tpu.memory_space<vmem>>, vector<1x8x128xf32>,
      %cst_62 = arith.constant 0.000000e+00 : f32
      %84 = vector.broadcast %cst_62 : f32 to vector<1x8x128xf32>
      %c0_63 = arith.constant 0 : index
      %c0_64 = arith.constant 0 : index
      %c0_65 = arith.constant 0 : index
      %85 = vector.load %arg10[%c0_63, %c0_64, %c0_65] : memref<1x8x128xf32, #tpu.memory_space<vmem>>, vector<1x8x128xf32>
      tpu.vector_store %arg10[%c0_63, %c0_64, %c0_65], %84 {strides = array<i32>} : memref<1x8x128xf32, #tpu.memory_space<vmem>>, vector<1x8x128xf32>,
      %cst_66 = arith.constant 0.000000e+00 : f32
      %86 = vector.broadcast %cst_66 : f32 to vector<1x8x128xf32>
      %c0_67 = arith.constant 0 : index
      %c0_68 = arith.constant 0 : index
      %c0_69 = arith.constant 0 : index
      %87 = vector.load %arg11[%c0_67, %c0_68, %c0_69] : memref<1x8x128xf32, #tpu.memory_space<vmem>>, vector<1x8x128xf32>
      tpu.vector_store %arg11[%c0_67, %c0_68, %c0_69], %86 {strides = array<i32>} : memref<1x8x128xf32, #tpu.memory_space<vmem>>, vector<1x8x128xf32>,
    } else {
    }
    %c0 = arith.constant 0 : index
    %c0_1 = arith.constant 0 : index
    %3 = vector.load %arg2[%c0, %c0_1] : memref<24x128xf32, #tpu.memory_space<vmem>>, vector<24x128xf32>
    %c0_2 = arith.constant 0 : index
    %c0_3 = arith.constant 0 : index
    %4 = vector.load %arg3[%c0_2, %c0_3] : memref<24x128xf32, #tpu.memory_space<vmem>>, vector<24x128xf32>
    %c0_4 = arith.constant 0 : index
    %c0_5 = arith.constant 0 : index
    %5 = vector.load %arg4[%c0_4, %c0_5] : memref<128x128xf32, #tpu.memory_space<vmem>>, vector<128x128xf32>
    %c0_6 = arith.constant 0 : index
    %c0_7 = arith.constant 0 : index
    %6 = vector.load %arg5[%c0_6, %c0_7] : memref<128x128xf32, #tpu.memory_space<vmem>>, vector<128x128xf32>
    %c0_8 = arith.constant 0 : index
    %c0_9 = arith.constant 0 : index
    %7 = vector.load %arg6[%c0_8, %c0_9] : memref<1x128xf32, #tpu.memory_space<vmem>>, vector<1x128xf32>
    %cst = arith.constant dense<0.000000e+00> : vector<24x128xf32>
    %8 = tpu.matmul %3, %5, %cst {dimension_numbers = #tpu.dot_dimension_numbers<[1], [0], [0], [1], [0, 0, 1, 1], [], []>} : vector<24x128xf32>, vector<128x128xf32>, vector<24x128xf32> -> vector<24x128xf32>
    %cst_10 = arith.constant dense<0.000000e+00> : vector<24x128xf32>
    %9 = tpu.matmul %3, %6, %cst_10 {dimension_numbers = #tpu.dot_dimension_numbers<[1], [0], [0], [1], [0, 0, 1, 1], [], []>} : vector<24x128xf32>, vector<128x128xf32>, vector<24x128xf32> -> vector<24x128xf32>
    %cst_11 = arith.constant dense<0.000000e+00> : vector<24x128xf32>
    %10 = tpu.matmul %4, %5, %cst_11 {dimension_numbers = #tpu.dot_dimension_numbers<[1], [0], [0], [1], [0, 0, 1, 1], [], []>} : vector<24x128xf32>, vector<128x128xf32>, vector<24x128xf32> -> vector<24x128xf32>
    %cst_12 = arith.constant dense<0.000000e+00> : vector<24x128xf32>
    %11 = tpu.matmul %4, %6, %cst_12 {dimension_numbers = #tpu.dot_dimension_numbers<[1], [0], [0], [1], [0, 0, 1, 1], [], []>} : vector<24x128xf32>, vector<128x128xf32>, vector<24x128xf32> -> vector<24x128xf32>
    %12 = arith.mulf %8, %8 : vector<24x128xf32>
    %13 = arith.mulf %9, %9 : vector<24x128xf32>
    %14 = arith.addf %12, %13 : vector<24x128xf32>
    %15 = math.sqrt %14 : vector<24x128xf32>
    %16 = arith.mulf %10, %10 : vector<24x128xf32>
    %17 = arith.mulf %11, %11 : vector<24x128xf32>
    %18 = arith.addf %16, %17 : vector<24x128xf32>
    %19 = math.sqrt %18 : vector<24x128xf32>
    %20 = arith.subf %15, %19 : vector<24x128xf32>
    %21 = math.absf %20 : vector<24x128xf32>
    %cst_13 = arith.constant 9.99999974E-6 : f32
    %22 = vector.broadcast %cst_13 : f32 to vector<24x128xf32>
    %23 = arith.addf %15, %22 : vector<24x128xf32>
    %cst_14 = arith.constant 9.99999974E-6 : f32
    %24 = vector.broadcast %cst_14 : f32 to vector<24x128xf32>
    %25 = arith.addf %19, %24 : vector<24x128xf32>
    %26 = arith.divf %23, %25 : vector<24x128xf32>
    %27 = math.log %26 : vector<24x128xf32>
    %28 = math.absf %27 : vector<24x128xf32>
    %29 = arith.subf %8, %10 : vector<24x128xf32>
    %30 = math.absf %29 : vector<24x128xf32>
    %31 = arith.subf %9, %11 : vector<24x128xf32>
    %32 = math.absf %31 : vector<24x128xf32>
    %33 = arith.addf %30, %32 : vector<24x128xf32>
    %c0_15 = arith.constant 0 : index
    %c0_16 = arith.constant 0 : index
    %c0_17 = arith.constant 0 : index
    %34 = vector.load %arg7[%c0_15, %c0_16, %c0_17] : memref<1x8x128xf32, #tpu.memory_space<vmem>>, vector<1x8x128xf32>
    %35 = vector.shape_cast %28 : vector<24x128xf32> to vector<1x24x128xf32>
    %cst_18 = arith.constant dense<0.000000e+00> : vector<1xf32>
    %36 = vector.multi_reduction <add>, %35, %cst_18 [1, 2] : vector<1x24x128xf32> to vector<1xf32>
    %37 = vector.shape_cast %36 : vector<1xf32> to vector<1x1x1xf32>
    %38 = vector.extract %37[0, 0, 0] : f32 from vector<1x1x1xf32>
    %39 = vector.broadcast %38 : f32 to vector<1x8x128xf32>
    %40 = arith.addf %34, %39 : vector<1x8x128xf32>
    %c0_19 = arith.constant 0 : index
    %c0_20 = arith.constant 0 : index
    %c0_21 = arith.constant 0 : index
    %41 = vector.load %arg7[%c0_19, %c0_20, %c0_21] : memref<1x8x128xf32, #tpu.memory_space<vmem>>, vector<1x8x128xf32>
    tpu.vector_store %arg7[%c0_19, %c0_20, %c0_21], %40 {strides = array<i32>} : memref<1x8x128xf32, #tpu.memory_space<vmem>>, vector<1x8x128xf32>,
    %c0_22 = arith.constant 0 : index
    %c0_23 = arith.constant 0 : index
    %c0_24 = arith.constant 0 : index
    %42 = vector.load %arg8[%c0_22, %c0_23, %c0_24] : memref<1x8x128xf32, #tpu.memory_space<vmem>>, vector<1x8x128xf32>
    %43 = arith.mulf %20, %20 : vector<24x128xf32>
    %44 = vector.shape_cast %43 : vector<24x128xf32> to vector<1x24x128xf32>
    %cst_25 = arith.constant dense<0.000000e+00> : vector<1xf32>
    %45 = vector.multi_reduction <add>, %44, %cst_25 [1, 2] : vector<1x24x128xf32> to vector<1xf32>
    %46 = vector.shape_cast %45 : vector<1xf32> to vector<1x1x1xf32>
    %47 = vector.extract %46[0, 0, 0] : f32 from vector<1x1x1xf32>
    %48 = vector.broadcast %47 : f32 to vector<1x8x128xf32>
    %49 = arith.addf %42, %48 : vector<1x8x128xf32>
    %c0_26 = arith.constant 0 : index
    %c0_27 = arith.constant 0 : index
    %c0_28 = arith.constant 0 : index
    %50 = vector.load %arg8[%c0_26, %c0_27, %c0_28] : memref<1x8x128xf32, #tpu.memory_space<vmem>>, vector<1x8x128xf32>
    tpu.vector_store %arg8[%c0_26, %c0_27, %c0_28], %49 {strides = array<i32>} : memref<1x8x128xf32, #tpu.memory_space<vmem>>, vector<1x8x128xf32>,
    %c0_29 = arith.constant 0 : index
    %c0_30 = arith.constant 0 : index
    %c0_31 = arith.constant 0 : index
    %51 = vector.load %arg9[%c0_29, %c0_30, %c0_31] : memref<1x8x128xf32, #tpu.memory_space<vmem>>, vector<1x8x128xf32>
    %52 = vector.shape_cast %33 : vector<24x128xf32> to vector<1x24x128xf32>
    %cst_32 = arith.constant dense<0.000000e+00> : vector<1xf32>
    %53 = vector.multi_reduction <add>, %52, %cst_32 [1, 2] : vector<1x24x128xf32> to vector<1xf32>
    %54 = vector.shape_cast %53 : vector<1xf32> to vector<1x1x1xf32>
    %55 = vector.extract %54[0, 0, 0] : f32 from vector<1x1x1xf32>
    %56 = vector.broadcast %55 : f32 to vector<1x8x128xf32>
    %57 = arith.addf %51, %56 : vector<1x8x128xf32>
    %c0_33 = arith.constant 0 : index
    %c0_34 = arith.constant 0 : index
    %c0_35 = arith.constant 0 : index
    %58 = vector.load %arg9[%c0_33, %c0_34, %c0_35] : memref<1x8x128xf32, #tpu.memory_space<vmem>>, vector<1x8x128xf32>
    tpu.vector_store %arg9[%c0_33, %c0_34, %c0_35], %57 {strides = array<i32>} : memref<1x8x128xf32, #tpu.memory_space<vmem>>, vector<1x8x128xf32>,
    %c0_36 = arith.constant 0 : index
    %c0_37 = arith.constant 0 : index
    %c0_38 = arith.constant 0 : index
    %59 = vector.load %arg10[%c0_36, %c0_37, %c0_38] : memref<1x8x128xf32, #tpu.memory_space<vmem>>, vector<1x8x128xf32>
    %60 = vector.broadcast %7 : vector<1x128xf32> to vector<24x128xf32>
    %61 = arith.mulf %21, %60 : vector<24x128xf32>
    %62 = vector.shape_cast %61 : vector<24x128xf32> to vector<1x24x128xf32>
    %cst_39 = arith.constant dense<0.000000e+00> : vector<1xf32>
    %63 = vector.multi_reduction <add>, %62, %cst_39 [1, 2] : vector<1x24x128xf32> to vector<1xf32>
    %64 = vector.shape_cast %63 : vector<1xf32> to vector<1x1x1xf32>
    %65 = vector.extract %64[0, 0, 0] : f32 from vector<1x1x1xf32>
    %66 = vector.broadcast %65 : f32 to vector<1x8x128xf32>
    %67 = arith.addf %59, %66 : vector<1x8x128xf32>
    %c0_40 = arith.constant 0 : index
    %c0_41 = arith.constant 0 : index
    %c0_42 = arith.constant 0 : index
    %68 = vector.load %arg10[%c0_40, %c0_41, %c0_42] : memref<1x8x128xf32, #tpu.memory_space<vmem>>, vector<1x8x128xf32>
    tpu.vector_store %arg10[%c0_40, %c0_41, %c0_42], %67 {strides = array<i32>} : memref<1x8x128xf32, #tpu.memory_space<vmem>>, vector<1x8x128xf32>,
    %c0_43 = arith.constant 0 : index
    %c0_44 = arith.constant 0 : index
    %c0_45 = arith.constant 0 : index
    %69 = vector.load %arg11[%c0_43, %c0_44, %c0_45] : memref<1x8x128xf32, #tpu.memory_space<vmem>>, vector<1x8x128xf32>
    %70 = arith.mulf %19, %19 : vector<24x128xf32>
    %71 = vector.shape_cast %70 : vector<24x128xf32> to vector<1x24x128xf32>
    %cst_46 = arith.constant dense<0.000000e+00> : vector<1xf32>
    %72 = vector.multi_reduction <add>, %71, %cst_46 [1, 2] : vector<1x24x128xf32> to vector<1xf32>
    %73 = vector.shape_cast %72 : vector<1xf32> to vector<1x1x1xf32>
    %74 = vector.extract %73[0, 0, 0] : f32 from vector<1x1x1xf32>
    %75 = vector.broadcast %74 : f32 to vector<1x8x128xf32>
    %76 = arith.addf %69, %75 : vector<1x8x128xf32>
    %c0_47 = arith.constant 0 : index
    %c0_48 = arith.constant 0 : index
    %c0_49 = arith.constant 0 : index
    %77 = vector.load %arg11[%c0_47, %c0_48, %c0_49] : memref<1x8x128xf32, #tpu.memory_space<vmem>>, vector<1x8x128xf32>
    tpu.vector_store %arg11[%c0_47, %c0_48, %c0_49], %76 {strides = array<i32>} : memref<1x8x128xf32, #tpu.memory_space<vmem>>, vector<1x8x128xf32>,
    return
  }
  func.func @transform_0(%arg0: i32, %arg1: i32) -> (i32, i32) {
    %c0_i32 = arith.constant 0 : i32
    %c0_i32_0 = arith.constant 0 : i32
    return %arg0, %c0_i32 : i32, i32
  }
  func.func @transform_1(%arg0: i32, %arg1: i32) -> (i32, i32) {
    %c0_i32 = arith.constant 0 : i32
    %c0_i32_0 = arith.constant 0 : i32
    return %arg0, %c0_i32 : i32, i32
  }
  func.func @transform_2(%arg0: i32, %arg1: i32) -> (i32, i32) {
    %c0_i32 = arith.constant 0 : i32
    %c0_i32_0 = arith.constant 0 : i32
    return %c0_i32, %arg1 : i32, i32
  }
  func.func @transform_3(%arg0: i32, %arg1: i32) -> (i32, i32) {
    %c0_i32 = arith.constant 0 : i32
    %c0_i32_0 = arith.constant 0 : i32
    return %c0_i32, %arg1 : i32, i32
  }
  func.func @transform_4(%arg0: i32, %arg1: i32) -> (i32, i32) {
    %c0_i32 = arith.constant 0 : i32
    %c0_i32_0 = arith.constant 0 : i32
    return %c0_i32, %arg1 : i32, i32
  }
  func.func @transform_5(%arg0: i32, %arg1: i32) -> (i32, i32, i32) {
    %c0_i32 = arith.constant 0 : i32
    %c0_i32_0 = arith.constant 0 : i32
    %c0_i32_1 = arith.constant 0 : i32
    return %arg0, %c0_i32, %c0_i32_0 : i32, i32, i32
  }
  func.func @transform_6(%arg0: i32, %arg1: i32) -> (i32, i32, i32) {
    %c0_i32 = arith.constant 0 : i32
    %c0_i32_0 = arith.constant 0 : i32
    %c0_i32_1 = arith.constant 0 : i32
    return %arg0, %c0_i32, %c0_i32_0 : i32, i32, i32
  }
  func.func @transform_7(%arg0: i32, %arg1: i32) -> (i32, i32, i32) {
    %c0_i32 = arith.constant 0 : i32
    %c0_i32_0 = arith.constant 0 : i32
    %c0_i32_1 = arith.constant 0 : i32
    return %arg0, %c0_i32, %c0_i32_0 : i32, i32, i32
  }
  func.func @transform_8(%arg0: i32, %arg1: i32) -> (i32, i32, i32) {
    %c0_i32 = arith.constant 0 : i32
    %c0_i32_0 = arith.constant 0 : i32
    %c0_i32_1 = arith.constant 0 : i32
    return %arg0, %c0_i32, %c0_i32_0 : i32, i32, i32
  }
  func.func @transform_9(%arg0: i32, %arg1: i32) -> (i32, i32, i32) {
    %c0_i32 = arith.constant 0 : i32
    %c0_i32_0 = arith.constant 0 : i32
    %c0_i32_1 = arith.constant 0 : i32
    return %arg0, %c0_i32, %c0_i32_0 : i32, i32, i32
  }
}

module attributes {stable_mosaic.version = 11 : i64} {
  func.func @_stft_partial_sums_kernel(%arg0: i32, %arg1: i32, %arg2: memref<40x64xf32, #tpu.memory_space<vmem>>, %arg3: memref<40x64xf32, #tpu.memory_space<vmem>>, %arg4: memref<64x128xf32, #tpu.memory_space<vmem>>, %arg5: memref<64x128xf32, #tpu.memory_space<vmem>>, %arg6: memref<1x128xf32, #tpu.memory_space<vmem>>, %arg7: memref<1x8x128xf32, #tpu.memory_space<vmem>>, %arg8: memref<1x8x128xf32, #tpu.memory_space<vmem>>, %arg9: memref<1x8x128xf32, #tpu.memory_space<vmem>>, %arg10: memref<1x8x128xf32, #tpu.memory_space<vmem>>, %arg11: memref<1x8x128xf32, #tpu.memory_space<vmem>>) attributes {dimension_semantics = [#tpu.dimension_semantics<parallel>, #tpu.dimension_semantics<arbitrary>], iteration_bounds = array<i64: 1, 1>, scalar_prefetch = 0 : i64, scratch_operands = 0 : i64, tpu.core_type = #tpu.core_type<tc>, window_params = [{transform_indices = @transform_0, window_bounds = array<i64: 40, 64>}, {transform_indices = @transform_1, window_bounds = array<i64: 40, 64>}, {transform_indices = @transform_2, window_bounds = array<i64: 64, 128>}, {transform_indices = @transform_3, window_bounds = array<i64: 64, 128>}, {transform_indices = @transform_4, window_bounds = array<i64: 1, 128>}, {transform_indices = @transform_5, window_bounds = array<i64: 1, 8, 128>}, {transform_indices = @transform_6, window_bounds = array<i64: 1, 8, 128>}, {transform_indices = @transform_7, window_bounds = array<i64: 1, 8, 128>}, {transform_indices = @transform_8, window_bounds = array<i64: 1, 8, 128>}, {transform_indices = @transform_9, window_bounds = array<i64: 1, 8, 128>}]} {
    %c0_i32 = arith.constant 0 : i32
    %0 = arith.cmpi eq, %arg1, %c0_i32 : i32
    %1 = arith.extui %0 : i1 to i32
    %c0_i32_0 = arith.constant 0 : i32
    %2 = arith.cmpi ne, %1, %c0_i32_0 : i32
    scf.if %2 {
      %cst_50 = arith.constant 0.000000e+00 : f32
      %78 = vector.broadcast %cst_50 : f32 to vector<1x8x128xf32>
      %c0_51 = arith.constant 0 : index
      %c0_52 = arith.constant 0 : index
      %c0_53 = arith.constant 0 : index
      %79 = vector.load %arg7[%c0_51, %c0_52, %c0_53] : memref<1x8x128xf32, #tpu.memory_space<vmem>>, vector<1x8x128xf32>
      tpu.vector_store %arg7[%c0_51, %c0_52, %c0_53], %78 {strides = array<i32>} : memref<1x8x128xf32, #tpu.memory_space<vmem>>, vector<1x8x128xf32>,
      %cst_54 = arith.constant 0.000000e+00 : f32
      %80 = vector.broadcast %cst_54 : f32 to vector<1x8x128xf32>
      %c0_55 = arith.constant 0 : index
      %c0_56 = arith.constant 0 : index
      %c0_57 = arith.constant 0 : index
      %81 = vector.load %arg8[%c0_55, %c0_56, %c0_57] : memref<1x8x128xf32, #tpu.memory_space<vmem>>, vector<1x8x128xf32>
      tpu.vector_store %arg8[%c0_55, %c0_56, %c0_57], %80 {strides = array<i32>} : memref<1x8x128xf32, #tpu.memory_space<vmem>>, vector<1x8x128xf32>,
      %cst_58 = arith.constant 0.000000e+00 : f32
      %82 = vector.broadcast %cst_58 : f32 to vector<1x8x128xf32>
      %c0_59 = arith.constant 0 : index
      %c0_60 = arith.constant 0 : index
      %c0_61 = arith.constant 0 : index
      %83 = vector.load %arg9[%c0_59, %c0_60, %c0_61] : memref<1x8x128xf32, #tpu.memory_space<vmem>>, vector<1x8x128xf32>
      tpu.vector_store %arg9[%c0_59, %c0_60, %c0_61], %82 {strides = array<i32>} : memref<1x8x128xf32, #tpu.memory_space<vmem>>, vector<1x8x128xf32>,
      %cst_62 = arith.constant 0.000000e+00 : f32
      %84 = vector.broadcast %cst_62 : f32 to vector<1x8x128xf32>
      %c0_63 = arith.constant 0 : index
      %c0_64 = arith.constant 0 : index
      %c0_65 = arith.constant 0 : index
      %85 = vector.load %arg10[%c0_63, %c0_64, %c0_65] : memref<1x8x128xf32, #tpu.memory_space<vmem>>, vector<1x8x128xf32>
      tpu.vector_store %arg10[%c0_63, %c0_64, %c0_65], %84 {strides = array<i32>} : memref<1x8x128xf32, #tpu.memory_space<vmem>>, vector<1x8x128xf32>,
      %cst_66 = arith.constant 0.000000e+00 : f32
      %86 = vector.broadcast %cst_66 : f32 to vector<1x8x128xf32>
      %c0_67 = arith.constant 0 : index
      %c0_68 = arith.constant 0 : index
      %c0_69 = arith.constant 0 : index
      %87 = vector.load %arg11[%c0_67, %c0_68, %c0_69] : memref<1x8x128xf32, #tpu.memory_space<vmem>>, vector<1x8x128xf32>
      tpu.vector_store %arg11[%c0_67, %c0_68, %c0_69], %86 {strides = array<i32>} : memref<1x8x128xf32, #tpu.memory_space<vmem>>, vector<1x8x128xf32>,
    } else {
    }
    %c0 = arith.constant 0 : index
    %c0_1 = arith.constant 0 : index
    %3 = vector.load %arg2[%c0, %c0_1] : memref<40x64xf32, #tpu.memory_space<vmem>>, vector<40x64xf32>
    %c0_2 = arith.constant 0 : index
    %c0_3 = arith.constant 0 : index
    %4 = vector.load %arg3[%c0_2, %c0_3] : memref<40x64xf32, #tpu.memory_space<vmem>>, vector<40x64xf32>
    %c0_4 = arith.constant 0 : index
    %c0_5 = arith.constant 0 : index
    %5 = vector.load %arg4[%c0_4, %c0_5] : memref<64x128xf32, #tpu.memory_space<vmem>>, vector<64x128xf32>
    %c0_6 = arith.constant 0 : index
    %c0_7 = arith.constant 0 : index
    %6 = vector.load %arg5[%c0_6, %c0_7] : memref<64x128xf32, #tpu.memory_space<vmem>>, vector<64x128xf32>
    %c0_8 = arith.constant 0 : index
    %c0_9 = arith.constant 0 : index
    %7 = vector.load %arg6[%c0_8, %c0_9] : memref<1x128xf32, #tpu.memory_space<vmem>>, vector<1x128xf32>
    %cst = arith.constant dense<0.000000e+00> : vector<40x128xf32>
    %8 = tpu.matmul %3, %5, %cst {dimension_numbers = #tpu.dot_dimension_numbers<[1], [0], [0], [1], [0, 0, 1, 1], [], []>} : vector<40x64xf32>, vector<64x128xf32>, vector<40x128xf32> -> vector<40x128xf32>
    %cst_10 = arith.constant dense<0.000000e+00> : vector<40x128xf32>
    %9 = tpu.matmul %3, %6, %cst_10 {dimension_numbers = #tpu.dot_dimension_numbers<[1], [0], [0], [1], [0, 0, 1, 1], [], []>} : vector<40x64xf32>, vector<64x128xf32>, vector<40x128xf32> -> vector<40x128xf32>
    %cst_11 = arith.constant dense<0.000000e+00> : vector<40x128xf32>
    %10 = tpu.matmul %4, %5, %cst_11 {dimension_numbers = #tpu.dot_dimension_numbers<[1], [0], [0], [1], [0, 0, 1, 1], [], []>} : vector<40x64xf32>, vector<64x128xf32>, vector<40x128xf32> -> vector<40x128xf32>
    %cst_12 = arith.constant dense<0.000000e+00> : vector<40x128xf32>
    %11 = tpu.matmul %4, %6, %cst_12 {dimension_numbers = #tpu.dot_dimension_numbers<[1], [0], [0], [1], [0, 0, 1, 1], [], []>} : vector<40x64xf32>, vector<64x128xf32>, vector<40x128xf32> -> vector<40x128xf32>
    %12 = arith.mulf %8, %8 : vector<40x128xf32>
    %13 = arith.mulf %9, %9 : vector<40x128xf32>
    %14 = arith.addf %12, %13 : vector<40x128xf32>
    %15 = math.sqrt %14 : vector<40x128xf32>
    %16 = arith.mulf %10, %10 : vector<40x128xf32>
    %17 = arith.mulf %11, %11 : vector<40x128xf32>
    %18 = arith.addf %16, %17 : vector<40x128xf32>
    %19 = math.sqrt %18 : vector<40x128xf32>
    %20 = arith.subf %15, %19 : vector<40x128xf32>
    %21 = math.absf %20 : vector<40x128xf32>
    %cst_13 = arith.constant 9.99999974E-6 : f32
    %22 = vector.broadcast %cst_13 : f32 to vector<40x128xf32>
    %23 = arith.addf %15, %22 : vector<40x128xf32>
    %cst_14 = arith.constant 9.99999974E-6 : f32
    %24 = vector.broadcast %cst_14 : f32 to vector<40x128xf32>
    %25 = arith.addf %19, %24 : vector<40x128xf32>
    %26 = arith.divf %23, %25 : vector<40x128xf32>
    %27 = math.log %26 : vector<40x128xf32>
    %28 = math.absf %27 : vector<40x128xf32>
    %29 = arith.subf %8, %10 : vector<40x128xf32>
    %30 = math.absf %29 : vector<40x128xf32>
    %31 = arith.subf %9, %11 : vector<40x128xf32>
    %32 = math.absf %31 : vector<40x128xf32>
    %33 = arith.addf %30, %32 : vector<40x128xf32>
    %c0_15 = arith.constant 0 : index
    %c0_16 = arith.constant 0 : index
    %c0_17 = arith.constant 0 : index
    %34 = vector.load %arg7[%c0_15, %c0_16, %c0_17] : memref<1x8x128xf32, #tpu.memory_space<vmem>>, vector<1x8x128xf32>
    %35 = vector.shape_cast %28 : vector<40x128xf32> to vector<1x40x128xf32>
    %cst_18 = arith.constant dense<0.000000e+00> : vector<1xf32>
    %36 = vector.multi_reduction <add>, %35, %cst_18 [1, 2] : vector<1x40x128xf32> to vector<1xf32>
    %37 = vector.shape_cast %36 : vector<1xf32> to vector<1x1x1xf32>
    %38 = vector.extract %37[0, 0, 0] : f32 from vector<1x1x1xf32>
    %39 = vector.broadcast %38 : f32 to vector<1x8x128xf32>
    %40 = arith.addf %34, %39 : vector<1x8x128xf32>
    %c0_19 = arith.constant 0 : index
    %c0_20 = arith.constant 0 : index
    %c0_21 = arith.constant 0 : index
    %41 = vector.load %arg7[%c0_19, %c0_20, %c0_21] : memref<1x8x128xf32, #tpu.memory_space<vmem>>, vector<1x8x128xf32>
    tpu.vector_store %arg7[%c0_19, %c0_20, %c0_21], %40 {strides = array<i32>} : memref<1x8x128xf32, #tpu.memory_space<vmem>>, vector<1x8x128xf32>,
    %c0_22 = arith.constant 0 : index
    %c0_23 = arith.constant 0 : index
    %c0_24 = arith.constant 0 : index
    %42 = vector.load %arg8[%c0_22, %c0_23, %c0_24] : memref<1x8x128xf32, #tpu.memory_space<vmem>>, vector<1x8x128xf32>
    %43 = arith.mulf %20, %20 : vector<40x128xf32>
    %44 = vector.shape_cast %43 : vector<40x128xf32> to vector<1x40x128xf32>
    %cst_25 = arith.constant dense<0.000000e+00> : vector<1xf32>
    %45 = vector.multi_reduction <add>, %44, %cst_25 [1, 2] : vector<1x40x128xf32> to vector<1xf32>
    %46 = vector.shape_cast %45 : vector<1xf32> to vector<1x1x1xf32>
    %47 = vector.extract %46[0, 0, 0] : f32 from vector<1x1x1xf32>
    %48 = vector.broadcast %47 : f32 to vector<1x8x128xf32>
    %49 = arith.addf %42, %48 : vector<1x8x128xf32>
    %c0_26 = arith.constant 0 : index
    %c0_27 = arith.constant 0 : index
    %c0_28 = arith.constant 0 : index
    %50 = vector.load %arg8[%c0_26, %c0_27, %c0_28] : memref<1x8x128xf32, #tpu.memory_space<vmem>>, vector<1x8x128xf32>
    tpu.vector_store %arg8[%c0_26, %c0_27, %c0_28], %49 {strides = array<i32>} : memref<1x8x128xf32, #tpu.memory_space<vmem>>, vector<1x8x128xf32>,
    %c0_29 = arith.constant 0 : index
    %c0_30 = arith.constant 0 : index
    %c0_31 = arith.constant 0 : index
    %51 = vector.load %arg9[%c0_29, %c0_30, %c0_31] : memref<1x8x128xf32, #tpu.memory_space<vmem>>, vector<1x8x128xf32>
    %52 = vector.shape_cast %33 : vector<40x128xf32> to vector<1x40x128xf32>
    %cst_32 = arith.constant dense<0.000000e+00> : vector<1xf32>
    %53 = vector.multi_reduction <add>, %52, %cst_32 [1, 2] : vector<1x40x128xf32> to vector<1xf32>
    %54 = vector.shape_cast %53 : vector<1xf32> to vector<1x1x1xf32>
    %55 = vector.extract %54[0, 0, 0] : f32 from vector<1x1x1xf32>
    %56 = vector.broadcast %55 : f32 to vector<1x8x128xf32>
    %57 = arith.addf %51, %56 : vector<1x8x128xf32>
    %c0_33 = arith.constant 0 : index
    %c0_34 = arith.constant 0 : index
    %c0_35 = arith.constant 0 : index
    %58 = vector.load %arg9[%c0_33, %c0_34, %c0_35] : memref<1x8x128xf32, #tpu.memory_space<vmem>>, vector<1x8x128xf32>
    tpu.vector_store %arg9[%c0_33, %c0_34, %c0_35], %57 {strides = array<i32>} : memref<1x8x128xf32, #tpu.memory_space<vmem>>, vector<1x8x128xf32>,
    %c0_36 = arith.constant 0 : index
    %c0_37 = arith.constant 0 : index
    %c0_38 = arith.constant 0 : index
    %59 = vector.load %arg10[%c0_36, %c0_37, %c0_38] : memref<1x8x128xf32, #tpu.memory_space<vmem>>, vector<1x8x128xf32>
    %60 = vector.broadcast %7 : vector<1x128xf32> to vector<40x128xf32>
    %61 = arith.mulf %21, %60 : vector<40x128xf32>
    %62 = vector.shape_cast %61 : vector<40x128xf32> to vector<1x40x128xf32>
    %cst_39 = arith.constant dense<0.000000e+00> : vector<1xf32>
    %63 = vector.multi_reduction <add>, %62, %cst_39 [1, 2] : vector<1x40x128xf32> to vector<1xf32>
    %64 = vector.shape_cast %63 : vector<1xf32> to vector<1x1x1xf32>
    %65 = vector.extract %64[0, 0, 0] : f32 from vector<1x1x1xf32>
    %66 = vector.broadcast %65 : f32 to vector<1x8x128xf32>
    %67 = arith.addf %59, %66 : vector<1x8x128xf32>
    %c0_40 = arith.constant 0 : index
    %c0_41 = arith.constant 0 : index
    %c0_42 = arith.constant 0 : index
    %68 = vector.load %arg10[%c0_40, %c0_41, %c0_42] : memref<1x8x128xf32, #tpu.memory_space<vmem>>, vector<1x8x128xf32>
    tpu.vector_store %arg10[%c0_40, %c0_41, %c0_42], %67 {strides = array<i32>} : memref<1x8x128xf32, #tpu.memory_space<vmem>>, vector<1x8x128xf32>,
    %c0_43 = arith.constant 0 : index
    %c0_44 = arith.constant 0 : index
    %c0_45 = arith.constant 0 : index
    %69 = vector.load %arg11[%c0_43, %c0_44, %c0_45] : memref<1x8x128xf32, #tpu.memory_space<vmem>>, vector<1x8x128xf32>
    %70 = arith.mulf %19, %19 : vector<40x128xf32>
    %71 = vector.shape_cast %70 : vector<40x128xf32> to vector<1x40x128xf32>
    %cst_46 = arith.constant dense<0.000000e+00> : vector<1xf32>
    %72 = vector.multi_reduction <add>, %71, %cst_46 [1, 2] : vector<1x40x128xf32> to vector<1xf32>
    %73 = vector.shape_cast %72 : vector<1xf32> to vector<1x1x1xf32>
    %74 = vector.extract %73[0, 0, 0] : f32 from vector<1x1x1xf32>
    %75 = vector.broadcast %74 : f32 to vector<1x8x128xf32>
    %76 = arith.addf %69, %75 : vector<1x8x128xf32>
    %c0_47 = arith.constant 0 : index
    %c0_48 = arith.constant 0 : index
    %c0_49 = arith.constant 0 : index
    %77 = vector.load %arg11[%c0_47, %c0_48, %c0_49] : memref<1x8x128xf32, #tpu.memory_space<vmem>>, vector<1x8x128xf32>
    tpu.vector_store %arg11[%c0_47, %c0_48, %c0_49], %76 {strides = array<i32>} : memref<1x8x128xf32, #tpu.memory_space<vmem>>, vector<1x8x128xf32>,
    return
  }
  func.func @transform_0(%arg0: i32, %arg1: i32) -> (i32, i32) {
    %c0_i32 = arith.constant 0 : i32
    %c0_i32_0 = arith.constant 0 : i32
    return %arg0, %c0_i32 : i32, i32
  }
  func.func @transform_1(%arg0: i32, %arg1: i32) -> (i32, i32) {
    %c0_i32 = arith.constant 0 : i32
    %c0_i32_0 = arith.constant 0 : i32
    return %arg0, %c0_i32 : i32, i32
  }
  func.func @transform_2(%arg0: i32, %arg1: i32) -> (i32, i32) {
    %c0_i32 = arith.constant 0 : i32
    %c0_i32_0 = arith.constant 0 : i32
    return %c0_i32, %arg1 : i32, i32
  }
  func.func @transform_3(%arg0: i32, %arg1: i32) -> (i32, i32) {
    %c0_i32 = arith.constant 0 : i32
    %c0_i32_0 = arith.constant 0 : i32
    return %c0_i32, %arg1 : i32, i32
  }
  func.func @transform_4(%arg0: i32, %arg1: i32) -> (i32, i32) {
    %c0_i32 = arith.constant 0 : i32
    %c0_i32_0 = arith.constant 0 : i32
    return %c0_i32, %arg1 : i32, i32
  }
  func.func @transform_5(%arg0: i32, %arg1: i32) -> (i32, i32, i32) {
    %c0_i32 = arith.constant 0 : i32
    %c0_i32_0 = arith.constant 0 : i32
    %c0_i32_1 = arith.constant 0 : i32
    return %arg0, %c0_i32, %c0_i32_0 : i32, i32, i32
  }
  func.func @transform_6(%arg0: i32, %arg1: i32) -> (i32, i32, i32) {
    %c0_i32 = arith.constant 0 : i32
    %c0_i32_0 = arith.constant 0 : i32
    %c0_i32_1 = arith.constant 0 : i32
    return %arg0, %c0_i32, %c0_i32_0 : i32, i32, i32
  }
  func.func @transform_7(%arg0: i32, %arg1: i32) -> (i32, i32, i32) {
    %c0_i32 = arith.constant 0 : i32
    %c0_i32_0 = arith.constant 0 : i32
    %c0_i32_1 = arith.constant 0 : i32
    return %arg0, %c0_i32, %c0_i32_0 : i32, i32, i32
  }
  func.func @transform_8(%arg0: i32, %arg1: i32) -> (i32, i32, i32) {
    %c0_i32 = arith.constant 0 : i32
    %c0_i32_0 = arith.constant 0 : i32
    %c0_i32_1 = arith.constant 0 : i32
    return %arg0, %c0_i32, %c0_i32_0 : i32, i32, i32
  }
  func.func @transform_9(%arg0: i32, %arg1: i32) -> (i32, i32, i32) {
    %c0_i32 = arith.constant 0 : i32
    %c0_i32_0 = arith.constant 0 : i32
    %c0_i32_1 = arith.constant 0 : i32
    return %arg0, %c0_i32, %c0_i32_0 : i32, i32, i32
  }
}

</mosaic_0001>

<llo_original>
// kernel: enhanced_multi_scale_stft_loss.4
$region0: #{enhanced_multi_scale_stft_loss.4}
  #allocation0 [shape = 'u32[]', space=smem, size = 0x4, offset = 0x4, fixed_abs, tag = 'smem constant byte address 0x4 - core index']
  #allocation1 [shape = 'u32[144,128]{1,0:T(1,128)}', space=vmem, size = 0x12000, scoped, tag = 'internal scratch']
  %s0 = inlined_call_operand.vmem [shape: f32[24,128], index: 0, kind: input, shape index: {}]
  %s1 = inlined_call_operand.vmem [shape: f32[24,128], index: 1, kind: input, shape index: {}]
  %s2 = inlined_call_operand.vmem [shape: f32[128,128], index: 2, kind: input, shape index: {}]
  %s3 = inlined_call_operand.vmem [shape: f32[128,128], index: 3, kind: input, shape index: {}]
  %s4 = inlined_call_operand.vmem [shape: f32[1,128], index: 4, kind: input, shape index: {}]
  %s5 = inlined_call_operand.vmem [shape: f32[1,8,128], index: 5, kind: output, shape index: {0}]
  %s6 = inlined_call_operand.vmem [shape: f32[1,8,128], index: 6, kind: output, shape index: {1}]
  %s7 = inlined_call_operand.vmem [shape: f32[1,8,128], index: 7, kind: output, shape index: {2}]
  %s8 = inlined_call_operand.vmem [shape: f32[1,8,128], index: 8, kind: output, shape index: {3}]
  %s9 = inlined_call_operand.vmem [shape: f32[1,8,128], index: 9, kind: output, shape index: {4}]
  %10 = xla_tuple %s5, %s6, %s7, %s8, %s9
  %s11 = sld [smem:[#allocation0]]
  $region66: #{enhanced_multi_scale_stft_loss.4} parent=0
    _
  %s13 = ssub.s32 1, %s11
  %s14 = scalar_select 0, %s13, %s11
  // Predicated region
  $region2: #{enhanced_multi_scale_stft_loss.4} parent=0 // pred_check
    _
  $region3: #{enhanced_multi_scale_stft_loss.4} parent=0 // pred_check_branch
    %16 = sbr.rel (0) target = $region5
  $region4: #{enhanced_multi_scale_stft_loss.4} parent=0 // pred_region
    _
  $region5: #{enhanced_multi_scale_stft_loss.4} parent=0 // pred_fallthru
    _
  // Predicated region
  $region6: #{enhanced_multi_scale_stft_loss.4} parent=0 // pred_check
    _
  $region7: #{enhanced_multi_scale_stft_loss.4} parent=0 // pred_check_branch
    %18 = sbr.rel (0) target = $region9
  $region8: #{enhanced_multi_scale_stft_loss.4} parent=0 // pred_region
    _
  $region9: #{enhanced_multi_scale_stft_loss.4} parent=0 // pred_fallthru
    _
  // Predicated region
  $region10: #{enhanced_multi_scale_stft_loss.4} parent=0 // pred_check
    _
  $region11: #{enhanced_multi_scale_stft_loss.4} parent=0 // pred_check_branch
    %20 = sbr.rel (0) target = $region13
  $region12: #{enhanced_multi_scale_stft_loss.4} parent=0 // pred_region
    _
  $region13: #{enhanced_multi_scale_stft_loss.4} parent=0 // pred_fallthru
    _
  // Predicated region
  $region14: #{enhanced_multi_scale_stft_loss.4} parent=0 // pred_check
    _
  $region15: #{enhanced_multi_scale_stft_loss.4} parent=0 // pred_check_branch
    %22 = sbr.rel (0) target = $region17
  $region16: #{enhanced_multi_scale_stft_loss.4} parent=0 // pred_region
    _
  $region17: #{enhanced_multi_scale_stft_loss.4} parent=0 // pred_fallthru
    _
  // Predicated region
  $region18: #{enhanced_multi_scale_stft_loss.4} parent=0 // pred_check
    _
  $region19: #{enhanced_multi_scale_stft_loss.4} parent=0 // pred_check_branch
    %24 = sbr.rel (0) target = $region21
  $region20: #{enhanced_multi_scale_stft_loss.4} parent=0 // pred_region
    _
  $region21: #{enhanced_multi_scale_stft_loss.4} parent=0 // pred_fallthru
    _
  %p25 = scmp.eq.s32.totalorder 0, 0
  // Predicated region
  $region22: #{enhanced_multi_scale_stft_loss.4} parent=0 // pred_check
    %p26 = pneg %p25
  $region23: #{enhanced_multi_scale_stft_loss.4} parent=0 // pred_check_branch
    %28 = sbr.rel (%p26) target = $region25
  $region24: #{enhanced_multi_scale_stft_loss.4} parent=0 // pred_region
    %29 = vst [vmem:[%s5] sm:$0xff] 0.0
    %30 = vst [vmem:[%s6] sm:$0xff] 0.0
    %31 = vst [vmem:[%s7] sm:$0xff] 0.0
    %32 = vst [vmem:[%s8] sm:$0xff] 0.0
    %33 = vst [vmem:[%s9] sm:$0xff] 0.0
  $region25: #{enhanced_multi_scale_stft_loss.4} parent=0 // pred_fallthru
    _
  %v34 = vld [vmem:[%s0] sm:$0xff]
  %v35 = vld [vmem:[%s0 + $0x8] sm:$0xff]
  %v36 = vld [vmem:[%s0 + $0x10] sm:$0xff]
  %v37 = vld [vmem:[%s1] sm:$0xff]
  %v38 = vld [vmem:[%s1 + $0x8] sm:$0xff]
  %v39 = vld [vmem:[%s1 + $0x10] sm:$0xff]
  %v40 = vld [vmem:[%s2] sm:$0xff]
  %v41 = vld [vmem:[%s2 + $0x8] sm:$0xff]
  %v42 = vld [vmem:[%s2 + $0x10] sm:$0xff]
  %v43 = vld [vmem:[%s2 + $0x18] sm:$0xff]
  %v44 = vld [vmem:[%s2 + $0x20] sm:$0xff]
  %v45 = vld [vmem:[%s2 + $0x28] sm:$0xff]
  %v46 = vld [vmem:[%s2 + $0x30] sm:$0xff]
  %v47 = vld [vmem:[%s2 + $0x38] sm:$0xff]
  %v48 = vld [vmem:[%s2 + $0x40] sm:$0xff]
  %v49 = vld [vmem:[%s2 + $0x48] sm:$0xff]
  %v50 = vld [vmem:[%s2 + $0x50] sm:$0xff]
  %v51 = vld [vmem:[%s2 + $0x58] sm:$0xff]
  %v52 = vld [vmem:[%s2 + $0x60] sm:$0xff]
  %v53 = vld [vmem:[%s2 + $0x68] sm:$0xff]
  %v54 = vld [vmem:[%s2 + $0x70] sm:$0xff]
  %v55 = vld [vmem:[%s2 + $0x78] sm:$0xff]
  %v56 = vld [vmem:[%s3] sm:$0xff]
  %v57 = vld [vmem:[%s3 + $0x8] sm:$0xff]
  %v58 = vld [vmem:[%s3 + $0x10] sm:$0xff]
  %v59 = vld [vmem:[%s3 + $0x18] sm:$0xff]
  %v60 = vld [vmem:[%s3 + $0x20] sm:$0xff]
  %v61 = vld [vmem:[%s3 + $0x28] sm:$0xff]
  %v62 = vld [vmem:[%s3 + $0x30] sm:$0xff]
  %v63 = vld [vmem:[%s3 + $0x38] sm:$0xff]
  %v64 = vld [vmem:[%s3 + $0x40] sm:$0xff]
  %v65 = vld [vmem:[%s3 + $0x48] sm:$0xff]
  %v66 = vld [vmem:[%s3 + $0x50] sm:$0xff]
  %v67 = vld [vmem:[%s3 + $0x58] sm:$0xff]
  %v68 = vld [vmem:[%s3 + $0x60] sm:$0xff]
  %v69 = vld [vmem:[%s3 + $0x68] sm:$0xff]
  %v70 = vld [vmem:[%s3 + $0x70] sm:$0xff]
  %v71 = vld [vmem:[%s3 + $0x78] sm:$0xff]
  %v72 = vld [vmem:[%s4] sm:$0x1]
  %73 = vmatprep.subr.mxu0 0.0
  %74 = vmatpush1.msra.mxu0 %v55
  %75 = vmatprep.subr.mxu0 0.0
  %76 = vmatpush1.msra.mxu0 %v54
  %77 = vmatprep.subr.mxu0 0.0
  %78 = vmatpush1.msra.mxu0 %v53
  %79 = vmatprep.subr.mxu0 0.0
  %80 = vmatpush1.msra.mxu0 %v52
  %81 = vmatprep.subr.mxu0 0.0
  %82 = vmatpush1.msra.mxu0 %v51
  %83 = vmatprep.subr.mxu0 0.0
  %84 = vmatpush1.msra.mxu0 %v50
  %85 = vmatprep.subr.mxu0 0.0
  %86 = vmatpush1.msra.mxu0 %v49
  %87 = vmatprep.subr.mxu0 0.0
  %88 = vmatpush1.msra.mxu0 %v48
  %89 = vmatprep.subr.mxu0 0.0
  %90 = vmatpush1.msra.mxu0 %v47
  %91 = vmatprep.subr.mxu0 0.0
  %92 = vmatpush1.msra.mxu0 %v46
  %93 = vmatprep.subr.mxu0 0.0
  %94 = vmatpush1.msra.mxu0 %v45
  %95 = vmatprep.subr.mxu0 0.0
  %96 = vmatpush1.msra.mxu0 %v44
  %97 = vmatprep.subr.mxu0 0.0
  %98 = vmatpush1.msra.mxu0 %v43
  %99 = vmatprep.subr.mxu0 0.0
  %100 = vmatpush1.msra.mxu0 %v42
  %101 = vmatprep.subr.mxu0 0.0
  %102 = vmatpush1.msra.mxu0 %v41
  %103 = vmatprep.subr.mxu0 0.0
  %104 = vmatpush1.msra.mxu0 %v40
  %105 = vmatprep.subr.mxu0 0.0
  %106 = vmatpush2.msra.mxu0 0.0
  %107 = vmatprep.subr.mxu0 0.0
  %108 = vmatpush2.msra.mxu0 0.0
  %109 = vmatprep.subr.mxu0 0.0
  %110 = vmatpush2.msra.mxu0 0.0
  %111 = vmatprep.subr.mxu0 0.0
  %112 = vmatpush2.msra.mxu0 0.0
  %113 = vmatprep.subr.mxu0 0.0
  %114 = vmatpush2.msra.mxu0 0.0
  %115 = vmatprep.subr.mxu0 0.0
  %116 = vmatpush2.msra.mxu0 0.0
  %117 = vmatprep.subr.mxu0 0.0
  %118 = vmatpush2.msra.mxu0 0.0
  %119 = vmatprep.subr.mxu0 0.0
  %120 = vmatpush2.msra.mxu0 0.0
  %121 = vmatprep.subr.mxu0 0.0
  %122 = vmatpush2.msra.mxu0 0.0
  %123 = vmatprep.subr.mxu0 0.0
  %124 = vmatpush2.msra.mxu0 0.0
  %125 = vmatprep.subr.mxu0 0.0
  %126 = vmatpush2.msra.mxu0 0.0
  %127 = vmatprep.subr.mxu0 0.0
  %128 = vmatpush2.msra.mxu0 0.0
  %129 = vmatprep.subr.mxu0 0.0
  %130 = vmatpush2.msra.mxu0 0.0
  %131 = vmatprep.subr.mxu0 0.0
  %132 = vmatpush2.msra.mxu0 0.0
  %133 = vmatprep.subr.mxu0 0.0
  %134 = vmatpush2.msra.mxu0 0.0
  %135 = vmatprep.subr.mxu0 0.0
  %136 = vmatpush2.msra.mxu0 0.0
  %137 = vmatprep.mubr.f32.mxu0 0.0
  %138 = vmatmul.mubr.f32.gmra.mxu0 %v34
  %v139 = vpop.f32.mrf.mxu0
  %v140 = vadd.f32 0.0, %v139
  %v141 = vpop.f32.mrf.mxu0
  %142 = vmatprep.mubr.f32.mxu0 0.0
  %143 = vmatmul.mubr.f32.gmra.mxu0 %v35
  %v144 = vpop.f32.mrf.mxu0
  %v145 = vadd.f32 0.0, %v144
  %v146 = vpop.f32.mrf.mxu0
  %147 = vmatprep.mubr.f32.mxu0 0.0
  %148 = vmatmul.mubr.f32.gmra.mxu0 %v36
  %v149 = vpop.f32.mrf.mxu0
  %v150 = vadd.f32 0.0, %v149
  %v151 = vpop.f32.mrf.mxu0
  %152 = vdwg.mxu0
  %153 = vmatprep.subr.mxu0 0.0
  %154 = vmatpush1.msra.mxu0 %v71
  %155 = vmatprep.subr.mxu0 0.0
  %156 = vmatpush1.msra.mxu0 %v70
  %157 = vmatprep.subr.mxu0 0.0
  %158 = vmatpush1.msra.mxu0 %v69
  %159 = vmatprep.subr.mxu0 0.0
  %160 = vmatpush1.msra.mxu0 %v68
  %161 = vmatprep.subr.mxu0 0.0
  %162 = vmatpush1.msra.mxu0 %v67
  %163 = vmatprep.subr.mxu0 0.0
  %164 = vmatpush1.msra.mxu0 %v66
  %165 = vmatprep.subr.mxu0 0.0
  %166 = vmatpush1.msra.mxu0 %v65
  %167 = vmatprep.subr.mxu0 0.0
  %168 = vmatpush1.msra.mxu0 %v64
  %169 = vmatprep.subr.mxu0 0.0
  %170 = vmatpush1.msra.mxu0 %v63
  %171 = vmatprep.subr.mxu0 0.0
  %172 = vmatpush1.msra.mxu0 %v62
  %173 = vmatprep.subr.mxu0 0.0
  %174 = vmatpush1.msra.mxu0 %v61
  %175 = vmatprep.subr.mxu0 0.0
  %176 = vmatpush1.msra.mxu0 %v60
  %177 = vmatprep.subr.mxu0 0.0
  %178 = vmatpush1.msra.mxu0 %v59
  %179 = vmatprep.subr.mxu0 0.0
  %180 = vmatpush1.msra.mxu0 %v58
  %181 = vmatprep.subr.mxu0 0.0
  %182 = vmatpush1.msra.mxu0 %v57
  %183 = vmatprep.subr.mxu0 0.0
  %184 = vmatpush1.msra.mxu0 %v56
  %185 = vmatprep.subr.mxu0 0.0
  %186 = vmatpush2.msra.mxu0 0.0
  %187 = vmatprep.subr.mxu0 0.0
  %188 = vmatpush2.msra.mxu0 0.0
  %189 = vmatprep.subr.mxu0 0.0
  %190 = vmatpush2.msra.mxu0 0.0
  %191 = vmatprep.subr.mxu0 0.0
  %192 = vmatpush2.msra.mxu0 0.0
  %193 = vmatprep.subr.mxu0 0.0
  %194 = vmatpush2.msra.mxu0 0.0
  %195 = vmatprep.subr.mxu0 0.0
  %196 = vmatpush2.msra.mxu0 0.0
  %197 = vmatprep.subr.mxu0 0.0
  %198 = vmatpush2.msra.mxu0 0.0
  %199 = vmatprep.subr.mxu0 0.0
  %200 = vmatpush2.msra.mxu0 0.0
  %201 = vmatprep.subr.mxu0 0.0
  %202 = vmatpush2.msra.mxu0 0.0
  %203 = vmatprep.subr.mxu0 0.0
  %204 = vmatpush2.msra.mxu0 0.0
  %205 = vmatprep.subr.mxu0 0.0
  %206 = vmatpush2.msra.mxu0 0.0
  %207 = vmatprep.subr.mxu0 0.0
  %208 = vmatpush2.msra.mxu0 0.0
  %209 = vmatprep.subr.mxu0 0.0
  %210 = vmatpush2.msra.mxu0 0.0
  %211 = vmatprep.subr.mxu0 0.0
  %212 = vmatpush2.msra.mxu0 0.0
  %213 = vmatprep.subr.mxu0 0.0
  %214 = vmatpush2.msra.mxu0 0.0
  %215 = vmatprep.subr.mxu0 0.0
  %216 = vmatpush2.msra.mxu0 0.0
  %217 = vmatprep.mubr.f32.mxu0 0.0
  %218 = vmatmul.mubr.f32.gmra.mxu0 %v34
  %v219 = vpop.f32.mrf.mxu0
  %v220 = vadd.f32 0.0, %v219
  %v221 = vpop.f32.mrf.mxu0
  %222 = vmatprep.mubr.f32.mxu0 0.0
  %223 = vmatmul.mubr.f32.gmra.mxu0 %v35
  %v224 = vpop.f32.mrf.mxu0
  %v225 = vadd.f32 0.0, %v224
  %v226 = vpop.f32.mrf.mxu0
  %227 = vmatprep.mubr.f32.mxu0 0.0
  %228 = vmatmul.mubr.f32.gmra.mxu0 %v36
  %v229 = vpop.f32.mrf.mxu0
  %v230 = vadd.f32 0.0, %v229
  %v231 = vpop.f32.mrf.mxu0
  %232 = vdwg.mxu0
  %233 = vmatprep.subr.mxu0 0.0
  %234 = vmatpush1.msra.mxu0 %v55
  %235 = vmatprep.subr.mxu0 0.0
  %236 = vmatpush1.msra.mxu0 %v54
  %237 = vmatprep.subr.mxu0 0.0
  %238 = vmatpush1.msra.mxu0 %v53
  %239 = vmatprep.subr.mxu0 0.0
  %240 = vmatpush1.msra.mxu0 %v52
  %241 = vmatprep.subr.mxu0 0.0
  %242 = vmatpush1.msra.mxu0 %v51
  %243 = vmatprep.subr.mxu0 0.0
  %244 = vmatpush1.msra.mxu0 %v50
  %245 = vmatprep.subr.mxu0 0.0
  %246 = vmatpush1.msra.mxu0 %v49
  %247 = vmatprep.subr.mxu0 0.0
  %248 = vmatpush1.msra.mxu0 %v48
  %249 = vmatprep.subr.mxu0 0.0
  %250 = vmatpush1.msra.mxu0 %v47
  %251 = vmatprep.subr.mxu0 0.0
  %252 = vmatpush1.msra.mxu0 %v46
  %253 = vmatprep.subr.mxu0 0.0
  %254 = vmatpush1.msra.mxu0 %v45
  %255 = vmatprep.subr.mxu0 0.0
  %256 = vmatpush1.msra.mxu0 %v44
  %257 = vmatprep.subr.mxu0 0.0
  %258 = vmatpush1.msra.mxu0 %v43
  %259 = vmatprep.subr.mxu0 0.0
  %260 = vmatpush1.msra.mxu0 %v42
  %261 = vmatprep.subr.mxu0 0.0
  %262 = vmatpush1.msra.mxu0 %v41
  %263 = vmatprep.subr.mxu0 0.0
  %264 = vmatpush1.msra.mxu0 %v40
  %265 = vmatprep.subr.mxu0 0.0
  %266 = vmatpush2.msra.mxu0 0.0
  %267 = vmatprep.subr.mxu0 0.0
  %268 = vmatpush2.msra.mxu0 0.0
  %269 = vmatprep.subr.mxu0 0.0
  %270 = vmatpush2.msra.mxu0 0.0
  %271 = vmatprep.subr.mxu0 0.0
  %272 = vmatpush2.msra.mxu0 0.0
  %273 = vmatprep.subr.mxu0 0.0
  %274 = vmatpush2.msra.mxu0 0.0
  %275 = vmatprep.subr.mxu0 0.0
  %276 = vmatpush2.msra.mxu0 0.0
  %277 = vmatprep.subr.mxu0 0.0
  %278 = vmatpush2.msra.mxu0 0.0
  %279 = vmatprep.subr.mxu0 0.0
  %280 = vmatpush2.msra.mxu0 0.0
  %281 = vmatprep.subr.mxu0 0.0
  %282 = vmatpush2.msra.mxu0 0.0
  %283 = vmatprep.subr.mxu0 0.0
  %284 = vmatpush2.msra.mxu0 0.0
  %285 = vmatprep.subr.mxu0 0.0
  %286 = vmatpush2.msra.mxu0 0.0
  %287 = vmatprep.subr.mxu0 0.0
  %288 = vmatpush2.msra.mxu0 0.0
  %289 = vmatprep.subr.mxu0 0.0
  %290 = vmatpush2.msra.mxu0 0.0
  %291 = vmatprep.subr.mxu0 0.0
  %292 = vmatpush2.msra.mxu0 0.0
  %293 = vmatprep.subr.mxu0 0.0
  %294 = vmatpush2.msra.mxu0 0.0
  %295 = vmatprep.subr.mxu0 0.0
  %296 = vmatpush2.msra.mxu0 0.0
  %297 = vmatprep.mubr.f32.mxu0 0.0
  %298 = vmatmul.mubr.f32.gmra.mxu0 %v37
  %v299 = vpop.f32.mrf.mxu0
  %v300 = vadd.f32 0.0, %v299
  %v301 = vpop.f32.mrf.mxu0
  %302 = vmatprep.mubr.f32.mxu0 0.0
  %303 = vmatmul.mubr.f32.gmra.mxu0 %v38
  %v304 = vpop.f32.mrf.mxu0
  %v305 = vadd.f32 0.0, %v304
  %v306 = vpop.f32.mrf.mxu0
  %307 = vmatprep.mubr.f32.mxu0 0.0
  %308 = vmatmul.mubr.f32.gmra.mxu0 %v39
  %v309 = vpop.f32.mrf.mxu0
  %v310 = vadd.f32 0.0, %v309
  %v311 = vpop.f32.mrf.mxu0
  %312 = vdwg.mxu0
  %313 = vmatprep.subr.mxu0 0.0
  %314 = vmatpush1.msra.mxu0 %v71
  %315 = vmatprep.subr.mxu0 0.0
  %316 = vmatpush1.msra.mxu0 %v70
  %317 = vmatprep.subr.mxu0 0.0
  %318 = vmatpush1.msra.mxu0 %v69
  %319 = vmatprep.subr.mxu0 0.0
  %320 = vmatpush1.msra.mxu0 %v68
  %321 = vmatprep.subr.mxu0 0.0
  %322 = vmatpush1.msra.mxu0 %v67
  %323 = vmatprep.subr.mxu0 0.0
  %324 = vmatpush1.msra.mxu0 %v66
  %325 = vmatprep.subr.mxu0 0.0
  %326 = vmatpush1.msra.mxu0 %v65
  %327 = vmatprep.subr.mxu0 0.0
  %328 = vmatpush1.msra.mxu0 %v64
  %329 = vmatprep.subr.mxu0 0.0
  %330 = vmatpush1.msra.mxu0 %v63
  %331 = vmatprep.subr.mxu0 0.0
  %332 = vmatpush1.msra.mxu0 %v62
  %333 = vmatprep.subr.mxu0 0.0
  %334 = vmatpush1.msra.mxu0 %v61
  %335 = vmatprep.subr.mxu0 0.0
  %336 = vmatpush1.msra.mxu0 %v60
  %337 = vmatprep.subr.mxu0 0.0
  %338 = vmatpush1.msra.mxu0 %v59
  %339 = vmatprep.subr.mxu0 0.0
  %340 = vmatpush1.msra.mxu0 %v58
  %341 = vmatprep.subr.mxu0 0.0
  %342 = vmatpush1.msra.mxu0 %v57
  %343 = vmatprep.subr.mxu0 0.0
  %344 = vmatpush1.msra.mxu0 %v56
  %345 = vmatprep.subr.mxu0 0.0
  %346 = vmatpush2.msra.mxu0 0.0
  %347 = vmatprep.subr.mxu0 0.0
  %348 = vmatpush2.msra.mxu0 0.0
  %349 = vmatprep.subr.mxu0 0.0
  %350 = vmatpush2.msra.mxu0 0.0
  %351 = vmatprep.subr.mxu0 0.0
  %352 = vmatpush2.msra.mxu0 0.0
  %353 = vmatprep.subr.mxu0 0.0
  %354 = vmatpush2.msra.mxu0 0.0
  %355 = vmatprep.subr.mxu0 0.0
  %356 = vmatpush2.msra.mxu0 0.0
  %357 = vmatprep.subr.mxu0 0.0
  %358 = vmatpush2.msra.mxu0 0.0
  %359 = vmatprep.subr.mxu0 0.0
  %360 = vmatpush2.msra.mxu0 0.0
  %361 = vmatprep.subr.mxu0 0.0
  %362 = vmatpush2.msra.mxu0 0.0
  %363 = vmatprep.subr.mxu0 0.0
  %364 = vmatpush2.msra.mxu0 0.0
  %365 = vmatprep.subr.mxu0 0.0
  %366 = vmatpush2.msra.mxu0 0.0
  %367 = vmatprep.subr.mxu0 0.0
  %368 = vmatpush2.msra.mxu0 0.0
  %369 = vmatprep.subr.mxu0 0.0
  %370 = vmatpush2.msra.mxu0 0.0
  %371 = vmatprep.subr.mxu0 0.0
  %372 = vmatpush2.msra.mxu0 0.0
  %373 = vmatprep.subr.mxu0 0.0
  %374 = vmatpush2.msra.mxu0 0.0
  %375 = vmatprep.subr.mxu0 0.0
  %376 = vmatpush2.msra.mxu0 0.0
  %377 = vmatprep.mubr.f32.mxu0 0.0
  %378 = vmatmul.mubr.f32.gmra.mxu0 %v37
  %v379 = vpop.f32.mrf.mxu0
  %v380 = vadd.f32 0.0, %v379
  %v381 = vpop.f32.mrf.mxu0
  %382 = vmatprep.mubr.f32.mxu0 0.0
  %383 = vmatmul.mubr.f32.gmra.mxu0 %v38
  %v384 = vpop.f32.mrf.mxu0
  %v385 = vadd.f32 0.0, %v384
  %v386 = vpop.f32.mrf.mxu0
  %387 = vmatprep.mubr.f32.mxu0 0.0
  %388 = vmatmul.mubr.f32.gmra.mxu0 %v39
  %v389 = vpop.f32.mrf.mxu0
  %v390 = vadd.f32 0.0, %v389
  %v391 = vpop.f32.mrf.mxu0
  %392 = vdwg.mxu0
  %v393 = vmul.f32 %v140, %v140
  %v394 = vmul.f32 %v145, %v145
  %v395 = vmul.f32 %v150, %v150
  %v396 = vmul.f32 %v220, %v220
  %v397 = vmul.f32 %v225, %v225
  %v398 = vmul.f32 %v230, %v230
  %v399 = vadd.f32 %v393, %v396
  %v400 = vadd.f32 %v394, %v397
  %v401 = vadd.f32 %v395, %v398
  %v402 = vrsqrt.pop %v399
  %v403 = vmul.f32 %v399, %v402
  %vm404 = vcmp.eq.f32.partialorder %v399, inf
  %v405 = vsel %vm404, %v399, %v403
  %vm406 = vcmp.eq.f32.partialorder %v399, 0.0
  %v407 = vand.u32 %v399, 2147483648
  %v408 = vsel %vm406, %v407, %v405
  %v409 = vrsqrt.pop %v400
  %v410 = vmul.f32 %v400, %v409
  %vm411 = vcmp.eq.f32.partialorder %v400, inf
  %v412 = vsel %vm411, %v400, %v410
  %vm413 = vcmp.eq.f32.partialorder %v400, 0.0
  %v414 = vand.u32 %v400, 2147483648
  %v415 = vsel %vm413, %v414, %v412
  %v416 = vrsqrt.pop %v401
  %v417 = vmul.f32 %v401, %v416
  %vm418 = vcmp.eq.f32.partialorder %v401, inf
  %v419 = vsel %vm418, %v401, %v417
  %vm420 = vcmp.eq.f32.partialorder %v401, 0.0
  %v421 = vand.u32 %v401, 2147483648
  %v422 = vsel %vm420, %v421, %v419
  %v423 = vmul.f32 %v300, %v300
  %v424 = vmul.f32 %v305, %v305
  %v425 = vmul.f32 %v310, %v310
  %v426 = vmul.f32 %v380, %v380
  %v427 = vmul.f32 %v385, %v385
  %v428 = vmul.f32 %v390, %v390
  %v429 = vadd.f32 %v423, %v426
  %v430 = vadd.f32 %v424, %v427
  %v431 = vadd.f32 %v425, %v428
  %v432 = vrsqrt.pop %v429
  %v433 = vmul.f32 %v429, %v432
  %vm434 = vcmp.eq.f32.partialorder %v429, inf
  %v435 = vsel %vm434, %v429, %v433
  %vm436 = vcmp.eq.f32.partialorder %v429, 0.0
  %v437 = vand.u32 %v429, 2147483648
  %v438 = vsel %vm436, %v437, %v435
  %v439 = vrsqrt.pop %v430
  %v440 = vmul.f32 %v430, %v439
  %vm441 = vcmp.eq.f32.partialorder %v430, inf
  %v442 = vsel %vm441, %v430, %v440
  %vm443 = vcmp.eq.f32.partialorder %v430, 0.0
  %v444 = vand.u32 %v430, 2147483648
  %v445 = vsel %vm443, %v444, %v442
  %v446 = vrsqrt.pop %v431
  %v447 = vmul.f32 %v431, %v446
  %vm448 = vcmp.eq.f32.partialorder %v431, inf
  %v449 = vsel %vm448, %v431, %v447
  %vm450 = vcmp.eq.f32.partialorder %v431, 0.0
  %v451 = vand.u32 %v431, 2147483648
  %v452 = vsel %vm450, %v451, %v449
  %v453 = vsub.f32 %v408, %v438
  %v454 = vsub.f32 %v415, %v445
  %v455 = vsub.f32 %v422, %v452
  %v456 = vand.u32 2147483647, %v453
  %v457 = vand.u32 2147483647, %v454
  %v458 = vand.u32 2147483647, %v455
  %v459 = vadd.f32 %v408, 1e-05
  %v460 = vadd.f32 %v415, 1e-05
  %v461 = vadd.f32 %v422, 1e-05
  %v462 = vadd.f32 %v438, 1e-05
  %v463 = vadd.f32 %v445, 1e-05
  %v464 = vadd.f32 %v452, 1e-05
  %v465 = vrcp.pop %v462
  %v466 = vmul.f32 %v459, %v465
  %v467 = vrcp.pop %v463
  %v468 = vmul.f32 %v460, %v467
  %v469 = vrcp.pop %v464
  %v470 = vmul.f32 %v461, %v469
  %v471 = vlog2.pop %v466
  %v472 = vmul.f32 %v471, 0.6931472
  %v473 = vlog2.pop %v468
  %v474 = vmul.f32 %v473, 0.6931472
  %v475 = vlog2.pop %v470
  %v476 = vmul.f32 %v475, 0.6931472
  %v477 = vand.u32 2147483647, %v472
  %v478 = vand.u32 2147483647, %v474
  %v479 = vand.u32 2147483647, %v476
  %v480 = vsub.f32 %v140, %v300
  %v481 = vsub.f32 %v145, %v305
  %v482 = vsub.f32 %v150, %v310
  %v483 = vand.u32 2147483647, %v480
  %v484 = vand.u32 2147483647, %v481
  %v485 = vand.u32 2147483647, %v482
  %v486 = vsub.f32 %v220, %v380
  %v487 = vsub.f32 %v225, %v385
  %v488 = vsub.f32 %v230, %v390
  %v489 = vand.u32 2147483647, %v486
  %v490 = vand.u32 2147483647, %v487
  %v491 = vand.u32 2147483647, %v488
  %v492 = vadd.f32 %v483, %v489
  %v493 = vadd.f32 %v484, %v490
  %v494 = vadd.f32 %v485, %v491
  %v495 = vld [vmem:[%s5] sm:$0xff]
  %v496 = vadd.f32 %v477, %v478
  %v497 = vadd.f32 %v496, %v479
  %498 = vadd.xlane.f32.xlu0 %v497
  %v499 = vpop.xlane.xlu0 %498
  %v500 = vrot.slane %v499, 4
  %v501 = vadd.f32 %v499, %v500
  %v502 = vrot.slane %v501, 2
  %v503 = vadd.f32 %v501, %v502
  %v504 = vrot.slane %v503, 1
  %v505 = vadd.f32 %v503, %v504
  %s506 = vtos %v505
  %v507 = vstv %s506
  %v508 = vadd.f32 %v495, %v507
  %509 = vst [vmem:[%s5] sm:$0xff] %v508
  %v510 = vld [vmem:[%s6] sm:$0xff]
  %v511 = vmul.f32 %v453, %v453
  %v512 = vmul.f32 %v454, %v454
  %v513 = vmul.f32 %v455, %v455
  %v514 = vadd.f32 %v511, %v512
  %v515 = vadd.f32 %v514, %v513
  %516 = vadd.xlane.f32.xlu0 %v515
  %v517 = vpop.xlane.xlu0 %516
  %v518 = vrot.slane %v517, 4
  %v519 = vadd.f32 %v517, %v518
  %v520 = vrot.slane %v519, 2
  %v521 = vadd.f32 %v519, %v520
  %v522 = vrot.slane %v521, 1
  %v523 = vadd.f32 %v521, %v522
  %s524 = vtos %v523
  %v525 = vstv %s524
  %v526 = vadd.f32 %v510, %v525
  %527 = vst [vmem:[%s6] sm:$0xff] %v526
  %v528 = vld [vmem:[%s7] sm:$0xff]
  %v529 = vadd.f32 %v492, %v493
  %v530 = vadd.f32 %v529, %v494
  %531 = vadd.xlane.f32.xlu0 %v530
  %v532 = vpop.xlane.xlu0 %531
  %v533 = vrot.slane %v532, 4
  %v534 = vadd.f32 %v532, %v533
  %v535 = vrot.slane %v534, 2
  %v536 = vadd.f32 %v534, %v535
  %v537 = vrot.slane %v536, 1
  %v538 = vadd.f32 %v536, %v537
  %s539 = vtos %v538
  %v540 = vstv %s539
  %v541 = vadd.f32 %v528, %v540
  %542 = vst [vmem:[%s7] sm:$0xff] %v541
  %v543 = vld [vmem:[%s8] sm:$0xff]
  %v545 = vlaneseq
  %v546 = vshrl.u32 %v545, 7
  %v547 = vsub.s32 0, %v546
  %v548 = vrot.slane %v72, %v547
  %v550 = vmul.f32 %v456, %v548
  %v551 = vmul.f32 %v457, %v548
  %v552 = vmul.f32 %v458, %v548
  %v553 = vadd.f32 %v550, %v551
  %v554 = vadd.f32 %v553, %v552
  %555 = vadd.xlane.f32.xlu0 %v554
  %v556 = vpop.xlane.xlu0 %555
  %v557 = vrot.slane %v556, 4
  %v558 = vadd.f32 %v556, %v557
  %v559 = vrot.slane %v558, 2
  %v560 = vadd.f32 %v558, %v559
  %v561 = vrot.slane %v560, 1
  %v562 = vadd.f32 %v560, %v561
  %s563 = vtos %v562
  %v564 = vstv %s563
  %v565 = vadd.f32 %v543, %v564
  %566 = vst [vmem:[%s8] sm:$0xff] %v565
  %v567 = vld [vmem:[%s9] sm:$0xff]
  %v568 = vmul.f32 %v438, %v438
  %v569 = vmul.f32 %v445, %v445
  %v570 = vmul.f32 %v452, %v452
  %v571 = vadd.f32 %v568, %v569
  %v572 = vadd.f32 %v571, %v570
  %573 = vadd.xlane.f32.xlu0 %v572
  %v574 = vpop.xlane.xlu0 %573
  %v575 = vrot.slane %v574, 4
  %v576 = vadd.f32 %v574, %v575
  %v577 = vrot.slane %v576, 2
  %v578 = vadd.f32 %v576, %v577
  %v579 = vrot.slane %v578, 1
  %v580 = vadd.f32 %v578, %v579
  %s581 = vtos %v580
  %v582 = vstv %s581
  %v583 = vadd.f32 %v567, %v582
  %584 = vst [vmem:[%s9] sm:$0xff] %v583
  // Predicated region
  $region26: #{enhanced_multi_scale_stft_loss.4} parent=0 // pred_check
    _
  $region27: #{enhanced_multi_scale_stft_loss.4} parent=0 // pred_check_branch
    %586 = sbr.rel (0) target = $region29
  $region28: #{enhanced_multi_scale_stft_loss.4} parent=0 // pred_region
    _
  $region29: #{enhanced_multi_scale_stft_loss.4} parent=0 // pred_fallthru
    _
  // Predicated region
  $region30: #{enhanced_multi_scale_stft_loss.4} parent=0 // pred_check
    _
  $region31: #{enhanced_multi_scale_stft_loss.4} parent=0 // pred_check_branch
    %588 = sbr.rel (0) target = $region33
  $region32: #{enhanced_multi_scale_stft_loss.4} parent=0 // pred_region
    _
  $region33: #{enhanced_multi_scale_stft_loss.4} parent=0 // pred_fallthru
    _
  // Predicated region
  $region34: #{enhanced_multi_scale_stft_loss.4} parent=0 // pred_check
    _
  $region35: #{enhanced_multi_scale_stft_loss.4} parent=0 // pred_check_branch
    %590 = sbr.rel (0) target = $region37
  $region36: #{enhanced_multi_scale_stft_loss.4} parent=0 // pred_region
    _
  $region37: #{enhanced_multi_scale_stft_loss.4} parent=0 // pred_fallthru
    _
  // Predicated region
  $region38: #{enhanced_multi_scale_stft_loss.4} parent=0 // pred_check
    _
  $region39: #{enhanced_multi_scale_stft_loss.4} parent=0 // pred_check_branch
    %592 = sbr.rel (0) target = $region41
  $region40: #{enhanced_multi_scale_stft_loss.4} parent=0 // pred_region
    _
  $region41: #{enhanced_multi_scale_stft_loss.4} parent=0 // pred_fallthru
    _
  // Predicated region
  $region42: #{enhanced_multi_scale_stft_loss.4} parent=0 // pred_check
    _
  $region43: #{enhanced_multi_scale_stft_loss.4} parent=0 // pred_check_branch
    %594 = sbr.rel (0) target = $region45
  $region44: #{enhanced_multi_scale_stft_loss.4} parent=0 // pred_region
    _
  $region45: #{enhanced_multi_scale_stft_loss.4} parent=0 // pred_fallthru
    _
  // Predicated region
  $region46: #{enhanced_multi_scale_stft_loss.4} parent=0 // pred_check
    _
  $region47: #{enhanced_multi_scale_stft_loss.4} parent=0 // pred_check_branch
    %596 = sbr.rel (0) target = $region49
  $region48: #{enhanced_multi_scale_stft_loss.4} parent=0 // pred_region
    _
  $region49: #{enhanced_multi_scale_stft_loss.4} parent=0 // pred_fallthru
    _
  // Predicated region
  $region50: #{enhanced_multi_scale_stft_loss.4} parent=0 // pred_check
    _
  $region51: #{enhanced_multi_scale_stft_loss.4} parent=0 // pred_check_branch
    %598 = sbr.rel (0) target = $region53
  $region52: #{enhanced_multi_scale_stft_loss.4} parent=0 // pred_region
    _
  $region53: #{enhanced_multi_scale_stft_loss.4} parent=0 // pred_fallthru
    _
  // Predicated region
  $region54: #{enhanced_multi_scale_stft_loss.4} parent=0 // pred_check
    _
  $region55: #{enhanced_multi_scale_stft_loss.4} parent=0 // pred_check_branch
    %600 = sbr.rel (0) target = $region57
  $region56: #{enhanced_multi_scale_stft_loss.4} parent=0 // pred_region
    _
  $region57: #{enhanced_multi_scale_stft_loss.4} parent=0 // pred_fallthru
    _
  // Predicated region
  $region58: #{enhanced_multi_scale_stft_loss.4} parent=0 // pred_check
    _
  $region59: #{enhanced_multi_scale_stft_loss.4} parent=0 // pred_check_branch
    %602 = sbr.rel (0) target = $region61
  $region60: #{enhanced_multi_scale_stft_loss.4} parent=0 // pred_region
    _
  $region61: #{enhanced_multi_scale_stft_loss.4} parent=0 // pred_fallthru
    _
  // Predicated region
  $region62: #{enhanced_multi_scale_stft_loss.4} parent=0 // pred_check
    _
  $region63: #{enhanced_multi_scale_stft_loss.4} parent=0 // pred_check_branch
    %604 = sbr.rel (0) target = $region65
  $region64: #{enhanced_multi_scale_stft_loss.4} parent=0 // pred_region
    _
  $region65: #{enhanced_multi_scale_stft_loss.4} parent=0 // pred_fallthru
    _

// kernel: enhanced_multi_scale_stft_loss.5
$region0: #{enhanced_multi_scale_stft_loss.5}
  #allocation0 [shape = 'u32[]', space=smem, size = 0x4, offset = 0x4, fixed_abs, tag = 'smem constant byte address 0x4 - core index']
  #allocation1 [shape = 'u32[144,128]{1,0:T(1,128)}', space=vmem, size = 0x12000, scoped, tag = 'internal scratch']
  %s0 = inlined_call_operand.vmem [shape: f32[16,256], index: 0, kind: input, shape index: {}]
  %s1 = inlined_call_operand.vmem [shape: f32[16,256], index: 1, kind: input, shape index: {}]
  %s2 = inlined_call_operand.vmem [shape: f32[256,256], index: 2, kind: input, shape index: {}]
  %s3 = inlined_call_operand.hbm [shape: f32[256,256], index: 3, kind: input, shape index: {}]
  %s4 = inlined_call_operand.vmem [shape: f32[1,256], index: 4, kind: input, shape index: {}]
  %s5 = inlined_call_operand.vmem [shape: f32[1,8,128], index: 5, kind: output, shape index: {0}]
  %s6 = inlined_call_operand.vmem [shape: f32[1,8,128], index: 6, kind: output, shape index: {1}]
  %s7 = inlined_call_operand.vmem [shape: f32[1,8,128], index: 7, kind: output, shape index: {2}]
  %s8 = inlined_call_operand.vmem [shape: f32[1,8,128], index: 8, kind: output, shape index: {3}]
  %s9 = inlined_call_operand.vmem [shape: f32[1,8,128], index: 9, kind: output, shape index: {4}]
  %10 = xla_tuple %s5, %s6, %s7, %s8, %s9
  %s11 = sld [smem:[#allocation0]]
  $region70: #{enhanced_multi_scale_stft_loss.5} parent=0
    _
  %s13 = ssub.s32 1, %s11
  %s14 = scalar_select 0, %s13, %s11
  $region1: #{enhanced_multi_scale_stft_loss.5} parent=0
    #allocation2 [shape = 'u8[262144]{0}', space=vmem, size = 0x40000, scoped, tag = 'input window, operand 3, single buffered']
    #allocation3 [shape = 's32[1]{0}', space=sflag, size = 0x4, scoped, tag = 'scoped memory for enhanced_multi_scale_stft_loss.5']
    %15 = vsyncpa [#allocation3], 0
    // Predicated region
    $region2: #{enhanced_multi_scale_stft_loss.5} parent=1 // pred_check
      _
    $region3: #{enhanced_multi_scale_stft_loss.5} parent=1 // pred_check_branch
      %17 = sbr.rel (0) target = $region5
    $region4: #{enhanced_multi_scale_stft_loss.5} parent=1 // pred_region
      _
    $region5: #{enhanced_multi_scale_stft_loss.5} parent=1 // pred_fallthru
      _
    // Predicated region
    $region6: #{enhanced_multi_scale_stft_loss.5} parent=1 // pred_check
      _
    $region7: #{enhanced_multi_scale_stft_loss.5} parent=1 // pred_check_branch
      %19 = sbr.rel (0) target = $region9
    $region8: #{enhanced_multi_scale_stft_loss.5} parent=1 // pred_region
      _
    $region9: #{enhanced_multi_scale_stft_loss.5} parent=1 // pred_fallthru
      _
    // Predicated region
    $region10: #{enhanced_multi_scale_stft_loss.5} parent=1 // pred_check
      _
    $region11: #{enhanced_multi_scale_stft_loss.5} parent=1 // pred_check_branch
      %21 = sbr.rel (0) target = $region13
    $region12: #{enhanced_multi_scale_stft_loss.5} parent=1 // pred_region
      _
    $region13: #{enhanced_multi_scale_stft_loss.5} parent=1 // pred_fallthru
      _
    // Predicated region
    $region14: #{enhanced_multi_scale_stft_loss.5} parent=1 // pred_check
      _
    $region15: #{enhanced_multi_scale_stft_loss.5} parent=1 // pred_check_branch
      %23 = sbr.rel (0) target = $region17
    $region16: #{enhanced_multi_scale_stft_loss.5} parent=1 // pred_region
      %s25 = ssub.s32 8192, 8192
      %26 = vsyncadd [#allocation3], %s25
      %s27 = sshll.u32 [#allocation2], 4
      %s28 = int_to_ptr.vmem [resolvable:$true] %s27
      %33 = dma.hbm_to_vmem [thread:$0]  %s3, 8192, %s28, [#allocation3], 256, 256, 16
    $region17: #{enhanced_multi_scale_stft_loss.5} parent=1 // pred_fallthru
      _
    // Predicated region
    $region18: #{enhanced_multi_scale_stft_loss.5} parent=1 // pred_check
      _
    $region19: #{enhanced_multi_scale_stft_loss.5} parent=1 // pred_check_branch
      %35 = sbr.rel (0) target = $region21
    $region20: #{enhanced_multi_scale_stft_loss.5} parent=1 // pred_region
      _
    $region21: #{enhanced_multi_scale_stft_loss.5} parent=1 // pred_fallthru
      _
    // Predicated region
    $region22: #{enhanced_multi_scale_stft_loss.5} parent=1 // pred_check
      _
    $region23: #{enhanced_multi_scale_stft_loss.5} parent=1 // pred_check_branch
      %37 = sbr.rel (0) target = $region25
    $region24: #{enhanced_multi_scale_stft_loss.5} parent=1 // pred_region
      %38 = dma.done [#allocation3], 8192
    $region25: #{enhanced_multi_scale_stft_loss.5} parent=1 // pred_fallthru
      _
    %p39 = scmp.eq.s32.totalorder 0, 0
    // Predicated region
    $region26: #{enhanced_multi_scale_stft_loss.5} parent=1 // pred_check
      %p40 = pneg %p39
    $region27: #{enhanced_multi_scale_stft_loss.5} parent=1 // pred_check_branch
      %42 = sbr.rel (%p40) target = $region29
    $region28: #{enhanced_multi_scale_stft_loss.5} parent=1 // pred_region
      %43 = vst [vmem:[%s5] sm:$0xff] 0.0
      %44 = vst [vmem:[%s6] sm:$0xff] 0.0
      %45 = vst [vmem:[%s7] sm:$0xff] 0.0
      %46 = vst [vmem:[%s8] sm:$0xff] 0.0
      %47 = vst [vmem:[%s9] sm:$0xff] 0.0
    $region29: #{enhanced_multi_scale_stft_loss.5} parent=1 // pred_fallthru
      _
    %v48 = vld [vmem:[%s0] sm:$0xff]
    %v49 = vld [vmem:[%s0 + $0x8] sm:$0xff]
    %v50 = vld [vmem:[%s0 + $0x10] sm:$0xff]
    %v51 = vld [vmem:[%s0 + $0x18] sm:$0xff]
    %v52 = vld [vmem:[%s1] sm:$0xff]
    %v53 = vld [vmem:[%s1 + $0x8] sm:$0xff]
    %v54 = vld [vmem:[%s1 + $0x10] sm:$0xff]
    %v55 = vld [vmem:[%s1 + $0x18] sm:$0xff]
    %v56 = vld [vmem:[%s2] sm:$0xff]
    %v57 = vld [vmem:[%s2 + $0x8] sm:$0xff]
    %v58 = vld [vmem:[%s2 + $0x10] sm:$0xff]
    %v59 = vld [vmem:[%s2 + $0x18] sm:$0xff]
    %v60 = vld [vmem:[%s2 + $0x20] sm:$0xff]
    %v61 = vld [vmem:[%s2 + $0x28] sm:$0xff]
    %v62 = vld [vmem:[%s2 + $0x30] sm:$0xff]
    %v63 = vld [vmem:[%s2 + $0x38] sm:$0xff]
    %v64 = vld [vmem:[%s2 + $0x40] sm:$0xff]
    %v65 = vld [vmem:[%s2 + $0x48] sm:$0xff]
    %v66 = vld [vmem:[%s2 + $0x50] sm:$0xff]
    %v67 = vld [vmem:[%s2 + $0x58] sm:$0xff]
    %v68 = vld [vmem:[%s2 + $0x60] sm:$0xff]
    %v69 = vld [vmem:[%s2 + $0x68] sm:$0xff]
    %v70 = vld [vmem:[%s2 + $0x70] sm:$0xff]
    %v71 = vld [vmem:[%s2 + $0x78] sm:$0xff]
    %v72 = vld [vmem:[%s2 + $0x80] sm:$0xff]
    %v73 = vld [vmem:[%s2 + $0x88] sm:$0xff]
    %v74 = vld [vmem:[%s2 + $0x90] sm:$0xff]
    %v75 = vld [vmem:[%s2 + $0x98] sm:$0xff]
    %v76 = vld [vmem:[%s2 + $0xa0] sm:$0xff]
    %v77 = vld [vmem:[%s2 + $0xa8] sm:$0xff]
    %v78 = vld [vmem:[%s2 + $0xb0] sm:$0xff]
    %v79 = vld [vmem:[%s2 + $0xb8] sm:$0xff]
    %v80 = vld [vmem:[%s2 + $0xc0] sm:$0xff]
    %v81 = vld [vmem:[%s2 + $0xc8] sm:$0xff]
    %v82 = vld [vmem:[%s2 + $0xd0] sm:$0xff]
    %v83 = vld [vmem:[%s2 + $0xd8] sm:$0xff]
    %v84 = vld [vmem:[%s2 + $0xe0] sm:$0xff]
    %v85 = vld [vmem:[%s2 + $0xe8] sm:$0xff]
    %v86 = vld [vmem:[%s2 + $0xf0] sm:$0xff]
    %v87 = vld [vmem:[%s2 + $0xf8] sm:$0xff]
    %v88 = vld [vmem:[%s2 + $0x100] sm:$0xff]
    %v89 = vld [vmem:[%s2 + $0x108] sm:$0xff]
    %v90 = vld [vmem:[%s2 + $0x110] sm:$0xff]
    %v91 = vld [vmem:[%s2 + $0x118] sm:$0xff]
    %v92 = vld [vmem:[%s2 + $0x120] sm:$0xff]
    %v93 = vld [vmem:[%s2 + $0x128] sm:$0xff]
    %v94 = vld [vmem:[%s2 + $0x130] sm:$0xff]
    %v95 = vld [vmem:[%s2 + $0x138] sm:$0xff]
    %v96 = vld [vmem:[%s2 + $0x140] sm:$0xff]
    %v97 = vld [vmem:[%s2 + $0x148] sm:$0xff]
    %v98 = vld [vmem:[%s2 + $0x150] sm:$0xff]
    %v99 = vld [vmem:[%s2 + $0x158] sm:$0xff]
    %v100 = vld [vmem:[%s2 + $0x160] sm:$0xff]
    %v101 = vld [vmem:[%s2 + $0x168] sm:$0xff]
    %v102 = vld [vmem:[%s2 + $0x170] sm:$0xff]
    %v103 = vld [vmem:[%s2 + $0x178] sm:$0xff]
    %v104 = vld [vmem:[%s2 + $0x180] sm:$0xff]
    %v105 = vld [vmem:[%s2 + $0x188] sm:$0xff]
    %v106 = vld [vmem:[%s2 + $0x190] sm:$0xff]
    %v107 = vld [vmem:[%s2 + $0x198] sm:$0xff]
    %v108 = vld [vmem:[%s2 + $0x1a0] sm:$0xff]
    %v109 = vld [vmem:[%s2 + $0x1a8] sm:$0xff]
    %v110 = vld [vmem:[%s2 + $0x1b0] sm:$0xff]
    %v111 = vld [vmem:[%s2 + $0x1b8] sm:$0xff]
    %v112 = vld [vmem:[%s2 + $0x1c0] sm:$0xff]
    %v113 = vld [vmem:[%s2 + $0x1c8] sm:$0xff]
    %v114 = vld [vmem:[%s2 + $0x1d0] sm:$0xff]
    %v115 = vld [vmem:[%s2 + $0x1d8] sm:$0xff]
    %v116 = vld [vmem:[%s2 + $0x1e0] sm:$0xff]
    %v117 = vld [vmem:[%s2 + $0x1e8] sm:$0xff]
    %v118 = vld [vmem:[%s2 + $0x1f0] sm:$0xff]
    %v119 = vld [vmem:[%s2 + $0x1f8] sm:$0xff]
    %v120 = vld [vmem:[#allocation2] sm:$0xff]
    %v121 = vld [vmem:[#allocation2 + $0x8] sm:$0xff]
    %v122 = vld [vmem:[#allocation2 + $0x10] sm:$0xff]
    %v123 = vld [vmem:[#allocation2 + $0x18] sm:$0xff]
    %v124 = vld [vmem:[#allocation2 + $0x20] sm:$0xff]
    %v125 = vld [vmem:[#allocation2 + $0x28] sm:$0xff]
    %v126 = vld [vmem:[#allocation2 + $0x30] sm:$0xff]
    %v127 = vld [vmem:[#allocation2 + $0x38] sm:$0xff]
    %v128 = vld [vmem:[#allocation2 + $0x40] sm:$0xff]
    %v129 = vld [vmem:[#allocation2 + $0x48] sm:$0xff]
    %v130 = vld [vmem:[#allocation2 + $0x50] sm:$0xff]
    %v131 = vld [vmem:[#allocation2 + $0x58] sm:$0xff]
    %v132 = vld [vmem:[#allocation2 + $0x60] sm:$0xff]
    %v133 = vld [vmem:[#allocation2 + $0x68] sm:$0xff]
    %v134 = vld [vmem:[#allocation2 + $0x70] sm:$0xff]
    %v135 = vld [vmem:[#allocation2 + $0x78] sm:$0xff]
    %v136 = vld [vmem:[#allocation2 + $0x80] sm:$0xff]
    %v137 = vld [vmem:[#allocation2 + $0x88] sm:$0xff]
    %v138 = vld [vmem:[#allocation2 + $0x90] sm:$0xff]
    %v139 = vld [vmem:[#allocation2 + $0x98] sm:$0xff]
    %v140 = vld [vmem:[#allocation2 + $0xa0] sm:$0xff]
    %v141 = vld [vmem:[#allocation2 + $0xa8] sm:$0xff]
    %v142 = vld [vmem:[#allocation2 + $0xb0] sm:$0xff]
    %v143 = vld [vmem:[#allocation2 + $0xb8] sm:$0xff]
    %v144 = vld [vmem:[#allocation2 + $0xc0] sm:$0xff]
    %v145 = vld [vmem:[#allocation2 + $0xc8] sm:$0xff]
    %v146 = vld [vmem:[#allocation2 + $0xd0] sm:$0xff]
    %v147 = vld [vmem:[#allocation2 + $0xd8] sm:$0xff]
    %v148 = vld [vmem:[#allocation2 + $0xe0] sm:$0xff]
    %v149 = vld [vmem:[#allocation2 + $0xe8] sm:$0xff]
    %v150 = vld [vmem:[#allocation2 + $0xf0] sm:$0xff]
    %v151 = vld [vmem:[#allocation2 + $0xf8] sm:$0xff]
    %v152 = vld [vmem:[#allocation2 + $0x100] sm:$0xff]
    %v153 = vld [vmem:[#allocation2 + $0x108] sm:$0xff]
    %v154 = vld [vmem:[#allocation2 + $0x110] sm:$0xff]
    %v155 = vld [vmem:[#allocation2 + $0x118] sm:$0xff]
    %v156 = vld [vmem:[#allocation2 + $0x120] sm:$0xff]
    %v157 = vld [vmem:[#allocation2 + $0x128] sm:$0xff]
    %v158 = vld [vmem:[#allocation2 + $0x130] sm:$0xff]
    %v159 = vld [vmem:[#allocation2 + $0x138] sm:$0xff]
    %v160 = vld [vmem:[#allocation2 + $0x140] sm:$0xff]
    %v161 = vld [vmem:[#allocation2 + $0x148] sm:$0xff]
    %v162 = vld [vmem:[#allocation2 + $0x150] sm:$0xff]
    %v163 = vld [vmem:[#allocation2 + $0x158] sm:$0xff]
    %v164 = vld [vmem:[#allocation2 + $0x160] sm:$0xff]
    %v165 = vld [vmem:[#allocation2 + $0x168] sm:$0xff]
    %v166 = vld [vmem:[#allocation2 + $0x170] sm:$0xff]
    %v167 = vld [vmem:[#allocation2 + $0x178] sm:$0xff]
    %v168 = vld [vmem:[#allocation2 + $0x180] sm:$0xff]
    %v169 = vld [vmem:[#allocation2 + $0x188] sm:$0xff]
    %v170 = vld [vmem:[#allocation2 + $0x190] sm:$0xff]
    %v171 = vld [vmem:[#allocation2 + $0x198] sm:$0xff]
    %v172 = vld [vmem:[#allocation2 + $0x1a0] sm:$0xff]
    %v173 = vld [vmem:[#allocation2 + $0x1a8] sm:$0xff]
    %v174 = vld [vmem:[#allocation2 + $0x1b0] sm:$0xff]
    %v175 = vld [vmem:[#allocation2 + $0x1b8] sm:$0xff]
    %v176 = vld [vmem:[#allocation2 + $0x1c0] sm:$0xff]
    %v177 = vld [vmem:[#allocation2 + $0x1c8] sm:$0xff]
    %v178 = vld [vmem:[#allocation2 + $0x1d0] sm:$0xff]
    %v179 = vld [vmem:[#allocation2 + $0x1d8] sm:$0xff]
    %v180 = vld [vmem:[#allocation2 + $0x1e0] sm:$0xff]
    %v181 = vld [vmem:[#allocation2 + $0x1e8] sm:$0xff]
    %v182 = vld [vmem:[#allocation2 + $0x1f0] sm:$0xff]
    %v183 = vld [vmem:[#allocation2 + $0x1f8] sm:$0xff]
    %v184 = vld [vmem:[%s4] sm:$0x3]
    %185 = vmatprep.subr.mxu0 %v87
    %186 = vmatpush1.msra.mxu0 %v86
    %187 = vmatprep.subr.mxu0 %v85
    %188 = vmatpush1.msra.mxu0 %v84
    %189 = vmatprep.subr.mxu0 %v83
    %190 = vmatpush1.msra.mxu0 %v82
    %191 = vmatprep.subr.mxu0 %v81
    %192 = vmatpush1.msra.mxu0 %v80
    %193 = vmatprep.subr.mxu0 %v79
    %194 = vmatpush1.msra.mxu0 %v78
    %195 = vmatprep.subr.mxu0 %v77
    %196 = vmatpush1.msra.mxu0 %v76
    %197 = vmatprep.subr.mxu0 %v75
    %198 = vmatpush1.msra.mxu0 %v74
    %199 = vmatprep.subr.mxu0 %v73
    %200 = vmatpush1.msra.mxu0 %v72
    %201 = vmatprep.subr.mxu0 %v71
    %202 = vmatpush1.msra.mxu0 %v70
    %203 = vmatprep.subr.mxu0 %v69
    %204 = vmatpush1.msra.mxu0 %v68
    %205 = vmatprep.subr.mxu0 %v67
    %206 = vmatpush1.msra.mxu0 %v66
    %207 = vmatprep.subr.mxu0 %v65
    %208 = vmatpush1.msra.mxu0 %v64
    %209 = vmatprep.subr.mxu0 %v63
    %210 = vmatpush1.msra.mxu0 %v62
    %211 = vmatprep.subr.mxu0 %v61
    %212 = vmatpush1.msra.mxu0 %v60
    %213 = vmatprep.subr.mxu0 %v59
    %214 = vmatpush1.msra.mxu0 %v58
    %215 = vmatprep.subr.mxu0 %v57
    %216 = vmatpush1.msra.mxu0 %v56
    %217 = vmatprep.subr.mxu0 %v119
    %218 = vmatpush2.msra.mxu0 %v118
    %219 = vmatprep.subr.mxu0 %v117
    %220 = vmatpush2.msra.mxu0 %v116
    %221 = vmatprep.subr.mxu0 %v115
    %222 = vmatpush2.msra.mxu0 %v114
    %223 = vmatprep.subr.mxu0 %v113
    %224 = vmatpush2.msra.mxu0 %v112
    %225 = vmatprep.subr.mxu0 %v111
    %226 = vmatpush2.msra.mxu0 %v110
    %227 = vmatprep.subr.mxu0 %v109
    %228 = vmatpush2.msra.mxu0 %v108
    %229 = vmatprep.subr.mxu0 %v107
    %230 = vmatpush2.msra.mxu0 %v106
    %231 = vmatprep.subr.mxu0 %v105
    %232 = vmatpush2.msra.mxu0 %v104
    %233 = vmatprep.subr.mxu0 %v103
    %234 = vmatpush2.msra.mxu0 %v102
    %235 = vmatprep.subr.mxu0 %v101
    %236 = vmatpush2.msra.mxu0 %v100
    %237 = vmatprep.subr.mxu0 %v99
    %238 = vmatpush2.msra.mxu0 %v98
    %239 = vmatprep.subr.mxu0 %v97
    %240 = vmatpush2.msra.mxu0 %v96
    %241 = vmatprep.subr.mxu0 %v95
    %242 = vmatpush2.msra.mxu0 %v94
    %243 = vmatprep.subr.mxu0 %v93
    %244 = vmatpush2.msra.mxu0 %v92
    %245 = vmatprep.subr.mxu0 %v91
    %246 = vmatpush2.msra.mxu0 %v90
    %247 = vmatprep.subr.mxu0 %v89
    %248 = vmatpush2.msra.mxu0 %v88
    %249 = vmatprep.mubr.f32.mxu0 %v49
    %250 = vmatmul.mubr.f32.gmra.mxu0 %v48
    %v251 = vpop.f32.mrf.mxu0
    %v252 = vadd.f32 0.0, %v251
    %v253 = vpop.f32.mrf.mxu0
    %v254 = vadd.f32 0.0, %v253
    %255 = vmatprep.mubr.f32.mxu0 %v51
    %256 = vmatmul.mubr.f32.gmra.mxu0 %v50
    %v257 = vpop.f32.mrf.mxu0
    %v258 = vadd.f32 0.0, %v257
    %v259 = vpop.f32.mrf.mxu0
    %v260 = vadd.f32 0.0, %v259
    %261 = vdwg.mxu0
    %262 = vmatprep.subr.mxu0 %v151
    %263 = vmatpush1.msra.mxu0 %v150
    %264 = vmatprep.subr.mxu0 %v149
    %265 = vmatpush1.msra.mxu0 %v148
    %266 = vmatprep.subr.mxu0 %v147
    %267 = vmatpush1.msra.mxu0 %v146
    %268 = vmatprep.subr.mxu0 %v145
    %269 = vmatpush1.msra.mxu0 %v144
    %270 = vmatprep.subr.mxu0 %v143
    %271 = vmatpush1.msra.mxu0 %v142
    %272 = vmatprep.subr.mxu0 %v141
    %273 = vmatpush1.msra.mxu0 %v140
    %274 = vmatprep.subr.mxu0 %v139
    %275 = vmatpush1.msra.mxu0 %v138
    %276 = vmatprep.subr.mxu0 %v137
    %277 = vmatpush1.msra.mxu0 %v136
    %278 = vmatprep.subr.mxu0 %v135
    %279 = vmatpush1.msra.mxu0 %v134
    %280 = vmatprep.subr.mxu0 %v133
    %281 = vmatpush1.msra.mxu0 %v132
    %282 = vmatprep.subr.mxu0 %v131
    %283 = vmatpush1.msra.mxu0 %v130
    %284 = vmatprep.subr.mxu0 %v129
    %285 = vmatpush1.msra.mxu0 %v128
    %286 = vmatprep.subr.mxu0 %v127
    %287 = vmatpush1.msra.mxu0 %v126
    %288 = vmatprep.subr.mxu0 %v125
    %289 = vmatpush1.msra.mxu0 %v124
    %290 = vmatprep.subr.mxu0 %v123
    %291 = vmatpush1.msra.mxu0 %v122
    %292 = vmatprep.subr.mxu0 %v121
    %293 = vmatpush1.msra.mxu0 %v120
    %294 = vmatprep.subr.mxu0 %v183
    %295 = vmatpush2.msra.mxu0 %v182
    %296 = vmatprep.subr.mxu0 %v181
    %297 = vmatpush2.msra.mxu0 %v180
    %298 = vmatprep.subr.mxu0 %v179
    %299 = vmatpush2.msra.mxu0 %v178
    %300 = vmatprep.subr.mxu0 %v177
    %301 = vmatpush2.msra.mxu0 %v176
    %302 = vmatprep.subr.mxu0 %v175
    %303 = vmatpush2.msra.mxu0 %v174
    %304 = vmatprep.subr.mxu0 %v173
    %305 = vmatpush2.msra.mxu0 %v172
    %306 = vmatprep.subr.mxu0 %v171
    %307 = vmatpush2.msra.mxu0 %v170
    %308 = vmatprep.subr.mxu0 %v169
    %309 = vmatpush2.msra.mxu0 %v168
    %310 = vmatprep.subr.mxu0 %v167
    %311 = vmatpush2.msra.mxu0 %v166
    %312 = vmatprep.subr.mxu0 %v165
    %313 = vmatpush2.msra.mxu0 %v164
    %314 = vmatprep.subr.mxu0 %v163
    %315 = vmatpush2.msra.mxu0 %v162
    %316 = vmatprep.subr.mxu0 %v161
    %317 = vmatpush2.msra.mxu0 %v160
    %318 = vmatprep.subr.mxu0 %v159
    %319 = vmatpush2.msra.mxu0 %v158
    %320 = vmatprep.subr.mxu0 %v157
    %321 = vmatpush2.msra.mxu0 %v156
    %322 = vmatprep.subr.mxu0 %v155
    %323 = vmatpush2.msra.mxu0 %v154
    %324 = vmatprep.subr.mxu0 %v153
    %325 = vmatpush2.msra.mxu0 %v152
    %326 = vmatprep.mubr.f32.mxu0 %v49
    %327 = vmatmul.mubr.f32.gmra.mxu0 %v48
    %v328 = vpop.f32.mrf.mxu0
    %v329 = vadd.f32 0.0, %v328
    %v330 = vpop.f32.mrf.mxu0
    %v331 = vadd.f32 0.0, %v330
    %332 = vmatprep.mubr.f32.mxu0 %v51
    %333 = vmatmul.mubr.f32.gmra.mxu0 %v50
    %v334 = vpop.f32.mrf.mxu0
    %v335 = vadd.f32 0.0, %v334
    %v336 = vpop.f32.mrf.mxu0
    %v337 = vadd.f32 0.0, %v336
    %338 = vdwg.mxu0
    %339 = vmatprep.subr.mxu0 %v87
    %340 = vmatpush1.msra.mxu0 %v86
    %341 = vmatprep.subr.mxu0 %v85
    %342 = vmatpush1.msra.mxu0 %v84
    %343 = vmatprep.subr.mxu0 %v83
    %344 = vmatpush1.msra.mxu0 %v82
    %345 = vmatprep.subr.mxu0 %v81
    %346 = vmatpush1.msra.mxu0 %v80
    %347 = vmatprep.subr.mxu0 %v79
    %348 = vmatpush1.msra.mxu0 %v78
    %349 = vmatprep.subr.mxu0 %v77
    %350 = vmatpush1.msra.mxu0 %v76
    %351 = vmatprep.subr.mxu0 %v75
    %352 = vmatpush1.msra.mxu0 %v74
    %353 = vmatprep.subr.mxu0 %v73
    %354 = vmatpush1.msra.mxu0 %v72
    %355 = vmatprep.subr.mxu0 %v71
    %356 = vmatpush1.msra.mxu0 %v70
    %357 = vmatprep.subr.mxu0 %v69
    %358 = vmatpush1.msra.mxu0 %v68
    %359 = vmatprep.subr.mxu0 %v67
    %360 = vmatpush1.msra.mxu0 %v66
    %361 = vmatprep.subr.mxu0 %v65
    %362 = vmatpush1.msra.mxu0 %v64
    %363 = vmatprep.subr.mxu0 %v63
    %364 = vmatpush1.msra.mxu0 %v62
    %365 = vmatprep.subr.mxu0 %v61
    %366 = vmatpush1.msra.mxu0 %v60
    %367 = vmatprep.subr.mxu0 %v59
    %368 = vmatpush1.msra.mxu0 %v58
    %369 = vmatprep.subr.mxu0 %v57
    %370 = vmatpush1.msra.mxu0 %v56
    %371 = vmatprep.subr.mxu0 %v119
    %372 = vmatpush2.msra.mxu0 %v118
    %373 = vmatprep.subr.mxu0 %v117
    %374 = vmatpush2.msra.mxu0 %v116
    %375 = vmatprep.subr.mxu0 %v115
    %376 = vmatpush2.msra.mxu0 %v114
    %377 = vmatprep.subr.mxu0 %v113
    %378 = vmatpush2.msra.mxu0 %v112
    %379 = vmatprep.subr.mxu0 %v111
    %380 = vmatpush2.msra.mxu0 %v110
    %381 = vmatprep.subr.mxu0 %v109
    %382 = vmatpush2.msra.mxu0 %v108
    %383 = vmatprep.subr.mxu0 %v107
    %384 = vmatpush2.msra.mxu0 %v106
    %385 = vmatprep.subr.mxu0 %v105
    %386 = vmatpush2.msra.mxu0 %v104
    %387 = vmatprep.subr.mxu0 %v103
    %388 = vmatpush2.msra.mxu0 %v102
    %389 = vmatprep.subr.mxu0 %v101
    %390 = vmatpush2.msra.mxu0 %v100
    %391 = vmatprep.subr.mxu0 %v99
    %392 = vmatpush2.msra.mxu0 %v98
    %393 = vmatprep.subr.mxu0 %v97
    %394 = vmatpush2.msra.mxu0 %v96
    %395 = vmatprep.subr.mxu0 %v95
    %396 = vmatpush2.msra.mxu0 %v94
    %397 = vmatprep.subr.mxu0 %v93
    %398 = vmatpush2.msra.mxu0 %v92
    %399 = vmatprep.subr.mxu0 %v91
    %400 = vmatpush2.msra.mxu0 %v90
    %401 = vmatprep.subr.mxu0 %v89
    %402 = vmatpush2.msra.mxu0 %v88
    %403 = vmatprep.mubr.f32.mxu0 %v53
    %404 = vmatmul.mubr.f32.gmra.mxu0 %v52
    %v405 = vpop.f32.mrf.mxu0
    %v406 = vadd.f32 0.0, %v405
    %v407 = vpop.f32.mrf.mxu0
    %v408 = vadd.f32 0.0, %v407
    %409 = vmatprep.mubr.f32.mxu0 %v55
    %410 = vmatmul.mubr.f32.gmra.mxu0 %v54
    %v411 = vpop.f32.mrf.mxu0
    %v412 = vadd.f32 0.0, %v411
    %v413 = vpop.f32.mrf.mxu0
    %v414 = vadd.f32 0.0, %v413
    %415 = vdwg.mxu0
    %416 = vmatprep.subr.mxu0 %v151
    %417 = vmatpush1.msra.mxu0 %v150
    %418 = vmatprep.subr.mxu0 %v149
    %419 = vmatpush1.msra.mxu0 %v148
    %420 = vmatprep.subr.mxu0 %v147
    %421 = vmatpush1.msra.mxu0 %v146
    %422 = vmatprep.subr.mxu0 %v145
    %423 = vmatpush1.msra.mxu0 %v144
    %424 = vmatprep.subr.mxu0 %v143
    %425 = vmatpush1.msra.mxu0 %v142
    %426 = vmatprep.subr.mxu0 %v141
    %427 = vmatpush1.msra.mxu0 %v140
    %428 = vmatprep.subr.mxu0 %v139
    %429 = vmatpush1.msra.mxu0 %v138
    %430 = vmatprep.subr.mxu0 %v137
    %431 = vmatpush1.msra.mxu0 %v136
    %432 = vmatprep.subr.mxu0 %v135
    %433 = vmatpush1.msra.mxu0 %v134
    %434 = vmatprep.subr.mxu0 %v133
    %435 = vmatpush1.msra.mxu0 %v132
    %436 = vmatprep.subr.mxu0 %v131
    %437 = vmatpush1.msra.mxu0 %v130
    %438 = vmatprep.subr.mxu0 %v129
    %439 = vmatpush1.msra.mxu0 %v128
    %440 = vmatprep.subr.mxu0 %v127
    %441 = vmatpush1.msra.mxu0 %v126
    %442 = vmatprep.subr.mxu0 %v125
    %443 = vmatpush1.msra.mxu0 %v124
    %444 = vmatprep.subr.mxu0 %v123
    %445 = vmatpush1.msra.mxu0 %v122
    %446 = vmatprep.subr.mxu0 %v121
    %447 = vmatpush1.msra.mxu0 %v120
    %448 = vmatprep.subr.mxu0 %v183
    %449 = vmatpush2.msra.mxu0 %v182
    %450 = vmatprep.subr.mxu0 %v181
    %451 = vmatpush2.msra.mxu0 %v180
    %452 = vmatprep.subr.mxu0 %v179
    %453 = vmatpush2.msra.mxu0 %v178
    %454 = vmatprep.subr.mxu0 %v177
    %455 = vmatpush2.msra.mxu0 %v176
    %456 = vmatprep.subr.mxu0 %v175
    %457 = vmatpush2.msra.mxu0 %v174
    %458 = vmatprep.subr.mxu0 %v173
    %459 = vmatpush2.msra.mxu0 %v172
    %460 = vmatprep.subr.mxu0 %v171
    %461 = vmatpush2.msra.mxu0 %v170
    %462 = vmatprep.subr.mxu0 %v169
    %463 = vmatpush2.msra.mxu0 %v168
    %464 = vmatprep.subr.mxu0 %v167
    %465 = vmatpush2.msra.mxu0 %v166
    %466 = vmatprep.subr.mxu0 %v165
    %467 = vmatpush2.msra.mxu0 %v164
    %468 = vmatprep.subr.mxu0 %v163
    %469 = vmatpush2.msra.mxu0 %v162
    %470 = vmatprep.subr.mxu0 %v161
    %471 = vmatpush2.msra.mxu0 %v160
    %472 = vmatprep.subr.mxu0 %v159
    %473 = vmatpush2.msra.mxu0 %v158
    %474 = vmatprep.subr.mxu0 %v157
    %475 = vmatpush2.msra.mxu0 %v156
    %476 = vmatprep.subr.mxu0 %v155
    %477 = vmatpush2.msra.mxu0 %v154
    %478 = vmatprep.subr.mxu0 %v153
    %479 = vmatpush2.msra.mxu0 %v152
    %480 = vmatprep.mubr.f32.mxu0 %v53
    %481 = vmatmul.mubr.f32.gmra.mxu0 %v52
    %v482 = vpop.f32.mrf.mxu0
    %v483 = vadd.f32 0.0, %v482
    %v484 = vpop.f32.mrf.mxu0
    %v485 = vadd.f32 0.0, %v484
    %486 = vmatprep.mubr.f32.mxu0 %v55
    %487 = vmatmul.mubr.f32.gmra.mxu0 %v54
    %v488 = vpop.f32.mrf.mxu0
    %v489 = vadd.f32 0.0, %v488
    %v490 = vpop.f32.mrf.mxu0
    %v491 = vadd.f32 0.0, %v490
    %492 = vdwg.mxu0
    %v493 = vmul.f32 %v252, %v252
    %v494 = vmul.f32 %v254, %v254
    %v495 = vmul.f32 %v258, %v258
    %v496 = vmul.f32 %v260, %v260
    %v497 = vmul.f32 %v329, %v329
    %v498 = vmul.f32 %v331, %v331
    %v499 = vmul.f32 %v335, %v335
    %v500 = vmul.f32 %v337, %v337
    %v501 = vadd.f32 %v493, %v497
    %v502 = vadd.f32 %v494, %v498
    %v503 = vadd.f32 %v495, %v499
    %v504 = vadd.f32 %v496, %v500
    %v505 = vrsqrt.pop %v501
    %v506 = vmul.f32 %v501, %v505
    %vm507 = vcmp.eq.f32.partialorder %v501, inf
    %v508 = vsel %vm507, %v501, %v506
    %vm509 = vcmp.eq.f32.partialorder %v501, 0.0
    %v510 = vand.u32 %v501, 2147483648
    %v511 = vsel %vm509, %v510, %v508
    %v512 = vrsqrt.pop %v502
    %v513 = vmul.f32 %v502, %v512
    %vm514 = vcmp.eq.f32.partialorder %v502, inf
    %v515 = vsel %vm514, %v502, %v513
    %vm516 = vcmp.eq.f32.partialorder %v502, 0.0
    %v517 = vand.u32 %v502, 2147483648
    %v518 = vsel %vm516, %v517, %v515
    %v519 = vrsqrt.pop %v503
    %v520 = vmul.f32 %v503, %v519
    %vm521 = vcmp.eq.f32.partialorder %v503, inf
    %v522 = vsel %vm521, %v503, %v520
    %vm523 = vcmp.eq.f32.partialorder %v503, 0.0
    %v524 = vand.u32 %v503, 2147483648
    %v525 = vsel %vm523, %v524, %v522
    %v526 = vrsqrt.pop %v504
    %v527 = vmul.f32 %v504, %v526
    %vm528 = vcmp.eq.f32.partialorder %v504, inf
    %v529 = vsel %vm528, %v504, %v527
    %vm530 = vcmp.eq.f32.partialorder %v504, 0.0
    %v531 = vand.u32 %v504, 2147483648
    %v532 = vsel %vm530, %v531, %v529
    %v533 = vmul.f32 %v406, %v406
    %v534 = vmul.f32 %v408, %v408
    %v535 = vmul.f32 %v412, %v412
    %v536 = vmul.f32 %v414, %v414
    %v537 = vmul.f32 %v483, %v483
    %v538 = vmul.f32 %v485, %v485
    %v539 = vmul.f32 %v489, %v489
    %v540 = vmul.f32 %v491, %v491
    %v541 = vadd.f32 %v533, %v537
    %v542 = vadd.f32 %v534, %v538
    %v543 = vadd.f32 %v535, %v539
    %v544 = vadd.f32 %v536, %v540
    %v545 = vrsqrt.pop %v541
    %v546 = vmul.f32 %v541, %v545
    %vm547 = vcmp.eq.f32.partialorder %v541, inf
    %v548 = vsel %vm547, %v541, %v546
    %vm549 = vcmp.eq.f32.partialorder %v541, 0.0
    %v550 = vand.u32 %v541, 2147483648
    %v551 = vsel %vm549, %v550, %v548
    %v552 = vrsqrt.pop %v542
    %v553 = vmul.f32 %v542, %v552
    %vm554 = vcmp.eq.f32.partialorder %v542, inf
    %v555 = vsel %vm554, %v542, %v553
    %vm556 = vcmp.eq.f32.partialorder %v542, 0.0
    %v557 = vand.u32 %v542, 2147483648
    %v558 = vsel %vm556, %v557, %v555
    %v559 = vrsqrt.pop %v543
    %v560 = vmul.f32 %v543, %v559
    %vm561 = vcmp.eq.f32.partialorder %v543, inf
    %v562 = vsel %vm561, %v543, %v560
    %vm563 = vcmp.eq.f32.partialorder %v543, 0.0
    %v564 = vand.u32 %v543, 2147483648
    %v565 = vsel %vm563, %v564, %v562
    %v566 = vrsqrt.pop %v544
    %v567 = vmul.f32 %v544, %v566
    %vm568 = vcmp.eq.f32.partialorder %v544, inf
    %v569 = vsel %vm568, %v544, %v567
    %vm570 = vcmp.eq.f32.partialorder %v544, 0.0
    %v571 = vand.u32 %v544, 2147483648
    %v572 = vsel %vm570, %v571, %v569
    %v573 = vsub.f32 %v511, %v551
    %v574 = vsub.f32 %v518, %v558
    %v575 = vsub.f32 %v525, %v565
    %v576 = vsub.f32 %v532, %v572
    %v577 = vand.u32 2147483647, %v573
    %v578 = vand.u32 2147483647, %v574
    %v579 = vand.u32 2147483647, %v575
    %v580 = vand.u32 2147483647, %v576
    %v581 = vadd.f32 %v511, 1e-05
    %v582 = vadd.f32 %v518, 1e-05
    %v583 = vadd.f32 %v525, 1e-05
    %v584 = vadd.f32 %v532, 1e-05
    %v585 = vadd.f32 %v551, 1e-05
    %v586 = vadd.f32 %v558, 1e-05
    %v587 = vadd.f32 %v565, 1e-05
    %v588 = vadd.f32 %v572, 1e-05
    %v589 = vrcp.pop %v585
    %v590 = vmul.f32 %v581, %v589
    %v591 = vrcp.pop %v586
    %v592 = vmul.f32 %v582, %v591
    %v593 = vrcp.pop %v587
    %v594 = vmul.f32 %v583, %v593
    %v595 = vrcp.pop %v588
    %v596 = vmul.f32 %v584, %v595
    %v597 = vlog2.pop %v590
    %v598 = vmul.f32 %v597, 0.6931472
    %v599 = vlog2.pop %v592
    %v600 = vmul.f32 %v599, 0.6931472
    %v601 = vlog2.pop %v594
    %v602 = vmul.f32 %v601, 0.6931472
    %v603 = vlog2.pop %v596
    %v604 = vmul.f32 %v603, 0.6931472
    %v605 = vand.u32 2147483647, %v598
    %v606 = vand.u32 2147483647, %v600
    %v607 = vand.u32 2147483647, %v602
    %v608 = vand.u32 2147483647, %v604
    %v609 = vsub.f32 %v252, %v406
    %v610 = vsub.f32 %v254, %v408
    %v611 = vsub.f32 %v258, %v412
    %v612 = vsub.f32 %v260, %v414
    %v613 = vand.u32 2147483647, %v609
    %v614 = vand.u32 2147483647, %v610
    %v615 = vand.u32 2147483647, %v611
    %v616 = vand.u32 2147483647, %v612
    %v617 = vsub.f32 %v329, %v483
    %v618 = vsub.f32 %v331, %v485
    %v619 = vsub.f32 %v335, %v489
    %v620 = vsub.f32 %v337, %v491
    %v621 = vand.u32 2147483647, %v617
    %v622 = vand.u32 2147483647, %v618
    %v623 = vand.u32 2147483647, %v619
    %v624 = vand.u32 2147483647, %v620
    %v625 = vadd.f32 %v613, %v621
    %v626 = vadd.f32 %v614, %v622
    %v627 = vadd.f32 %v615, %v623
    %v628 = vadd.f32 %v616, %v624
    %v629 = vld [vmem:[%s5] sm:$0xff]
    %v630 = vadd.f32 %v605, %v606
    %v631 = vadd.f32 %v630, %v607
    %v632 = vadd.f32 %v631, %v608
    %633 = vadd.xlane.f32.xlu0 %v632
    %v634 = vpop.xlane.xlu0 %633
    %v635 = vrot.slane %v634, 4
    %v636 = vadd.f32 %v634, %v635
    %v637 = vrot.slane %v636, 2
    %v638 = vadd.f32 %v636, %v637
    %v639 = vrot.slane %v638, 1
    %v640 = vadd.f32 %v638, %v639
    %s641 = vtos %v640
    %v642 = vstv %s641
    %v643 = vadd.f32 %v629, %v642
    %644 = vst [vmem:[%s5] sm:$0xff] %v643
    %v645 = vld [vmem:[%s6] sm:$0xff]
    %v646 = vmul.f32 %v573, %v573
    %v647 = vmul.f32 %v574, %v574
    %v648 = vmul.f32 %v575, %v575
    %v649 = vmul.f32 %v576, %v576
    %v650 = vadd.f32 %v646, %v647
    %v651 = vadd.f32 %v650, %v648
    %v652 = vadd.f32 %v651, %v649
    %653 = vadd.xlane.f32.xlu0 %v652
    %v654 = vpop.xlane.xlu0 %653
    %v655 = vrot.slane %v654, 4
    %v656 = vadd.f32 %v654, %v655
    %v657 = vrot.slane %v656, 2
    %v658 = vadd.f32 %v656, %v657
    %v659 = vrot.slane %v658, 1
    %v660 = vadd.f32 %v658, %v659
    %s661 = vtos %v660
    %v662 = vstv %s661
    %v663 = vadd.f32 %v645, %v662
    %664 = vst [vmem:[%s6] sm:$0xff] %v663
    %v665 = vld [vmem:[%s7] sm:$0xff]
    %v666 = vadd.f32 %v625, %v626
    %v667 = vadd.f32 %v666, %v627
    %v668 = vadd.f32 %v667, %v628
    %669 = vadd.xlane.f32.xlu0 %v668
    %v670 = vpop.xlane.xlu0 %669
    %v671 = vrot.slane %v670, 4
    %v672 = vadd.f32 %v670, %v671
    %v673 = vrot.slane %v672, 2
    %v674 = vadd.f32 %v672, %v673
    %v675 = vrot.slane %v674, 1
    %v676 = vadd.f32 %v674, %v675
    %s677 = vtos %v676
    %v678 = vstv %s677
    %v679 = vadd.f32 %v665, %v678
    %680 = vst [vmem:[%s7] sm:$0xff] %v679
    %v681 = vld [vmem:[%s8] sm:$0xff]
    %v683 = vlaneseq
    %v684 = vshrl.u32 %v683, 7
    %v685 = vsub.s32 0, %v684
    %v686 = vrot.slane %v184, %v685
    %v687 = vlaneseq
    %v688 = vshrl.u32 %v687, 7
    %v689 = vsub.s32 1, %v688
    %v690 = vrot.slane %v184, %v689
    %v693 = vmul.f32 %v577, %v686
    %v694 = vmul.f32 %v578, %v690
    %v695 = vmul.f32 %v579, %v686
    %v696 = vmul.f32 %v580, %v690
    %v697 = vadd.f32 %v693, %v694
    %v698 = vadd.f32 %v697, %v695
    %v699 = vadd.f32 %v698, %v696
    %700 = vadd.xlane.f32.xlu0 %v699
    %v701 = vpop.xlane.xlu0 %700
    %v702 = vrot.slane %v701, 4
    %v703 = vadd.f32 %v701, %v702
    %v704 = vrot.slane %v703, 2
    %v705 = vadd.f32 %v703, %v704
    %v706 = vrot.slane %v705, 1
    %v707 = vadd.f32 %v705, %v706
    %s708 = vtos %v707
    %v709 = vstv %s708
    %v710 = vadd.f32 %v681, %v709
    %711 = vst [vmem:[%s8] sm:$0xff] %v710
    %v712 = vld [vmem:[%s9] sm:$0xff]
    %v713 = vmul.f32 %v551, %v551
    %v714 = vmul.f32 %v558, %v558
    %v715 = vmul.f32 %v565, %v565
    %v716 = vmul.f32 %v572, %v572
    %v717 = vadd.f32 %v713, %v714
    %v718 = vadd.f32 %v717, %v715
    %v719 = vadd.f32 %v718, %v716
    %720 = vadd.xlane.f32.xlu0 %v719
    %v721 = vpop.xlane.xlu0 %720
    %v722 = vrot.slane %v721, 4
    %v723 = vadd.f32 %v721, %v722
    %v724 = vrot.slane %v723, 2
    %v725 = vadd.f32 %v723, %v724
    %v726 = vrot.slane %v725, 1
    %v727 = vadd.f32 %v725, %v726
    %s728 = vtos %v727
    %v729 = vstv %s728
    %v730 = vadd.f32 %v712, %v729
    %731 = vst [vmem:[%s9] sm:$0xff] %v730
    // Predicated region
    $region30: #{enhanced_multi_scale_stft_loss.5} parent=1 // pred_check
      _
    $region31: #{enhanced_multi_scale_stft_loss.5} parent=1 // pred_check_branch
      %733 = sbr.rel (0) target = $region33
    $region32: #{enhanced_multi_scale_stft_loss.5} parent=1 // pred_region
      _
    $region33: #{enhanced_multi_scale_stft_loss.5} parent=1 // pred_fallthru
      _
    // Predicated region
    $region34: #{enhanced_multi_scale_stft_loss.5} parent=1 // pred_check
      _
    $region35: #{enhanced_multi_scale_stft_loss.5} parent=1 // pred_check_branch
      %735 = sbr.rel (0) target = $region37
    $region36: #{enhanced_multi_scale_stft_loss.5} parent=1 // pred_region
      _
    $region37: #{enhanced_multi_scale_stft_loss.5} parent=1 // pred_fallthru
      _
    // Predicated region
    $region38: #{enhanced_multi_scale_stft_loss.5} parent=1 // pred_check
      _
    $region39: #{enhanced_multi_scale_stft_loss.5} parent=1 // pred_check_branch
      %737 = sbr.rel (0) target = $region41
    $region40: #{enhanced_multi_scale_stft_loss.5} parent=1 // pred_region
      _
    $region41: #{enhanced_multi_scale_stft_loss.5} parent=1 // pred_fallthru
      _
    // Predicated region
    $region42: #{enhanced_multi_scale_stft_loss.5} parent=1 // pred_check
      _
    $region43: #{enhanced_multi_scale_stft_loss.5} parent=1 // pred_check_branch
      %739 = sbr.rel (0) target = $region45
    $region44: #{enhanced_multi_scale_stft_loss.5} parent=1 // pred_region
      _
    $region45: #{enhanced_multi_scale_stft_loss.5} parent=1 // pred_fallthru
      _
    // Predicated region
    $region46: #{enhanced_multi_scale_stft_loss.5} parent=1 // pred_check
      _
    $region47: #{enhanced_multi_scale_stft_loss.5} parent=1 // pred_check_branch
      %741 = sbr.rel (0) target = $region49
    $region48: #{enhanced_multi_scale_stft_loss.5} parent=1 // pred_region
      _
    $region49: #{enhanced_multi_scale_stft_loss.5} parent=1 // pred_fallthru
      _
    // Predicated region
    $region50: #{enhanced_multi_scale_stft_loss.5} parent=1 // pred_check
      _
    $region51: #{enhanced_multi_scale_stft_loss.5} parent=1 // pred_check_branch
      %743 = sbr.rel (0) target = $region53
    $region52: #{enhanced_multi_scale_stft_loss.5} parent=1 // pred_region
      _
    $region53: #{enhanced_multi_scale_stft_loss.5} parent=1 // pred_fallthru
      _
    // Predicated region
    $region54: #{enhanced_multi_scale_stft_loss.5} parent=1 // pred_check
      _
    $region55: #{enhanced_multi_scale_stft_loss.5} parent=1 // pred_check_branch
      %745 = sbr.rel (0) target = $region57
    $region56: #{enhanced_multi_scale_stft_loss.5} parent=1 // pred_region
      _
    $region57: #{enhanced_multi_scale_stft_loss.5} parent=1 // pred_fallthru
      _
    // Predicated region
    $region58: #{enhanced_multi_scale_stft_loss.5} parent=1 // pred_check
      _
    $region59: #{enhanced_multi_scale_stft_loss.5} parent=1 // pred_check_branch
      %747 = sbr.rel (0) target = $region61
    $region60: #{enhanced_multi_scale_stft_loss.5} parent=1 // pred_region
      _
    $region61: #{enhanced_multi_scale_stft_loss.5} parent=1 // pred_fallthru
      _
    // Predicated region
    $region62: #{enhanced_multi_scale_stft_loss.5} parent=1 // pred_check
      _
    $region63: #{enhanced_multi_scale_stft_loss.5} parent=1 // pred_check_branch
      %749 = sbr.rel (0) target = $region65
    $region64: #{enhanced_multi_scale_stft_loss.5} parent=1 // pred_region
      _
    $region65: #{enhanced_multi_scale_stft_loss.5} parent=1 // pred_fallthru
      _
    // Predicated region
    $region66: #{enhanced_multi_scale_stft_loss.5} parent=1 // pred_check
      _
    $region67: #{enhanced_multi_scale_stft_loss.5} parent=1 // pred_check_branch
      %751 = sbr.rel (0) target = $region69
    $region68: #{enhanced_multi_scale_stft_loss.5} parent=1 // pred_region
      _
    $region69: #{enhanced_multi_scale_stft_loss.5} parent=1 // pred_fallthru
      _
    %752 = vsyncpa [#allocation3], 1

// kernel: enhanced_multi_scale_stft_loss.3
$region0: #{enhanced_multi_scale_stft_loss.3}
  #allocation0 [shape = 'u32[]', space=smem, size = 0x4, offset = 0x4, fixed_abs, tag = 'smem constant byte address 0x4 - core index']
  #allocation1 [shape = 'u32[144,128]{1,0:T(1,128)}', space=vmem, size = 0x12000, scoped, tag = 'internal scratch']
  %s0 = inlined_call_operand.vmem [shape: f32[40,64], index: 0, kind: input, shape index: {}]
  %s1 = inlined_call_operand.vmem [shape: f32[40,64], index: 1, kind: input, shape index: {}]
  %s2 = inlined_call_operand.vmem [shape: f32[64,128], index: 2, kind: input, shape index: {}]
  %s3 = inlined_call_operand.vmem [shape: f32[64,128], index: 3, kind: input, shape index: {}]
  %s4 = inlined_call_operand.vmem [shape: f32[1,128], index: 4, kind: input, shape index: {}]
  %s5 = inlined_call_operand.vmem [shape: f32[1,8,128], index: 5, kind: output, shape index: {0}]
  %s6 = inlined_call_operand.vmem [shape: f32[1,8,128], index: 6, kind: output, shape index: {1}]
  %s7 = inlined_call_operand.vmem [shape: f32[1,8,128], index: 7, kind: output, shape index: {2}]
  %s8 = inlined_call_operand.vmem [shape: f32[1,8,128], index: 8, kind: output, shape index: {3}]
  %s9 = inlined_call_operand.vmem [shape: f32[1,8,128], index: 9, kind: output, shape index: {4}]
  %10 = xla_tuple %s5, %s6, %s7, %s8, %s9
  %s11 = sld [smem:[#allocation0]]
  $region66: #{enhanced_multi_scale_stft_loss.3} parent=0
    _
  %s13 = ssub.s32 1, %s11
  %s14 = scalar_select 0, %s13, %s11
  // Predicated region
  $region2: #{enhanced_multi_scale_stft_loss.3} parent=0 // pred_check
    _
  $region3: #{enhanced_multi_scale_stft_loss.3} parent=0 // pred_check_branch
    %16 = sbr.rel (0) target = $region5
  $region4: #{enhanced_multi_scale_stft_loss.3} parent=0 // pred_region
    _
  $region5: #{enhanced_multi_scale_stft_loss.3} parent=0 // pred_fallthru
    _
  // Predicated region
  $region6: #{enhanced_multi_scale_stft_loss.3} parent=0 // pred_check
    _
  $region7: #{enhanced_multi_scale_stft_loss.3} parent=0 // pred_check_branch
    %18 = sbr.rel (0) target = $region9
  $region8: #{enhanced_multi_scale_stft_loss.3} parent=0 // pred_region
    _
  $region9: #{enhanced_multi_scale_stft_loss.3} parent=0 // pred_fallthru
    _
  // Predicated region
  $region10: #{enhanced_multi_scale_stft_loss.3} parent=0 // pred_check
    _
  $region11: #{enhanced_multi_scale_stft_loss.3} parent=0 // pred_check_branch
    %20 = sbr.rel (0) target = $region13
  $region12: #{enhanced_multi_scale_stft_loss.3} parent=0 // pred_region
    _
  $region13: #{enhanced_multi_scale_stft_loss.3} parent=0 // pred_fallthru
    _
  // Predicated region
  $region14: #{enhanced_multi_scale_stft_loss.3} parent=0 // pred_check
    _
  $region15: #{enhanced_multi_scale_stft_loss.3} parent=0 // pred_check_branch
    %22 = sbr.rel (0) target = $region17
  $region16: #{enhanced_multi_scale_stft_loss.3} parent=0 // pred_region
    _
  $region17: #{enhanced_multi_scale_stft_loss.3} parent=0 // pred_fallthru
    _
  // Predicated region
  $region18: #{enhanced_multi_scale_stft_loss.3} parent=0 // pred_check
    _
  $region19: #{enhanced_multi_scale_stft_loss.3} parent=0 // pred_check_branch
    %24 = sbr.rel (0) target = $region21
  $region20: #{enhanced_multi_scale_stft_loss.3} parent=0 // pred_region
    _
  $region21: #{enhanced_multi_scale_stft_loss.3} parent=0 // pred_fallthru
    _
  %p25 = scmp.eq.s32.totalorder 0, 0
  // Predicated region
  $region22: #{enhanced_multi_scale_stft_loss.3} parent=0 // pred_check
    %p26 = pneg %p25
  $region23: #{enhanced_multi_scale_stft_loss.3} parent=0 // pred_check_branch
    %28 = sbr.rel (%p26) target = $region25
  $region24: #{enhanced_multi_scale_stft_loss.3} parent=0 // pred_region
    %29 = vst [vmem:[%s5] sm:$0xff] 0.0
    %30 = vst [vmem:[%s6] sm:$0xff] 0.0
    %31 = vst [vmem:[%s7] sm:$0xff] 0.0
    %32 = vst [vmem:[%s8] sm:$0xff] 0.0
    %33 = vst [vmem:[%s9] sm:$0xff] 0.0
  $region25: #{enhanced_multi_scale_stft_loss.3} parent=0 // pred_fallthru
    _
  %v34 = vld [vmem:[%s0] sm:$0xff]
  %v35 = vld [vmem:[%s0 + $0x8] sm:$0xff]
  %v36 = vld [vmem:[%s0 + $0x10] sm:$0xff]
  %v37 = vld [vmem:[%s0 + $0x18] sm:$0xff]
  %v38 = vld [vmem:[%s0 + $0x20] sm:$0xff]
  %v39 = vld [vmem:[%s1] sm:$0xff]
  %v40 = vld [vmem:[%s1 + $0x8] sm:$0xff]
  %v41 = vld [vmem:[%s1 + $0x10] sm:$0xff]
  %v42 = vld [vmem:[%s1 + $0x18] sm:$0xff]
  %v43 = vld [vmem:[%s1 + $0x20] sm:$0xff]
  %v44 = vld [vmem:[%s2] sm:$0xff]
  %v45 = vld [vmem:[%s2 + $0x8] sm:$0xff]
  %v46 = vld [vmem:[%s2 + $0x10] sm:$0xff]
  %v47 = vld [vmem:[%s2 + $0x18] sm:$0xff]
  %v48 = vld [vmem:[%s2 + $0x20] sm:$0xff]
  %v49 = vld [vmem:[%s2 + $0x28] sm:$0xff]
  %v50 = vld [vmem:[%s2 + $0x30] sm:$0xff]
  %v51 = vld [vmem:[%s2 + $0x38] sm:$0xff]
  %v52 = vld [vmem:[%s3] sm:$0xff]
  %v53 = vld [vmem:[%s3 + $0x8] sm:$0xff]
  %v54 = vld [vmem:[%s3 + $0x10] sm:$0xff]
  %v55 = vld [vmem:[%s3 + $0x18] sm:$0xff]
  %v56 = vld [vmem:[%s3 + $0x20] sm:$0xff]
  %v57 = vld [vmem:[%s3 + $0x28] sm:$0xff]
  %v58 = vld [vmem:[%s3 + $0x30] sm:$0xff]
  %v59 = vld [vmem:[%s3 + $0x38] sm:$0xff]
  %v60 = vld [vmem:[%s4] sm:$0x1]
  %vm61 = vcmask 523264
  %v63 = vsel %vm61, %v34, 0
  %v66 = vsel %vm61, %v35, 0
  %v69 = vsel %vm61, %v36, 0
  %v72 = vsel %vm61, %v37, 0
  %v75 = vsel %vm61, %v38, 0
  %77 = vmatprep.subr.mxu0 0.0
  %78 = vmatpush1.msra.mxu0 0.0
  %79 = vmatprep.subr.mxu0 0.0
  %80 = vmatpush1.msra.mxu0 0.0
  %81 = vmatprep.subr.mxu0 0.0
  %82 = vmatpush1.msra.mxu0 0.0
  %83 = vmatprep.subr.mxu0 0.0
  %84 = vmatpush1.msra.mxu0 0.0
  %85 = vmatprep.subr.mxu0 0.0
  %86 = vmatpush1.msra.mxu0 0.0
  %87 = vmatprep.subr.mxu0 0.0
  %88 = vmatpush1.msra.mxu0 0.0
  %89 = vmatprep.subr.mxu0 0.0
  %90 = vmatpush1.msra.mxu0 0.0
  %91 = vmatprep.subr.mxu0 0.0
  %92 = vmatpush1.msra.mxu0 0.0
  %93 = vmatprep.subr.mxu0 0.0
  %94 = vmatpush1.msra.mxu0 %v51
  %95 = vmatprep.subr.mxu0 0.0
  %96 = vmatpush1.msra.mxu0 %v50
  %97 = vmatprep.subr.mxu0 0.0
  %98 = vmatpush1.msra.mxu0 %v49
  %99 = vmatprep.subr.mxu0 0.0
  %100 = vmatpush1.msra.mxu0 %v48
  %101 = vmatprep.subr.mxu0 0.0
  %102 = vmatpush1.msra.mxu0 %v47
  %103 = vmatprep.subr.mxu0 0.0
  %104 = vmatpush1.msra.mxu0 %v46
  %105 = vmatprep.subr.mxu0 0.0
  %106 = vmatpush1.msra.mxu0 %v45
  %107 = vmatprep.subr.mxu0 0.0
  %108 = vmatpush1.msra.mxu0 %v44
  %109 = vmatprep.subr.mxu0 0.0
  %110 = vmatpush2.msra.mxu0 0.0
  %111 = vmatprep.subr.mxu0 0.0
  %112 = vmatpush2.msra.mxu0 0.0
  %113 = vmatprep.subr.mxu0 0.0
  %114 = vmatpush2.msra.mxu0 0.0
  %115 = vmatprep.subr.mxu0 0.0
  %116 = vmatpush2.msra.mxu0 0.0
  %117 = vmatprep.subr.mxu0 0.0
  %118 = vmatpush2.msra.mxu0 0.0
  %119 = vmatprep.subr.mxu0 0.0
  %120 = vmatpush2.msra.mxu0 0.0
  %121 = vmatprep.subr.mxu0 0.0
  %122 = vmatpush2.msra.mxu0 0.0
  %123 = vmatprep.subr.mxu0 0.0
  %124 = vmatpush2.msra.mxu0 0.0
  %125 = vmatprep.subr.mxu0 0.0
  %126 = vmatpush2.msra.mxu0 0.0
  %127 = vmatprep.subr.mxu0 0.0
  %128 = vmatpush2.msra.mxu0 0.0
  %129 = vmatprep.subr.mxu0 0.0
  %130 = vmatpush2.msra.mxu0 0.0
  %131 = vmatprep.subr.mxu0 0.0
  %132 = vmatpush2.msra.mxu0 0.0
  %133 = vmatprep.subr.mxu0 0.0
  %134 = vmatpush2.msra.mxu0 0.0
  %135 = vmatprep.subr.mxu0 0.0
  %136 = vmatpush2.msra.mxu0 0.0
  %137 = vmatprep.subr.mxu0 0.0
  %138 = vmatpush2.msra.mxu0 0.0
  %139 = vmatprep.subr.mxu0 0.0
  %140 = vmatpush2.msra.mxu0 0.0
  %141 = vmatprep.mubr.f32.mxu0 0.0
  %142 = vmatmul.mubr.f32.gmra.mxu0 %v63
  %v143 = vpop.f32.mrf.mxu0
  %v144 = vadd.f32 0.0, %v143
  %v145 = vpop.f32.mrf.mxu0
  %146 = vmatprep.mubr.f32.mxu0 0.0
  %147 = vmatmul.mubr.f32.gmra.mxu0 %v66
  %v148 = vpop.f32.mrf.mxu0
  %v149 = vadd.f32 0.0, %v148
  %v150 = vpop.f32.mrf.mxu0
  %151 = vmatprep.mubr.f32.mxu0 0.0
  %152 = vmatmul.mubr.f32.gmra.mxu0 %v69
  %v153 = vpop.f32.mrf.mxu0
  %v154 = vadd.f32 0.0, %v153
  %v155 = vpop.f32.mrf.mxu0
  %156 = vmatprep.mubr.f32.mxu0 0.0
  %157 = vmatmul.mubr.f32.gmra.mxu0 %v72
  %v158 = vpop.f32.mrf.mxu0
  %v159 = vadd.f32 0.0, %v158
  %v160 = vpop.f32.mrf.mxu0
  %161 = vmatprep.mubr.f32.mxu0 0.0
  %162 = vmatmul.mubr.f32.gmra.mxu0 %v75
  %v163 = vpop.f32.mrf.mxu0
  %v164 = vadd.f32 0.0, %v163
  %v165 = vpop.f32.mrf.mxu0
  %166 = vdwg.mxu0
  %167 = vmatprep.subr.mxu0 0.0
  %168 = vmatpush1.msra.mxu0 0.0
  %169 = vmatprep.subr.mxu0 0.0
  %170 = vmatpush1.msra.mxu0 0.0
  %171 = vmatprep.subr.mxu0 0.0
  %172 = vmatpush1.msra.mxu0 0.0
  %173 = vmatprep.subr.mxu0 0.0
  %174 = vmatpush1.msra.mxu0 0.0
  %175 = vmatprep.subr.mxu0 0.0
  %176 = vmatpush1.msra.mxu0 0.0
  %177 = vmatprep.subr.mxu0 0.0
  %178 = vmatpush1.msra.mxu0 0.0
  %179 = vmatprep.subr.mxu0 0.0
  %180 = vmatpush1.msra.mxu0 0.0
  %181 = vmatprep.subr.mxu0 0.0
  %182 = vmatpush1.msra.mxu0 0.0
  %183 = vmatprep.subr.mxu0 0.0
  %184 = vmatpush1.msra.mxu0 %v59
  %185 = vmatprep.subr.mxu0 0.0
  %186 = vmatpush1.msra.mxu0 %v58
  %187 = vmatprep.subr.mxu0 0.0
  %188 = vmatpush1.msra.mxu0 %v57
  %189 = vmatprep.subr.mxu0 0.0
  %190 = vmatpush1.msra.mxu0 %v56
  %191 = vmatprep.subr.mxu0 0.0
  %192 = vmatpush1.msra.mxu0 %v55
  %193 = vmatprep.subr.mxu0 0.0
  %194 = vmatpush1.msra.mxu0 %v54
  %195 = vmatprep.subr.mxu0 0.0
  %196 = vmatpush1.msra.mxu0 %v53
  %197 = vmatprep.subr.mxu0 0.0
  %198 = vmatpush1.msra.mxu0 %v52
  %199 = vmatprep.subr.mxu0 0.0
  %200 = vmatpush2.msra.mxu0 0.0
  %201 = vmatprep.subr.mxu0 0.0
  %202 = vmatpush2.msra.mxu0 0.0
  %203 = vmatprep.subr.mxu0 0.0
  %204 = vmatpush2.msra.mxu0 0.0
  %205 = vmatprep.subr.mxu0 0.0
  %206 = vmatpush2.msra.mxu0 0.0
  %207 = vmatprep.subr.mxu0 0.0
  %208 = vmatpush2.msra.mxu0 0.0
  %209 = vmatprep.subr.mxu0 0.0
  %210 = vmatpush2.msra.mxu0 0.0
  %211 = vmatprep.subr.mxu0 0.0
  %212 = vmatpush2.msra.mxu0 0.0
  %213 = vmatprep.subr.mxu0 0.0
  %214 = vmatpush2.msra.mxu0 0.0
  %215 = vmatprep.subr.mxu0 0.0
  %216 = vmatpush2.msra.mxu0 0.0
  %217 = vmatprep.subr.mxu0 0.0
  %218 = vmatpush2.msra.mxu0 0.0
  %219 = vmatprep.subr.mxu0 0.0
  %220 = vmatpush2.msra.mxu0 0.0
  %221 = vmatprep.subr.mxu0 0.0
  %222 = vmatpush2.msra.mxu0 0.0
  %223 = vmatprep.subr.mxu0 0.0
  %224 = vmatpush2.msra.mxu0 0.0
  %225 = vmatprep.subr.mxu0 0.0
  %226 = vmatpush2.msra.mxu0 0.0
  %227 = vmatprep.subr.mxu0 0.0
  %228 = vmatpush2.msra.mxu0 0.0
  %229 = vmatprep.subr.mxu0 0.0
  %230 = vmatpush2.msra.mxu0 0.0
  %231 = vmatprep.mubr.f32.mxu0 0.0
  %232 = vmatmul.mubr.f32.gmra.mxu0 %v63
  %v233 = vpop.f32.mrf.mxu0
  %v234 = vadd.f32 0.0, %v233
  %v235 = vpop.f32.mrf.mxu0
  %236 = vmatprep.mubr.f32.mxu0 0.0
  %237 = vmatmul.mubr.f32.gmra.mxu0 %v66
  %v238 = vpop.f32.mrf.mxu0
  %v239 = vadd.f32 0.0, %v238
  %v240 = vpop.f32.mrf.mxu0
  %241 = vmatprep.mubr.f32.mxu0 0.0
  %242 = vmatmul.mubr.f32.gmra.mxu0 %v69
  %v243 = vpop.f32.mrf.mxu0
  %v244 = vadd.f32 0.0, %v243
  %v245 = vpop.f32.mrf.mxu0
  %246 = vmatprep.mubr.f32.mxu0 0.0
  %247 = vmatmul.mubr.f32.gmra.mxu0 %v72
  %v248 = vpop.f32.mrf.mxu0
  %v249 = vadd.f32 0.0, %v248
  %v250 = vpop.f32.mrf.mxu0
  %251 = vmatprep.mubr.f32.mxu0 0.0
  %252 = vmatmul.mubr.f32.gmra.mxu0 %v75
  %v253 = vpop.f32.mrf.mxu0
  %v254 = vadd.f32 0.0, %v253
  %v255 = vpop.f32.mrf.mxu0
  %256 = vdwg.mxu0
  %v258 = vsel %vm61, %v39, 0
  %v261 = vsel %vm61, %v40, 0
  %v264 = vsel %vm61, %v41, 0
  %v267 = vsel %vm61, %v42, 0
  %v270 = vsel %vm61, %v43, 0
  %272 = vmatprep.subr.mxu0 0.0
  %273 = vmatpush1.msra.mxu0 0.0
  %274 = vmatprep.subr.mxu0 0.0
  %275 = vmatpush1.msra.mxu0 0.0
  %276 = vmatprep.subr.mxu0 0.0
  %277 = vmatpush1.msra.mxu0 0.0
  %278 = vmatprep.subr.mxu0 0.0
  %279 = vmatpush1.msra.mxu0 0.0
  %280 = vmatprep.subr.mxu0 0.0
  %281 = vmatpush1.msra.mxu0 0.0
  %282 = vmatprep.subr.mxu0 0.0
  %283 = vmatpush1.msra.mxu0 0.0
  %284 = vmatprep.subr.mxu0 0.0
  %285 = vmatpush1.msra.mxu0 0.0
  %286 = vmatprep.subr.mxu0 0.0
  %287 = vmatpush1.msra.mxu0 0.0
  %288 = vmatprep.subr.mxu0 0.0
  %289 = vmatpush1.msra.mxu0 %v51
  %290 = vmatprep.subr.mxu0 0.0
  %291 = vmatpush1.msra.mxu0 %v50
  %292 = vmatprep.subr.mxu0 0.0
  %293 = vmatpush1.msra.mxu0 %v49
  %294 = vmatprep.subr.mxu0 0.0
  %295 = vmatpush1.msra.mxu0 %v48
  %296 = vmatprep.subr.mxu0 0.0
  %297 = vmatpush1.msra.mxu0 %v47
  %298 = vmatprep.subr.mxu0 0.0
  %299 = vmatpush1.msra.mxu0 %v46
  %300 = vmatprep.subr.mxu0 0.0
  %301 = vmatpush1.msra.mxu0 %v45
  %302 = vmatprep.subr.mxu0 0.0
  %303 = vmatpush1.msra.mxu0 %v44
  %304 = vmatprep.subr.mxu0 0.0
  %305 = vmatpush2.msra.mxu0 0.0
  %306 = vmatprep.subr.mxu0 0.0
  %307 = vmatpush2.msra.mxu0 0.0
  %308 = vmatprep.subr.mxu0 0.0
  %309 = vmatpush2.msra.mxu0 0.0
  %310 = vmatprep.subr.mxu0 0.0
  %311 = vmatpush2.msra.mxu0 0.0
  %312 = vmatprep.subr.mxu0 0.0
  %313 = vmatpush2.msra.mxu0 0.0
  %314 = vmatprep.subr.mxu0 0.0
  %315 = vmatpush2.msra.mxu0 0.0
  %316 = vmatprep.subr.mxu0 0.0
  %317 = vmatpush2.msra.mxu0 0.0
  %318 = vmatprep.subr.mxu0 0.0
  %319 = vmatpush2.msra.mxu0 0.0
  %320 = vmatprep.subr.mxu0 0.0
  %321 = vmatpush2.msra.mxu0 0.0
  %322 = vmatprep.subr.mxu0 0.0
  %323 = vmatpush2.msra.mxu0 0.0
  %324 = vmatprep.subr.mxu0 0.0
  %325 = vmatpush2.msra.mxu0 0.0
  %326 = vmatprep.subr.mxu0 0.0
  %327 = vmatpush2.msra.mxu0 0.0
  %328 = vmatprep.subr.mxu0 0.0
  %329 = vmatpush2.msra.mxu0 0.0
  %330 = vmatprep.subr.mxu0 0.0
  %331 = vmatpush2.msra.mxu0 0.0
  %332 = vmatprep.subr.mxu0 0.0
  %333 = vmatpush2.msra.mxu0 0.0
  %334 = vmatprep.subr.mxu0 0.0
  %335 = vmatpush2.msra.mxu0 0.0
  %336 = vmatprep.mubr.f32.mxu0 0.0
  %337 = vmatmul.mubr.f32.gmra.mxu0 %v258
  %v338 = vpop.f32.mrf.mxu0
  %v339 = vadd.f32 0.0, %v338
  %v340 = vpop.f32.mrf.mxu0
  %341 = vmatprep.mubr.f32.mxu0 0.0
  %342 = vmatmul.mubr.f32.gmra.mxu0 %v261
  %v343 = vpop.f32.mrf.mxu0
  %v344 = vadd.f32 0.0, %v343
  %v345 = vpop.f32.mrf.mxu0
  %346 = vmatprep.mubr.f32.mxu0 0.0
  %347 = vmatmul.mubr.f32.gmra.mxu0 %v264
  %v348 = vpop.f32.mrf.mxu0
  %v349 = vadd.f32 0.0, %v348
  %v350 = vpop.f32.mrf.mxu0
  %351 = vmatprep.mubr.f32.mxu0 0.0
  %352 = vmatmul.mubr.f32.gmra.mxu0 %v267
  %v353 = vpop.f32.mrf.mxu0
  %v354 = vadd.f32 0.0, %v353
  %v355 = vpop.f32.mrf.mxu0
  %356 = vmatprep.mubr.f32.mxu0 0.0
  %357 = vmatmul.mubr.f32.gmra.mxu0 %v270
  %v358 = vpop.f32.mrf.mxu0
  %v359 = vadd.f32 0.0, %v358
  %v360 = vpop.f32.mrf.mxu0
  %361 = vdwg.mxu0
  %362 = vmatprep.subr.mxu0 0.0
  %363 = vmatpush1.msra.mxu0 0.0
  %364 = vmatprep.subr.mxu0 0.0
  %365 = vmatpush1.msra.mxu0 0.0
  %366 = vmatprep.subr.mxu0 0.0
  %367 = vmatpush1.msra.mxu0 0.0
  %368 = vmatprep.subr.mxu0 0.0
  %369 = vmatpush1.msra.mxu0 0.0
  %370 = vmatprep.subr.mxu0 0.0
  %371 = vmatpush1.msra.mxu0 0.0
  %372 = vmatprep.subr.mxu0 0.0
  %373 = vmatpush1.msra.mxu0 0.0
  %374 = vmatprep.subr.mxu0 0.0
  %375 = vmatpush1.msra.mxu0 0.0
  %376 = vmatprep.subr.mxu0 0.0
  %377 = vmatpush1.msra.mxu0 0.0
  %378 = vmatprep.subr.mxu0 0.0
  %379 = vmatpush1.msra.mxu0 %v59
  %380 = vmatprep.subr.mxu0 0.0
  %381 = vmatpush1.msra.mxu0 %v58
  %382 = vmatprep.subr.mxu0 0.0
  %383 = vmatpush1.msra.mxu0 %v57
  %384 = vmatprep.subr.mxu0 0.0
  %385 = vmatpush1.msra.mxu0 %v56
  %386 = vmatprep.subr.mxu0 0.0
  %387 = vmatpush1.msra.mxu0 %v55
  %388 = vmatprep.subr.mxu0 0.0
  %389 = vmatpush1.msra.mxu0 %v54
  %390 = vmatprep.subr.mxu0 0.0
  %391 = vmatpush1.msra.mxu0 %v53
  %392 = vmatprep.subr.mxu0 0.0
  %393 = vmatpush1.msra.mxu0 %v52
  %394 = vmatprep.subr.mxu0 0.0
  %395 = vmatpush2.msra.mxu0 0.0
  %396 = vmatprep.subr.mxu0 0.0
  %397 = vmatpush2.msra.mxu0 0.0
  %398 = vmatprep.subr.mxu0 0.0
  %399 = vmatpush2.msra.mxu0 0.0
  %400 = vmatprep.subr.mxu0 0.0
  %401 = vmatpush2.msra.mxu0 0.0
  %402 = vmatprep.subr.mxu0 0.0
  %403 = vmatpush2.msra.mxu0 0.0
  %404 = vmatprep.subr.mxu0 0.0
  %405 = vmatpush2.msra.mxu0 0.0
  %406 = vmatprep.subr.mxu0 0.0
  %407 = vmatpush2.msra.mxu0 0.0
  %408 = vmatprep.subr.mxu0 0.0
  %409 = vmatpush2.msra.mxu0 0.0
  %410 = vmatprep.subr.mxu0 0.0
  %411 = vmatpush2.msra.mxu0 0.0
  %412 = vmatprep.subr.mxu0 0.0
  %413 = vmatpush2.msra.mxu0 0.0
  %414 = vmatprep.subr.mxu0 0.0
  %415 = vmatpush2.msra.mxu0 0.0
  %416 = vmatprep.subr.mxu0 0.0
  %417 = vmatpush2.msra.mxu0 0.0
  %418 = vmatprep.subr.mxu0 0.0
  %419 = vmatpush2.msra.mxu0 0.0
  %420 = vmatprep.subr.mxu0 0.0
  %421 = vmatpush2.msra.mxu0 0.0
  %422 = vmatprep.subr.mxu0 0.0
  %423 = vmatpush2.msra.mxu0 0.0
  %424 = vmatprep.subr.mxu0 0.0
  %425 = vmatpush2.msra.mxu0 0.0
  %426 = vmatprep.mubr.f32.mxu0 0.0
  %427 = vmatmul.mubr.f32.gmra.mxu0 %v258
  %v428 = vpop.f32.mrf.mxu0
  %v429 = vadd.f32 0.0, %v428
  %v430 = vpop.f32.mrf.mxu0
  %431 = vmatprep.mubr.f32.mxu0 0.0
  %432 = vmatmul.mubr.f32.gmra.mxu0 %v261
  %v433 = vpop.f32.mrf.mxu0
  %v434 = vadd.f32 0.0, %v433
  %v435 = vpop.f32.mrf.mxu0
  %436 = vmatprep.mubr.f32.mxu0 0.0
  %437 = vmatmul.mubr.f32.gmra.mxu0 %v264
  %v438 = vpop.f32.mrf.mxu0
  %v439 = vadd.f32 0.0, %v438
  %v440 = vpop.f32.mrf.mxu0
  %441 = vmatprep.mubr.f32.mxu0 0.0
  %442 = vmatmul.mubr.f32.gmra.mxu0 %v267
  %v443 = vpop.f32.mrf.mxu0
  %v444 = vadd.f32 0.0, %v443
  %v445 = vpop.f32.mrf.mxu0
  %446 = vmatprep.mubr.f32.mxu0 0.0
  %447 = vmatmul.mubr.f32.gmra.mxu0 %v270
  %v448 = vpop.f32.mrf.mxu0
  %v449 = vadd.f32 0.0, %v448
  %v450 = vpop.f32.mrf.mxu0
  %451 = vdwg.mxu0
  %v452 = vmul.f32 %v144, %v144
  %v453 = vmul.f32 %v149, %v149
  %v454 = vmul.f32 %v154, %v154
  %v455 = vmul.f32 %v159, %v159
  %v456 = vmul.f32 %v164, %v164
  %v457 = vmul.f32 %v234, %v234
  %v458 = vmul.f32 %v239, %v239
  %v459 = vmul.f32 %v244, %v244
  %v460 = vmul.f32 %v249, %v249
  %v461 = vmul.f32 %v254, %v254
  %v462 = vadd.f32 %v452, %v457
  %v463 = vadd.f32 %v453, %v458
  %v464 = vadd.f32 %v454, %v459
  %v465 = vadd.f32 %v455, %v460
  %v466 = vadd.f32 %v456, %v461
  %v467 = vrsqrt.pop %v462
  %v468 = vmul.f32 %v462, %v467
  %vm469 = vcmp.eq.f32.partialorder %v462, inf
  %v470 = vsel %vm469, %v462, %v468
  %vm471 = vcmp.eq.f32.partialorder %v462, 0.0
  %v472 = vand.u32 %v462, 2147483648
  %v473 = vsel %vm471, %v472, %v470
  %v474 = vrsqrt.pop %v463
  %v475 = vmul.f32 %v463, %v474
  %vm476 = vcmp.eq.f32.partialorder %v463, inf
  %v477 = vsel %vm476, %v463, %v475
  %vm478 = vcmp.eq.f32.partialorder %v463, 0.0
  %v479 = vand.u32 %v463, 2147483648
  %v480 = vsel %vm478, %v479, %v477
  %v481 = vrsqrt.pop %v464
  %v482 = vmul.f32 %v464, %v481
  %vm483 = vcmp.eq.f32.partialorder %v464, inf
  %v484 = vsel %vm483, %v464, %v482
  %vm485 = vcmp.eq.f32.partialorder %v464, 0.0
  %v486 = vand.u32 %v464, 2147483648
  %v487 = vsel %vm485, %v486, %v484
  %v488 = vrsqrt.pop %v465
  %v489 = vmul.f32 %v465, %v488
  %vm490 = vcmp.eq.f32.partialorder %v465, inf
  %v491 = vsel %vm490, %v465, %v489
  %vm492 = vcmp.eq.f32.partialorder %v465, 0.0
  %v493 = vand.u32 %v465, 2147483648
  %v494 = vsel %vm492, %v493, %v491
  %v495 = vrsqrt.pop %v466
  %v496 = vmul.f32 %v466, %v495
  %vm497 = vcmp.eq.f32.partialorder %v466, inf
  %v498 = vsel %vm497, %v466, %v496
  %vm499 = vcmp.eq.f32.partialorder %v466, 0.0
  %v500 = vand.u32 %v466, 2147483648
  %v501 = vsel %vm499, %v500, %v498
  %v502 = vmul.f32 %v339, %v339
  %v503 = vmul.f32 %v344, %v344
  %v504 = vmul.f32 %v349, %v349
  %v505 = vmul.f32 %v354, %v354
  %v506 = vmul.f32 %v359, %v359
  %v507 = vmul.f32 %v429, %v429
  %v508 = vmul.f32 %v434, %v434
  %v509 = vmul.f32 %v439, %v439
  %v510 = vmul.f32 %v444, %v444
  %v511 = vmul.f32 %v449, %v449
  %v512 = vadd.f32 %v502, %v507
  %v513 = vadd.f32 %v503, %v508
  %v514 = vadd.f32 %v504, %v509
  %v515 = vadd.f32 %v505, %v510
  %v516 = vadd.f32 %v506, %v511
  %v517 = vrsqrt.pop %v512
  %v518 = vmul.f32 %v512, %v517
  %vm519 = vcmp.eq.f32.partialorder %v512, inf
  %v520 = vsel %vm519, %v512, %v518
  %vm521 = vcmp.eq.f32.partialorder %v512, 0.0
  %v522 = vand.u32 %v512, 2147483648
  %v523 = vsel %vm521, %v522, %v520
  %v524 = vrsqrt.pop %v513
  %v525 = vmul.f32 %v513, %v524
  %vm526 = vcmp.eq.f32.partialorder %v513, inf
  %v527 = vsel %vm526, %v513, %v525
  %vm528 = vcmp.eq.f32.partialorder %v513, 0.0
  %v529 = vand.u32 %v513, 2147483648
  %v530 = vsel %vm528, %v529, %v527
  %v531 = vrsqrt.pop %v514
  %v532 = vmul.f32 %v514, %v531
  %vm533 = vcmp.eq.f32.partialorder %v514, inf
  %v534 = vsel %vm533, %v514, %v532
  %vm535 = vcmp.eq.f32.partialorder %v514, 0.0
  %v536 = vand.u32 %v514, 2147483648
  %v537 = vsel %vm535, %v536, %v534
  %v538 = vrsqrt.pop %v515
  %v539 = vmul.f32 %v515, %v538
  %vm540 = vcmp.eq.f32.partialorder %v515, inf
  %v541 = vsel %vm540, %v515, %v539
  %vm542 = vcmp.eq.f32.partialorder %v515, 0.0
  %v543 = vand.u32 %v515, 2147483648
  %v544 = vsel %vm542, %v543, %v541
  %v545 = vrsqrt.pop %v516
  %v546 = vmul.f32 %v516, %v545
  %vm547 = vcmp.eq.f32.partialorder %v516, inf
  %v548 = vsel %vm547, %v516, %v546
  %vm549 = vcmp.eq.f32.partialorder %v516, 0.0
  %v550 = vand.u32 %v516, 2147483648
  %v551 = vsel %vm549, %v550, %v548
  %v552 = vsub.f32 %v473, %v523
  %v553 = vsub.f32 %v480, %v530
  %v554 = vsub.f32 %v487, %v537
  %v555 = vsub.f32 %v494, %v544
  %v556 = vsub.f32 %v501, %v551
  %v557 = vand.u32 2147483647, %v552
  %v558 = vand.u32 2147483647, %v553
  %v559 = vand.u32 2147483647, %v554
  %v560 = vand.u32 2147483647, %v555
  %v561 = vand.u32 2147483647, %v556
  %v562 = vadd.f32 %v473, 1e-05
  %v563 = vadd.f32 %v480, 1e-05
  %v564 = vadd.f32 %v487, 1e-05
  %v565 = vadd.f32 %v494, 1e-05
  %v566 = vadd.f32 %v501, 1e-05
  %v567 = vadd.f32 %v523, 1e-05
  %v568 = vadd.f32 %v530, 1e-05
  %v569 = vadd.f32 %v537, 1e-05
  %v570 = vadd.f32 %v544, 1e-05
  %v571 = vadd.f32 %v551, 1e-05
  %v572 = vrcp.pop %v567
  %v573 = vmul.f32 %v562, %v572
  %v574 = vrcp.pop %v568
  %v575 = vmul.f32 %v563, %v574
  %v576 = vrcp.pop %v569
  %v577 = vmul.f32 %v564, %v576
  %v578 = vrcp.pop %v570
  %v579 = vmul.f32 %v565, %v578
  %v580 = vrcp.pop %v571
  %v581 = vmul.f32 %v566, %v580
  %v582 = vlog2.pop %v573
  %v583 = vmul.f32 %v582, 0.6931472
  %v584 = vlog2.pop %v575
  %v585 = vmul.f32 %v584, 0.6931472
  %v586 = vlog2.pop %v577
  %v587 = vmul.f32 %v586, 0.6931472
  %v588 = vlog2.pop %v579
  %v589 = vmul.f32 %v588, 0.6931472
  %v590 = vlog2.pop %v581
  %v591 = vmul.f32 %v590, 0.6931472
  %v592 = vand.u32 2147483647, %v583
  %v593 = vand.u32 2147483647, %v585
  %v594 = vand.u32 2147483647, %v587
  %v595 = vand.u32 2147483647, %v589
  %v596 = vand.u32 2147483647, %v591
  %v597 = vsub.f32 %v144, %v339
  %v598 = vsub.f32 %v149, %v344
  %v599 = vsub.f32 %v154, %v349
  %v600 = vsub.f32 %v159, %v354
  %v601 = vsub.f32 %v164, %v359
  %v602 = vand.u32 2147483647, %v597
  %v603 = vand.u32 2147483647, %v598
  %v604 = vand.u32 2147483647, %v599
  %v605 = vand.u32 2147483647, %v600
  %v606 = vand.u32 2147483647, %v601
  %v607 = vsub.f32 %v234, %v429
  %v608 = vsub.f32 %v239, %v434
  %v609 = vsub.f32 %v244, %v439
  %v610 = vsub.f32 %v249, %v444
  %v611 = vsub.f32 %v254, %v449
  %v612 = vand.u32 2147483647, %v607
  %v613 = vand.u32 2147483647, %v608
  %v614 = vand.u32 2147483647, %v609
  %v615 = vand.u32 2147483647, %v610
  %v616 = vand.u32 2147483647, %v611
  %v617 = vadd.f32 %v602, %v612
  %v618 = vadd.f32 %v603, %v613
  %v619 = vadd.f32 %v604, %v614
  %v620 = vadd.f32 %v605, %v615
  %v621 = vadd.f32 %v606, %v616
  %v622 = vld [vmem:[%s5] sm:$0xff]
  %v623 = vadd.f32 %v592, %v593
  %v624 = vadd.f32 %v623, %v594
  %v625 = vadd.f32 %v624, %v595
  %v626 = vadd.f32 %v625, %v596
  %627 = vadd.xlane.f32.xlu0 %v626
  %v628 = vpop.xlane.xlu0 %627
  %v629 = vrot.slane %v628, 4
  %v630 = vadd.f32 %v628, %v629
  %v631 = vrot.slane %v630, 2
  %v632 = vadd.f32 %v630, %v631
  %v633 = vrot.slane %v632, 1
  %v634 = vadd.f32 %v632, %v633
  %s635 = vtos %v634
  %v636 = vstv %s635
  %v637 = vadd.f32 %v622, %v636
  %638 = vst [vmem:[%s5] sm:$0xff] %v637
  %v639 = vld [vmem:[%s6] sm:$0xff]
  %v640 = vmul.f32 %v552, %v552
  %v641 = vmul.f32 %v553, %v553
  %v642 = vmul.f32 %v554, %v554
  %v643 = vmul.f32 %v555, %v555
  %v644 = vmul.f32 %v556, %v556
  %v645 = vadd.f32 %v640, %v641
  %v646 = vadd.f32 %v645, %v642
  %v647 = vadd.f32 %v646, %v643
  %v648 = vadd.f32 %v647, %v644
  %649 = vadd.xlane.f32.xlu0 %v648
  %v650 = vpop.xlane.xlu0 %649
  %v651 = vrot.slane %v650, 4
  %v652 = vadd.f32 %v650, %v651
  %v653 = vrot.slane %v652, 2
  %v654 = vadd.f32 %v652, %v653
  %v655 = vrot.slane %v654, 1
  %v656 = vadd.f32 %v654, %v655
  %s657 = vtos %v656
  %v658 = vstv %s657
  %v659 = vadd.f32 %v639, %v658
  %660 = vst [vmem:[%s6] sm:$0xff] %v659
  %v661 = vld [vmem:[%s7] sm:$0xff]
  %v662 = vadd.f32 %v617, %v618
  %v663 = vadd.f32 %v662, %v619
  %v664 = vadd.f32 %v663, %v620
  %v665 = vadd.f32 %v664, %v621
  %666 = vadd.xlane.f32.xlu0 %v665
  %v667 = vpop.xlane.xlu0 %666
  %v668 = vrot.slane %v667, 4
  %v669 = vadd.f32 %v667, %v668
  %v670 = vrot.slane %v669, 2
  %v671 = vadd.f32 %v669, %v670
  %v672 = vrot.slane %v671, 1
  %v673 = vadd.f32 %v671, %v672
  %s674 = vtos %v673
  %v675 = vstv %s674
  %v676 = vadd.f32 %v661, %v675
  %677 = vst [vmem:[%s7] sm:$0xff] %v676
  %v678 = vld [vmem:[%s8] sm:$0xff]
  %v680 = vlaneseq
  %v681 = vshrl.u32 %v680, 7
  %v682 = vsub.s32 0, %v681
  %v683 = vrot.slane %v60, %v682
  %v685 = vmul.f32 %v557, %v683
  %v686 = vmul.f32 %v558, %v683
  %v687 = vmul.f32 %v559, %v683
  %v688 = vmul.f32 %v560, %v683
  %v689 = vmul.f32 %v561, %v683
  %v690 = vadd.f32 %v685, %v686
  %v691 = vadd.f32 %v690, %v687
  %v692 = vadd.f32 %v691, %v688
  %v693 = vadd.f32 %v692, %v689
  %694 = vadd.xlane.f32.xlu0 %v693
  %v695 = vpop.xlane.xlu0 %694
  %v696 = vrot.slane %v695, 4
  %v697 = vadd.f32 %v695, %v696
  %v698 = vrot.slane %v697, 2
  %v699 = vadd.f32 %v697, %v698
  %v700 = vrot.slane %v699, 1
  %v701 = vadd.f32 %v699, %v700
  %s702 = vtos %v701
  %v703 = vstv %s702
  %v704 = vadd.f32 %v678, %v703
  %705 = vst [vmem:[%s8] sm:$0xff] %v704
  %v706 = vld [vmem:[%s9] sm:$0xff]
  %v707 = vmul.f32 %v523, %v523
  %v708 = vmul.f32 %v530, %v530
  %v709 = vmul.f32 %v537, %v537
  %v710 = vmul.f32 %v544, %v544
  %v711 = vmul.f32 %v551, %v551
  %v712 = vadd.f32 %v707, %v708
  %v713 = vadd.f32 %v712, %v709
  %v714 = vadd.f32 %v713, %v710
  %v715 = vadd.f32 %v714, %v711
  %716 = vadd.xlane.f32.xlu0 %v715
  %v717 = vpop.xlane.xlu0 %716
  %v718 = vrot.slane %v717, 4
  %v719 = vadd.f32 %v717, %v718
  %v720 = vrot.slane %v719, 2
  %v721 = vadd.f32 %v719, %v720
  %v722 = vrot.slane %v721, 1
  %v723 = vadd.f32 %v721, %v722
  %s724 = vtos %v723
  %v725 = vstv %s724
  %v726 = vadd.f32 %v706, %v725
  %727 = vst [vmem:[%s9] sm:$0xff] %v726
  // Predicated region
  $region26: #{enhanced_multi_scale_stft_loss.3} parent=0 // pred_check
    _
  $region27: #{enhanced_multi_scale_stft_loss.3} parent=0 // pred_check_branch
    %729 = sbr.rel (0) target = $region29
  $region28: #{enhanced_multi_scale_stft_loss.3} parent=0 // pred_region
    _
  $region29: #{enhanced_multi_scale_stft_loss.3} parent=0 // pred_fallthru
    _
  // Predicated region
  $region30: #{enhanced_multi_scale_stft_loss.3} parent=0 // pred_check
    _
  $region31: #{enhanced_multi_scale_stft_loss.3} parent=0 // pred_check_branch
    %731 = sbr.rel (0) target = $region33
  $region32: #{enhanced_multi_scale_stft_loss.3} parent=0 // pred_region
    _
  $region33: #{enhanced_multi_scale_stft_loss.3} parent=0 // pred_fallthru
    _
  // Predicated region
  $region34: #{enhanced_multi_scale_stft_loss.3} parent=0 // pred_check
    _
  $region35: #{enhanced_multi_scale_stft_loss.3} parent=0 // pred_check_branch
    %733 = sbr.rel (0) target = $region37
  $region36: #{enhanced_multi_scale_stft_loss.3} parent=0 // pred_region
    _
  $region37: #{enhanced_multi_scale_stft_loss.3} parent=0 // pred_fallthru
    _
  // Predicated region
  $region38: #{enhanced_multi_scale_stft_loss.3} parent=0 // pred_check
    _
  $region39: #{enhanced_multi_scale_stft_loss.3} parent=0 // pred_check_branch
    %735 = sbr.rel (0) target = $region41
  $region40: #{enhanced_multi_scale_stft_loss.3} parent=0 // pred_region
    _
  $region41: #{enhanced_multi_scale_stft_loss.3} parent=0 // pred_fallthru
    _
  // Predicated region
  $region42: #{enhanced_multi_scale_stft_loss.3} parent=0 // pred_check
    _
  $region43: #{enhanced_multi_scale_stft_loss.3} parent=0 // pred_check_branch
    %737 = sbr.rel (0) target = $region45
  $region44: #{enhanced_multi_scale_stft_loss.3} parent=0 // pred_region
    _
  $region45: #{enhanced_multi_scale_stft_loss.3} parent=0 // pred_fallthru
    _
  // Predicated region
  $region46: #{enhanced_multi_scale_stft_loss.3} parent=0 // pred_check
    _
  $region47: #{enhanced_multi_scale_stft_loss.3} parent=0 // pred_check_branch
    %739 = sbr.rel (0) target = $region49
  $region48: #{enhanced_multi_scale_stft_loss.3} parent=0 // pred_region
    _
  $region49: #{enhanced_multi_scale_stft_loss.3} parent=0 // pred_fallthru
    _
  // Predicated region
  $region50: #{enhanced_multi_scale_stft_loss.3} parent=0 // pred_check
    _
  $region51: #{enhanced_multi_scale_stft_loss.3} parent=0 // pred_check_branch
    %741 = sbr.rel (0) target = $region53
  $region52: #{enhanced_multi_scale_stft_loss.3} parent=0 // pred_region
    _
  $region53: #{enhanced_multi_scale_stft_loss.3} parent=0 // pred_fallthru
    _
  // Predicated region
  $region54: #{enhanced_multi_scale_stft_loss.3} parent=0 // pred_check
    _
  $region55: #{enhanced_multi_scale_stft_loss.3} parent=0 // pred_check_branch
    %743 = sbr.rel (0) target = $region57
  $region56: #{enhanced_multi_scale_stft_loss.3} parent=0 // pred_region
    _
  $region57: #{enhanced_multi_scale_stft_loss.3} parent=0 // pred_fallthru
    _
  // Predicated region
  $region58: #{enhanced_multi_scale_stft_loss.3} parent=0 // pred_check
    _
  $region59: #{enhanced_multi_scale_stft_loss.3} parent=0 // pred_check_branch
    %745 = sbr.rel (0) target = $region61
  $region60: #{enhanced_multi_scale_stft_loss.3} parent=0 // pred_region
    _
  $region61: #{enhanced_multi_scale_stft_loss.3} parent=0 // pred_fallthru
    _
  // Predicated region
  $region62: #{enhanced_multi_scale_stft_loss.3} parent=0 // pred_check
    _
  $region63: #{enhanced_multi_scale_stft_loss.3} parent=0 // pred_check_branch
    %747 = sbr.rel (0) target = $region65
  $region64: #{enhanced_multi_scale_stft_loss.3} parent=0 // pred_region
    _
  $region65: #{enhanced_multi_scale_stft_loss.3} parent=0 // pred_fallthru
    _

</llo_original>
